<compile_context>
chip_gen: v5e
topology: v5e:2x2
jax: 0.10.0
libtpu: 0.0.40
codegen_flags: <defaults>
</compile_context>

<pallas_src>
import functools
import math

import jax
import jax.numpy as jnp
from jax.experimental import pallas as pl
from jax.experimental.pallas import tpu as pltpu


def _layernorm(x, gamma, beta, eps=1e-5):
    # x: (S, D); gamma/beta: (1, D).  Keep all reduction math in f32.
    mean = jnp.mean(x, axis=-1, keepdims=True)
    var = jnp.mean((x - mean) ** 2, axis=-1, keepdims=True)
    return (x - mean) * jax.lax.rsqrt(var + eps) * gamma + beta


def _cross_attn_kernel(
    x1_ref, x2_ref,
    g1_ref, b1_ref, g2_ref, b2_ref,
    wq_ref, bq_ref, wk_ref, bk_ref, wv_ref, bv_ref,
    wo_ref, bo_ref,
    o_ref,
    q_s, m_s, l_s, acc_s,
    *, n_heads, d_head, approx_recip,
):
    tq = x1_ref.shape[0]          # query-tile rows (leading batch dim squeezed)
    tk = x2_ref.shape[0]          # key/value-tile rows
    kv = pl.program_id(2)

    @pl.when(kv == 0)
    def _init():
        # LayerNorm(x1) + Q projection once per (batch, q-tile); cached head-major.
        x1n = _layernorm(x1_ref[...].astype(jnp.float32), g1_ref[...], b1_ref[...])
        q = (jnp.dot(x1n.astype(jnp.bfloat16), wq_ref[...],
                     preferred_element_type=jnp.float32)
             + bq_ref[...]) * jnp.float32(1.0 / math.sqrt(d_head))
        q_s[...] = jnp.swapaxes(q.reshape(tq, n_heads, d_head), 0, 1).astype(q_s.dtype)
        m_s[...] = jnp.full_like(m_s, -jnp.inf)
        l_s[...] = jnp.zeros_like(l_s)
        acc_s[...] = jnp.zeros_like(acc_s)

    # K/V for this kv tile: LayerNorm f32, bf16 MXU operands, f32 accumulation.
    x2n = _layernorm(x2_ref[...].astype(jnp.float32), g2_ref[...], b2_ref[...])
    x2b = x2n.astype(jnp.bfloat16)
    kx = jnp.dot(x2b, wk_ref[...], preferred_element_type=jnp.float32) + bk_ref[...]
    vx = jnp.dot(x2b, wv_ref[...], preferred_element_type=jnp.float32) + bv_ref[...]
    kh = jnp.swapaxes(kx.reshape(tk, n_heads, d_head), 0, 1).astype(jnp.bfloat16)
    vh = jnp.swapaxes(vx.reshape(tk, n_heads, d_head), 0, 1).astype(jnp.bfloat16)

    # Online softmax with deferred normalization (acc_s / l_s are unnormalized).
    s = jnp.einsum("hqd,hkd->hqk", q_s[...], kh,
                   preferred_element_type=jnp.float32)          # (H, TQ, TK)
    m_prev = m_s[...]
    m_cur = jnp.maximum(m_prev, jnp.max(s, axis=-1, keepdims=True))
    alpha = jnp.exp(m_prev - m_cur)
    p = jnp.exp(s - m_cur)
    l_s[...] = alpha * l_s[...] + jnp.sum(p, axis=-1, keepdims=True)
    acc_s[...] = alpha * acc_s[...] + jnp.einsum(
        "hqk,hkd->hqd", p.astype(jnp.bfloat16), vh,
        preferred_element_type=jnp.float32)                     # (H, TQ, Dh)
    m_s[...] = m_cur
    # TODO(synk): torch dropout on attention probs / context skipped (eval-mode identity).

    @pl.when(kv == pl.num_programs(2) - 1)
    def _finalize():
        # Normalize once on the (H,TQ,Dh) context (S2/Dh x fewer VPU mults than on p).
        if approx_recip:
            inv_l = pl.reciprocal(l_s[...], approx=True)   # EUP slot, ~1e-3 rel err
        else:
            inv_l = 1.0 / l_s[...]
        ctx = acc_s[...] * inv_l
        # Repack to lane-dense (TQ, HD) and do ONE full-K output projection.
        ctx2d = jnp.swapaxes(ctx, 0, 1).reshape(tq, n_heads * d_head)
        out = jnp.dot(ctx2d.astype(jnp.bfloat16), wo_ref[...],
                      preferred_element_type=jnp.float32) + bo_ref[...]
        o_ref[...] = out.astype(o_ref.dtype)


def cross_attention(x1, x2, params, *, n_heads, d_head,
                    block_q=16, block_k=32, approx_recip=True):
    """x1: (B, S1, D), x2: (B, S2, D) -> (B, S1, D)."""
    B, S1, D = x1.shape
    _, S2, _ = x2.shape
    HD = n_heads * d_head
    assert S1 % block_q == 0 and S2 % block_k == 0
    assert block_q % 8 == 0 and block_k % 8 == 0

    # bf16 weights in HBM: halves weight DMA traffic and feeds the MXU at full
    # bf16 rate.  Biases / LN params stay f32 (added into f32 accumulators).
    wq = params["wq"].astype(jnp.bfloat16)
    wk = params["wk"].astype(jnp.bfloat16)
    wv = params["wv"].astype(jnp.bfloat16)
    wo = params["wo"].astype(jnp.bfloat16)

    kernel = functools.partial(_cross_attn_kernel, n_heads=n_heads, d_head=d_head,
                               approx_recip=approx_recip)

    n_i = S1 // block_q
    n_k = S2 // block_k
    grid = (B, n_i, n_k)

    inv = lambda shape: pl.BlockSpec(shape, lambda b, i, k: (0,) * len(shape))

    grid_spec = pltpu.PrefetchScalarGridSpec(
        num_scalar_prefetch=0,
        grid=grid,
        in_specs=[
            pl.BlockSpec((pl.Squeezed(), block_q, D), lambda b, i, k: (b, i, 0)),  # x1
            pl.BlockSpec((pl.Squeezed(), block_k, D), lambda b, i, k: (b, k, 0)),  # x2
            inv((1, D)),   # gamma1
            inv((1, D)),   # beta1
            inv((1, D)),   # gamma2
            inv((1, D)),   # beta2
            inv((D, HD)),  # Wq
            inv((1, HD)),  # bq
            inv((D, HD)),  # Wk
            inv((1, HD)),  # bk
            inv((D, HD)),  # Wv
            inv((1, HD)),  # bv
            inv((HD, D)),  # Wo
            inv((1, D)),   # bo
        ],
        out_specs=pl.BlockSpec((pl.Squeezed(), block_q, D), lambda b, i, k: (b, i, 0)),
        scratch_shapes=[
            pltpu.VMEM((n_heads, block_q, d_head), jnp.bfloat16),  # q (head-major)
            pltpu.VMEM((n_heads, block_q, 1), jnp.float32),        # running max m
            pltpu.VMEM((n_heads, block_q, 1), jnp.float32),        # running denom l
            pltpu.VMEM((n_heads, block_q, d_head), jnp.float32),   # unnormalized ctx
        ],
    )

    # Advisory cost estimate so XLA schedules surrounding ops sensibly.
    flops = 2 * B * (S1 * D * HD                    # Q projection
                     + 2 * n_i * S2 * D * HD        # K/V projections (per q tile)
                     + 2 * n_heads * S1 * S2 * d_head  # QK^T + PV
                     + S1 * HD * D)                 # output projection
    cost = pl.CostEstimate(
        flops=flops,
        transcendentals=B * n_heads * S1 * S2,
        bytes_accessed=(B * S1 * D * 4                  # x1
                        + n_i * B * S2 * D * 4          # x2 re-read per q tile
                        + (3 * D * HD + HD * D) * 2     # bf16 weights
                        + B * S1 * D * 4),              # out
    )

    return pl.pallas_call(
        kernel,
        out_shape=jax.ShapeDtypeStruct((B, S1, D), x1.dtype),
        grid_spec=grid_spec,
        compiler_params=pltpu.CompilerParams(
            # b and the q-tile axis shard across TensorCores; kv is the
            # (accumulating) reduction axis and stays innermost / arbitrary.
            dimension_semantics=("parallel", "parallel", "arbitrary"),
            # Explicit budget; re-derived block sizes keep this small enough
            # for v7x's 64 MiB physical VMEM.
            vmem_limit_bytes=48 * 1024 * 1024,
        ),
        cost_estimate=cost,
    )(
        x1, x2,
        params["g1"], params["b1"], params["g2"], params["b2"],
        wq, params["bq"], wk, params["bk"], wv, params["bv"],
        wo, params["bo"],
    )


# ---------------------------------------------------------------------------
# Pure-JAX references.
# ---------------------------------------------------------------------------

def _ln_ref(x, g, b, eps=1e-5):
    m = jnp.mean(x, -1, keepdims=True)
    v = jnp.mean((x - m) ** 2, -1, keepdims=True)
    return (x - m) * jax.lax.rsqrt(v + eps) * g + b


def cross_attention_ref_f32(x1, x2, params, *, n_heads, d_head):
    """Exact-f32 reference mirroring the PyTorch module (eval mode)."""
    x1n = _ln_ref(x1, params["g1"], params["b1"])
    x2n = _ln_ref(x2, params["g2"], params["b2"])
    b = x1.shape[0]
    q = (x1n @ params["wq"] + params["bq"]).reshape(b, -1, n_heads, d_head)
    k = (x2n @ params["wk"] + params["bk"]).reshape(b, -1, n_heads, d_head)
    v = (x2n @ params["wv"] + params["bv"]).reshape(b, -1, n_heads, d_head)
    scores = jnp.einsum("bihd,bjhd->bhij", q, k) / jnp.sqrt(jnp.float32(d_head))
    att = jax.nn.softmax(scores, axis=-1)
    out = jnp.einsum("bhij,bjhd->bihd", att, v).reshape(b, -1, n_heads * d_head)
    return out @ params["wo"] + params["bo"]


def cross_attention_ref_mixed(x1, x2, params, *, n_heads, d_head):
    """Reference with the kernel's numerics contract: bf16 matmul operands,
    f32 accumulation, f32 LayerNorm/softmax, deferred (exact) normalization."""
    bf, f32 = jnp.bfloat16, jnp.float32
    B = x1.shape[0]
    HD = n_heads * d_head
    x1n = _ln_ref(x1.astype(f32), params["g1"], params["b1"]).astype(bf)
    x2n = _ln_ref(x2.astype(f32), params["g2"], params["b2"]).astype(bf)
    wq, wk, wv, wo = (params[n].astype(bf) for n in ("wq", "wk", "wv", "wo"))

    q = (jnp.einsum("bsd,de->bse", x1n, wq, preferred_element_type=f32)
         + params["bq"]) * (1.0 / math.sqrt(d_head))
    k = jnp.einsum("bsd,de->bse", x2n, wk, preferred_element_type=f32) + params["bk"]
    v = jnp.einsum("bsd,de->bse", x2n, wv, preferred_element_type=f32) + params["bv"]

    q = q.reshape(B, -1, n_heads, d_head).astype(bf)
    k = k.reshape(B, -1, n_heads, d_head).astype(bf)
    v = v.reshape(B, -1, n_heads, d_head).astype(bf)

    s = jnp.einsum("bihd,bjhd->bhij", q, k, preferred_element_type=f32)
    p = jnp.exp(s - jnp.max(s, axis=-1, keepdims=True))
    l = jnp.sum(p, axis=-1, keepdims=True)                       # (B,H,S1,1)
    ctx = jnp.einsum("bhij,bjhd->bihd", p.astype(bf), v,
                     preferred_element_type=f32)                 # (B,S1,H,Dh)
    ctx = ctx / jnp.transpose(l, (0, 2, 1, 3))                   # exact denom
    ctx = ctx.reshape(B, -1, HD)
    return (jnp.einsum("bse,ed->bsd", ctx.astype(bf), wo,
                       preferred_element_type=f32) + params["bo"])


def init_params(key, d_model, n_heads, d_head):
    HD = n_heads * d_head
    ks = jax.random.split(key, 10)
    s_in = 1.0 / jnp.sqrt(jnp.float32(d_model))
    s_hd = 1.0 / jnp.sqrt(jnp.float32(HD))
    return {
        "g1": 1.0 + 0.1 * jax.random.normal(ks[0], (1, d_model), jnp.float32),
        "b1": 0.1 * jax.random.normal(ks[1], (1, d_model), jnp.float32),
        "g2": 1.0 + 0.1 * jax.random.normal(ks[2], (1, d_model), jnp.float32),
        "b2": 0.1 * jax.random.normal(ks[3], (1, d_model), jnp.float32),
        "wq": s_in * jax.random.normal(ks[4], (d_model, HD), jnp.float32),
        "bq": jnp.zeros((1, HD), jnp.float32),
        "wk": s_in * jax.random.normal(ks[5], (d_model, HD), jnp.float32),
        "bk": jnp.zeros((1, HD), jnp.float32),
        "wv": s_in * jax.random.normal(ks[6], (d_model, HD), jnp.float32),
        "bv": jnp.zeros((1, HD), jnp.float32),
        "wo": s_hd * jax.random.normal(ks[7], (HD, d_model), jnp.float32),
        "bo": 0.1 * jax.random.normal(ks[8], (1, d_model), jnp.float32),
    }


if __name__ == "__main__":
    # Small shapes consistent with the module (x1:(B,S1,D), x2:(B,S2,D)).
    B, S1, S2 = 2, 32, 64
    d_model, n_heads, d_head = 128, 4, 32

    key = jax.random.PRNGKey(0)
    k1, k2, kp = jax.random.split(key, 3)
    x1 = jax.random.normal(k1, (B, S1, d_model), jnp.float32)
    x2 = jax.random.normal(k2, (B, S2, d_model), jnp.float32)
    params = init_params(kp, d_model, n_heads, d_head)

    out = cross_attention(x1, x2, params, n_heads=n_heads, d_head=d_head,
                          block_q=16, block_k=32)
    out = jax.block_until_ready(out)
    assert out.shape == (B, S1, d_model)

    # Tight check vs. the kernel's numerics contract (bf16 operands / f32 acc /
    # exact softmax denom).  Slack covers only the approx EUP reciprocal and
    # accumulation-order / online-vs-full softmax rounding differences.
    ref_mixed = cross_attention_ref_mixed(x1, x2, params,
                                          n_heads=n_heads, d_head=d_head)
    assert jnp.allclose(out, ref_mixed, atol=2e-2, rtol=2e-2), \
        float(jnp.max(jnp.abs(out - ref_mixed)))

    # Coarse check vs. the exact-f32 module semantics; tolerance accounts for
    # the documented bf16 mixed-precision MXU operands.
    ref_f32 = cross_attention_ref_f32(x1, x2, params,
                                      n_heads=n_heads, d_head=d_head)
    assert jnp.allclose(out, ref_f32, atol=8e-2, rtol=8e-2), \
        float(jnp.max(jnp.abs(out - ref_f32)))

    print("KERNEL_OK")
</pallas_src>

<mosaic_0001>
module attributes {stable_mosaic.version = 11 : i64} {
  func.func @_cross_attn_kernel(%arg0: i32, %arg1: i32, %arg2: i32, %arg3: memref<1x16x128xf32, #tpu.memory_space<vmem>>, %arg4: memref<1x32x128xf32, #tpu.memory_space<vmem>>, %arg5: memref<1x128xf32, #tpu.memory_space<vmem>>, %arg6: memref<1x128xf32, #tpu.memory_space<vmem>>, %arg7: memref<1x128xf32, #tpu.memory_space<vmem>>, %arg8: memref<1x128xf32, #tpu.memory_space<vmem>>, %arg9: memref<128x128xbf16, #tpu.memory_space<vmem>>, %arg10: memref<1x128xf32, #tpu.memory_space<vmem>>, %arg11: memref<128x128xbf16, #tpu.memory_space<vmem>>, %arg12: memref<1x128xf32, #tpu.memory_space<vmem>>, %arg13: memref<128x128xbf16, #tpu.memory_space<vmem>>, %arg14: memref<1x128xf32, #tpu.memory_space<vmem>>, %arg15: memref<128x128xbf16, #tpu.memory_space<vmem>>, %arg16: memref<1x128xf32, #tpu.memory_space<vmem>>, %arg17: memref<1x16x128xf32, #tpu.memory_space<vmem>>, %arg18: memref<4x16x32xbf16, #tpu.memory_space<vmem>>, %arg19: memref<4x16x1xf32, #tpu.memory_space<vmem>>, %arg20: memref<4x16x1xf32, #tpu.memory_space<vmem>>, %arg21: memref<4x16x32xf32, #tpu.memory_space<vmem>>) attributes {dimension_semantics = [#tpu.dimension_semantics<parallel>, #tpu.dimension_semantics<parallel>, #tpu.dimension_semantics<arbitrary>], iteration_bounds = array<i64: 2, 2, 2>, scalar_prefetch = 0 : i64, scratch_operands = 4 : i64, tpu.core_type = #tpu.core_type<tc>, window_params = [{transform_indices = @transform_0, window_bounds = array<i64: 1, 16, 128>}, {transform_indices = @transform_1, window_bounds = array<i64: 1, 32, 128>}, {pipeline_mode = #tpu.pipeline_mode<synchronous>, transform_indices = @transform_2, window_bounds = array<i64: 1, 128>}, {pipeline_mode = #tpu.pipeline_mode<synchronous>, transform_indices = @transform_3, window_bounds = array<i64: 1, 128>}, {pipeline_mode = #tpu.pipeline_mode<synchronous>, transform_indices = @transform_4, window_bounds = array<i64: 1, 128>}, {pipeline_mode = #tpu.pipeline_mode<synchronous>, transform_indices = @transform_5, window_bounds = array<i64: 1, 128>}, {pipeline_mode = #tpu.pipeline_mode<synchronous>, transform_indices = @transform_6, window_bounds = array<i64: 128, 128>}, {pipeline_mode = #tpu.pipeline_mode<synchronous>, transform_indices = @transform_7, window_bounds = array<i64: 1, 128>}, {pipeline_mode = #tpu.pipeline_mode<synchronous>, transform_indices = @transform_8, window_bounds = array<i64: 128, 128>}, {pipeline_mode = #tpu.pipeline_mode<synchronous>, transform_indices = @transform_9, window_bounds = array<i64: 1, 128>}, {pipeline_mode = #tpu.pipeline_mode<synchronous>, transform_indices = @transform_10, window_bounds = array<i64: 128, 128>}, {pipeline_mode = #tpu.pipeline_mode<synchronous>, transform_indices = @transform_11, window_bounds = array<i64: 1, 128>}, {pipeline_mode = #tpu.pipeline_mode<synchronous>, transform_indices = @transform_12, window_bounds = array<i64: 128, 128>}, {pipeline_mode = #tpu.pipeline_mode<synchronous>, transform_indices = @transform_13, window_bounds = array<i64: 1, 128>}, {transform_indices = @transform_14, window_bounds = array<i64: 1, 16, 128>}]} {
    %c0_i32 = arith.constant 0 : i32
    %0 = arith.cmpi eq, %arg2, %c0_i32 : i32
    %1 = arith.extui %0 : i1 to i32
    %c0_i32_0 = arith.constant 0 : i32
    %2 = arith.cmpi ne, %1, %c0_i32_0 : i32
    scf.if %2 {
      %c0_47 = arith.constant 0 : index
      %c0_48 = arith.constant 0 : index
      %c0_49 = arith.constant 0 : index
      %74 = vector.load %arg3[%c0_47, %c0_48, %c0_49] : memref<1x16x128xf32, #tpu.memory_space<vmem>>, vector<1x16x128xf32>
      %75 = vector.shape_cast %74 : vector<1x16x128xf32> to vector<16x128xf32>
      %c0_50 = arith.constant 0 : index
      %c0_51 = arith.constant 0 : index
      %76 = vector.load %arg5[%c0_50, %c0_51] : memref<1x128xf32, #tpu.memory_space<vmem>>, vector<1x128xf32>
      %c0_52 = arith.constant 0 : index
      %c0_53 = arith.constant 0 : index
      %77 = vector.load %arg6[%c0_52, %c0_53] : memref<1x128xf32, #tpu.memory_space<vmem>>, vector<1x128xf32>
      %cst_54 = arith.constant dense<0.000000e+00> : vector<16xf32>
      %78 = vector.multi_reduction <add>, %75, %cst_54 [1] : vector<16x128xf32> to vector<16xf32>
      %79 = vector.shape_cast %78 : vector<16xf32> to vector<16x1xf32>
      %cst_55 = arith.constant 1.280000e+02 : f32
      %80 = vector.broadcast %cst_55 : f32 to vector<16x1xf32>
      %81 = arith.divf %79, %80 : vector<16x1xf32>
      %82 = vector.broadcast %81 : vector<16x1xf32> to vector<16x128xf32>
      %83 = arith.subf %75, %82 : vector<16x128xf32>
      %84 = arith.mulf %83, %83 : vector<16x128xf32>
      %cst_56 = arith.constant dense<0.000000e+00> : vector<16xf32>
      %85 = vector.multi_reduction <add>, %84, %cst_56 [1] : vector<16x128xf32> to vector<16xf32>
      %86 = vector.shape_cast %85 : vector<16xf32> to vector<16x1xf32>
      %cst_57 = arith.constant 1.280000e+02 : f32
      %87 = vector.broadcast %cst_57 : f32 to vector<16x1xf32>
      %88 = arith.divf %86, %87 : vector<16x1xf32>
      %89 = vector.broadcast %81 : vector<16x1xf32> to vector<16x128xf32>
      %90 = arith.subf %75, %89 : vector<16x128xf32>
      %cst_58 = arith.constant 9.99999974E-6 : f32
      %91 = vector.broadcast %cst_58 : f32 to vector<16x1xf32>
      %92 = arith.addf %88, %91 : vector<16x1xf32>
      %93 = math.rsqrt %92 : vector<16x1xf32>
      %94 = vector.broadcast %93 : vector<16x1xf32> to vector<16x128xf32>
      %95 = arith.mulf %90, %94 : vector<16x128xf32>
      %96 = vector.broadcast %76 : vector<1x128xf32> to vector<16x128xf32>
      %97 = arith.mulf %95, %96 : vector<16x128xf32>
      %98 = vector.broadcast %77 : vector<1x128xf32> to vector<16x128xf32>
      %99 = arith.addf %97, %98 : vector<16x128xf32>
      %100 = arith.truncf %99 : vector<16x128xf32> to vector<16x128xbf16>
      %c0_59 = arith.constant 0 : index
      %c0_60 = arith.constant 0 : index
      %101 = vector.load %arg9[%c0_59, %c0_60] : memref<128x128xbf16, #tpu.memory_space<vmem>>, vector<128x128xbf16>
      %cst_61 = arith.constant dense<0.000000e+00> : vector<16x128xf32>
      %102 = tpu.matmul %100, %101, %cst_61 {dimension_numbers = #tpu.dot_dimension_numbers<[1], [0], [0], [1], [0, 0, 1, 1], [], []>} : vector<16x128xbf16>, vector<128x128xbf16>, vector<16x128xf32> -> vector<16x128xf32>
      %c0_62 = arith.constant 0 : index
      %c0_63 = arith.constant 0 : index
      %103 = vector.load %arg10[%c0_62, %c0_63] : memref<1x128xf32, #tpu.memory_space<vmem>>, vector<1x128xf32>
      %104 = vector.broadcast %103 : vector<1x128xf32> to vector<16x128xf32>
      %105 = arith.addf %102, %104 : vector<16x128xf32>
      %cst_64 = arith.constant 0.176776692 : f32
      %106 = vector.broadcast %cst_64 : f32 to vector<16x128xf32>
      %107 = arith.mulf %105, %106 : vector<16x128xf32>
      %108 = vector.shape_cast %107 : vector<16x128xf32> to vector<16x4x32xf32>
      %109 = tpu.transpose %108, [1, 0, 2] : vector<16x4x32xf32> -> vector<4x16x32xf32>
      %110 = arith.truncf %109 : vector<4x16x32xf32> to vector<4x16x32xbf16>
      %c0_65 = arith.constant 0 : index
      %c0_66 = arith.constant 0 : index
      %c0_67 = arith.constant 0 : index
      %111 = vector.load %arg18[%c0_65, %c0_66, %c0_67] : memref<4x16x32xbf16, #tpu.memory_space<vmem>>, vector<4x16x32xbf16>
      tpu.vector_store %arg18[%c0_65, %c0_66, %c0_67], %110 {strides = array<i32>} : memref<4x16x32xbf16, #tpu.memory_space<vmem>>, vector<4x16x32xbf16>,
      %cst_68 = arith.constant 0xFF800000 : f32
      %112 = vector.broadcast %cst_68 : f32 to vector<4x16x1xf32>
      %c0_69 = arith.constant 0 : index
      %c0_70 = arith.constant 0 : index
      %c0_71 = arith.constant 0 : index
      %113 = vector.load %arg19[%c0_69, %c0_70, %c0_71] : memref<4x16x1xf32, #tpu.memory_space<vmem>>, vector<4x16x1xf32>
      tpu.vector_store %arg19[%c0_69, %c0_70, %c0_71], %112 {strides = array<i32>} : memref<4x16x1xf32, #tpu.memory_space<vmem>>, vector<4x16x1xf32>,
      %cst_72 = arith.constant 0.000000e+00 : f32
      %114 = vector.broadcast %cst_72 : f32 to vector<4x16x1xf32>
      %c0_73 = arith.constant 0 : index
      %c0_74 = arith.constant 0 : index
      %c0_75 = arith.constant 0 : index
      %115 = vector.load %arg20[%c0_73, %c0_74, %c0_75] : memref<4x16x1xf32, #tpu.memory_space<vmem>>, vector<4x16x1xf32>
      tpu.vector_store %arg20[%c0_73, %c0_74, %c0_75], %114 {strides = array<i32>} : memref<4x16x1xf32, #tpu.memory_space<vmem>>, vector<4x16x1xf32>,
      %cst_76 = arith.constant 0.000000e+00 : f32
      %116 = vector.broadcast %cst_76 : f32 to vector<4x16x32xf32>
      %c0_77 = arith.constant 0 : index
      %c0_78 = arith.constant 0 : index
      %c0_79 = arith.constant 0 : index
      %117 = vector.load %arg21[%c0_77, %c0_78, %c0_79] : memref<4x16x32xf32, #tpu.memory_space<vmem>>, vector<4x16x32xf32>
      tpu.vector_store %arg21[%c0_77, %c0_78, %c0_79], %116 {strides = array<i32>} : memref<4x16x32xf32, #tpu.memory_space<vmem>>, vector<4x16x32xf32>,
    } else {
    }
    %c0 = arith.constant 0 : index
    %c0_1 = arith.constant 0 : index
    %c0_2 = arith.constant 0 : index
    %3 = vector.load %arg4[%c0, %c0_1, %c0_2] : memref<1x32x128xf32, #tpu.memory_space<vmem>>, vector<1x32x128xf32>
    %4 = vector.shape_cast %3 : vector<1x32x128xf32> to vector<32x128xf32>
    %c0_3 = arith.constant 0 : index
    %c0_4 = arith.constant 0 : index
    %5 = vector.load %arg7[%c0_3, %c0_4] : memref<1x128xf32, #tpu.memory_space<vmem>>, vector<1x128xf32>
    %c0_5 = arith.constant 0 : index
    %c0_6 = arith.constant 0 : index
    %6 = vector.load %arg8[%c0_5, %c0_6] : memref<1x128xf32, #tpu.memory_space<vmem>>, vector<1x128xf32>
    %cst = arith.constant dense<0.000000e+00> : vector<32xf32>
    %7 = vector.multi_reduction <add>, %4, %cst [1] : vector<32x128xf32> to vector<32xf32>
    %8 = vector.shape_cast %7 : vector<32xf32> to vector<32x1xf32>
    %cst_7 = arith.constant 1.280000e+02 : f32
    %9 = vector.broadcast %cst_7 : f32 to vector<32x1xf32>
    %10 = arith.divf %8, %9 : vector<32x1xf32>
    %11 = vector.broadcast %10 : vector<32x1xf32> to vector<32x128xf32>
    %12 = arith.subf %4, %11 : vector<32x128xf32>
    %13 = arith.mulf %12, %12 : vector<32x128xf32>
    %cst_8 = arith.constant dense<0.000000e+00> : vector<32xf32>
    %14 = vector.multi_reduction <add>, %13, %cst_8 [1] : vector<32x128xf32> to vector<32xf32>
    %15 = vector.shape_cast %14 : vector<32xf32> to vector<32x1xf32>
    %cst_9 = arith.constant 1.280000e+02 : f32
    %16 = vector.broadcast %cst_9 : f32 to vector<32x1xf32>
    %17 = arith.divf %15, %16 : vector<32x1xf32>
    %18 = vector.broadcast %10 : vector<32x1xf32> to vector<32x128xf32>
    %19 = arith.subf %4, %18 : vector<32x128xf32>
    %cst_10 = arith.constant 9.99999974E-6 : f32
    %20 = vector.broadcast %cst_10 : f32 to vector<32x1xf32>
    %21 = arith.addf %17, %20 : vector<32x1xf32>
    %22 = math.rsqrt %21 : vector<32x1xf32>
    %23 = vector.broadcast %22 : vector<32x1xf32> to vector<32x128xf32>
    %24 = arith.mulf %19, %23 : vector<32x128xf32>
    %25 = vector.broadcast %5 : vector<1x128xf32> to vector<32x128xf32>
    %26 = arith.mulf %24, %25 : vector<32x128xf32>
    %27 = vector.broadcast %6 : vector<1x128xf32> to vector<32x128xf32>
    %28 = arith.addf %26, %27 : vector<32x128xf32>
    %29 = arith.truncf %28 : vector<32x128xf32> to vector<32x128xbf16>
    %c0_11 = arith.constant 0 : index
    %c0_12 = arith.constant 0 : index
    %30 = vector.load %arg11[%c0_11, %c0_12] : memref<128x128xbf16, #tpu.memory_space<vmem>>, vector<128x128xbf16>
    %cst_13 = arith.constant dense<0.000000e+00> : vector<32x128xf32>
    %31 = tpu.matmul %29, %30, %cst_13 {dimension_numbers = #tpu.dot_dimension_numbers<[1], [0], [0], [1], [0, 0, 1, 1], [], []>} : vector<32x128xbf16>, vector<128x128xbf16>, vector<32x128xf32> -> vector<32x128xf32>
    %c0_14 = arith.constant 0 : index
    %c0_15 = arith.constant 0 : index
    %32 = vector.load %arg12[%c0_14, %c0_15] : memref<1x128xf32, #tpu.memory_space<vmem>>, vector<1x128xf32>
    %33 = vector.broadcast %32 : vector<1x128xf32> to vector<32x128xf32>
    %34 = arith.addf %31, %33 : vector<32x128xf32>
    %c0_16 = arith.constant 0 : index
    %c0_17 = arith.constant 0 : index
    %35 = vector.load %arg13[%c0_16, %c0_17] : memref<128x128xbf16, #tpu.memory_space<vmem>>, vector<128x128xbf16>
    %cst_18 = arith.constant dense<0.000000e+00> : vector<32x128xf32>
    %36 = tpu.matmul %29, %35, %cst_18 {dimension_numbers = #tpu.dot_dimension_numbers<[1], [0], [0], [1], [0, 0, 1, 1], [], []>} : vector<32x128xbf16>, vector<128x128xbf16>, vector<32x128xf32> -> vector<32x128xf32>
    %c0_19 = arith.constant 0 : index
    %c0_20 = arith.constant 0 : index
    %37 = vector.load %arg14[%c0_19, %c0_20] : memref<1x128xf32, #tpu.memory_space<vmem>>, vector<1x128xf32>
    %38 = vector.broadcast %37 : vector<1x128xf32> to vector<32x128xf32>
    %39 = arith.addf %36, %38 : vector<32x128xf32>
    %40 = vector.shape_cast %34 : vector<32x128xf32> to vector<32x4x32xf32>
    %41 = tpu.transpose %40, [1, 0, 2] : vector<32x4x32xf32> -> vector<4x32x32xf32>
    %42 = arith.truncf %41 : vector<4x32x32xf32> to vector<4x32x32xbf16>
    %43 = vector.shape_cast %39 : vector<32x128xf32> to vector<32x4x32xf32>
    %44 = tpu.transpose %43, [1, 0, 2] : vector<32x4x32xf32> -> vector<4x32x32xf32>
    %45 = arith.truncf %44 : vector<4x32x32xf32> to vector<4x32x32xbf16>
    %c0_21 = arith.constant 0 : index
    %c0_22 = arith.constant 0 : index
    %c0_23 = arith.constant 0 : index
    %46 = vector.load %arg18[%c0_21, %c0_22, %c0_23] : memref<4x16x32xbf16, #tpu.memory_space<vmem>>, vector<4x16x32xbf16>
    "tpu.trace_start"() <{level = 10 : i32, message = "hqd,hkd->hqk"}> : () -> ()
    %cst_24 = arith.constant dense<0.000000e+00> : vector<4x16x32xf32>
    %47 = tpu.matmul %46, %42, %cst_24 {dimension_numbers = #tpu.dot_dimension_numbers<[2], [2], [1], [1], [0, 0, 0, 1, 1, 1], [0], [0]>} : vector<4x16x32xbf16>, vector<4x32x32xbf16>, vector<4x16x32xf32> -> vector<4x16x32xf32>
    "tpu.trace_stop"() : () -> ()
    %c0_25 = arith.constant 0 : index
    %c0_26 = arith.constant 0 : index
    %c0_27 = arith.constant 0 : index
    %48 = vector.load %arg19[%c0_25, %c0_26, %c0_27] : memref<4x16x1xf32, #tpu.memory_space<vmem>>, vector<4x16x1xf32>
    %cst_28 = arith.constant dense<0xFF800000> : vector<4x16xf32>
    %49 = vector.multi_reduction <maximumf>, %47, %cst_28 [2] : vector<4x16x32xf32> to vector<4x16xf32>
    %50 = vector.shape_cast %49 : vector<4x16xf32> to vector<4x16x1xf32>
    %51 = arith.maximumf %48, %50 : vector<4x16x1xf32>
    %52 = arith.subf %48, %51 : vector<4x16x1xf32>
    %53 = math.exp %52 : vector<4x16x1xf32>
    %54 = vector.broadcast %51 : vector<4x16x1xf32> to vector<4x16x32xf32>
    %55 = arith.subf %47, %54 : vector<4x16x32xf32>
    %56 = math.exp %55 : vector<4x16x32xf32>
    %c0_29 = arith.constant 0 : index
    %c0_30 = arith.constant 0 : index
    %c0_31 = arith.constant 0 : index
    %57 = vector.load %arg20[%c0_29, %c0_30, %c0_31] : memref<4x16x1xf32, #tpu.memory_space<vmem>>, vector<4x16x1xf32>
    %58 = arith.mulf %53, %57 : vector<4x16x1xf32>
    %cst_32 = arith.constant dense<0.000000e+00> : vector<4x16xf32>
    %59 = vector.multi_reduction <add>, %56, %cst_32 [2] : vector<4x16x32xf32> to vector<4x16xf32>
    %60 = vector.shape_cast %59 : vector<4x16xf32> to vector<4x16x1xf32>
    %61 = arith.addf %58, %60 : vector<4x16x1xf32>
    %c0_33 = arith.constant 0 : index
    %c0_34 = arith.constant 0 : index
    %c0_35 = arith.constant 0 : index
    %62 = vector.load %arg20[%c0_33, %c0_34, %c0_35] : memref<4x16x1xf32, #tpu.memory_space<vmem>>, vector<4x16x1xf32>
    tpu.vector_store %arg20[%c0_33, %c0_34, %c0_35], %61 {strides = array<i32>} : memref<4x16x1xf32, #tpu.memory_space<vmem>>, vector<4x16x1xf32>,
    %c0_36 = arith.constant 0 : index
    %c0_37 = arith.constant 0 : index
    %c0_38 = arith.constant 0 : index
    %63 = vector.load %arg21[%c0_36, %c0_37, %c0_38] : memref<4x16x32xf32, #tpu.memory_space<vmem>>, vector<4x16x32xf32>
    %64 = vector.broadcast %53 : vector<4x16x1xf32> to vector<4x16x32xf32>
    %65 = arith.mulf %64, %63 : vector<4x16x32xf32>
    %66 = arith.truncf %56 : vector<4x16x32xf32> to vector<4x16x32xbf16>
    "tpu.trace_start"() <{level = 10 : i32, message = "hqk,hkd->hqd"}> : () -> ()
    %cst_39 = arith.constant dense<0.000000e+00> : vector<4x16x32xf32>
    %67 = tpu.matmul %66, %45, %cst_39 {dimension_numbers = #tpu.dot_dimension_numbers<[2], [1], [1], [2], [0, 0, 0, 1, 1, 2], [0], [0]>} : vector<4x16x32xbf16>, vector<4x32x32xbf16>, vector<4x16x32xf32> -> vector<4x16x32xf32>
    "tpu.trace_stop"() : () -> ()
    %68 = arith.addf %65, %67 : vector<4x16x32xf32>
    %c0_40 = arith.constant 0 : index
    %c0_41 = arith.constant 0 : index
    %c0_42 = arith.constant 0 : index
    %69 = vector.load %arg21[%c0_40, %c0_41, %c0_42] : memref<4x16x32xf32, #tpu.memory_space<vmem>>, vector<4x16x32xf32>
    tpu.vector_store %arg21[%c0_40, %c0_41, %c0_42], %68 {strides = array<i32>} : memref<4x16x32xf32, #tpu.memory_space<vmem>>, vector<4x16x32xf32>,
    %c0_43 = arith.constant 0 : index
    %c0_44 = arith.constant 0 : index
    %c0_45 = arith.constant 0 : index
    %70 = vector.load %arg19[%c0_43, %c0_44, %c0_45] : memref<4x16x1xf32, #tpu.memory_space<vmem>>, vector<4x16x1xf32>
    tpu.vector_store %arg19[%c0_43, %c0_44, %c0_45], %51 {strides = array<i32>} : memref<4x16x1xf32, #tpu.memory_space<vmem>>, vector<4x16x1xf32>,
    %c1_i32 = arith.constant 1 : i32
    %71 = arith.cmpi eq, %arg2, %c1_i32 : i32
    %72 = arith.extui %71 : i1 to i32
    %c0_i32_46 = arith.constant 0 : i32
    %73 = arith.cmpi ne, %72, %c0_i32_46 : i32
    scf.if %73 {
      %c0_47 = arith.constant 0 : index
      %c0_48 = arith.constant 0 : index
      %c0_49 = arith.constant 0 : index
      %74 = vector.load %arg20[%c0_47, %c0_48, %c0_49] : memref<4x16x1xf32, #tpu.memory_space<vmem>>, vector<4x16x1xf32>
      %75 = tpu.reciprocal %74 {approx = true} : vector<4x16x1xf32> -> vector<4x16x1xf32>
      %c0_50 = arith.constant 0 : index
      %c0_51 = arith.constant 0 : index
      %c0_52 = arith.constant 0 : index
      %76 = vector.load %arg21[%c0_50, %c0_51, %c0_52] : memref<4x16x32xf32, #tpu.memory_space<vmem>>, vector<4x16x32xf32>
      %77 = vector.broadcast %75 : vector<4x16x1xf32> to vector<4x16x32xf32>
      %78 = arith.mulf %76, %77 : vector<4x16x32xf32>
      %79 = tpu.transpose %78, [1, 0, 2] : vector<4x16x32xf32> -> vector<16x4x32xf32>
      %80 = vector.shape_cast %79 : vector<16x4x32xf32> to vector<16x128xf32>
      %81 = arith.truncf %80 : vector<16x128xf32> to vector<16x128xbf16>
      %c0_53 = arith.constant 0 : index
      %c0_54 = arith.constant 0 : index
      %82 = vector.load %arg15[%c0_53, %c0_54] : memref<128x128xbf16, #tpu.memory_space<vmem>>, vector<128x128xbf16>
      %cst_55 = arith.constant dense<0.000000e+00> : vector<16x128xf32>
      %83 = tpu.matmul %81, %82, %cst_55 {dimension_numbers = #tpu.dot_dimension_numbers<[1], [0], [0], [1], [0, 0, 1, 1], [], []>} : vector<16x128xbf16>, vector<128x128xbf16>, vector<16x128xf32> -> vector<16x128xf32>
      %c0_56 = arith.constant 0 : index
      %c0_57 = arith.constant 0 : index
      %84 = vector.load %arg16[%c0_56, %c0_57] : memref<1x128xf32, #tpu.memory_space<vmem>>, vector<1x128xf32>
      %85 = vector.broadcast %84 : vector<1x128xf32> to vector<16x128xf32>
      %86 = arith.addf %83, %85 : vector<16x128xf32>
      %c0_58 = arith.constant 0 : index
      %c0_59 = arith.constant 0 : index
      %c0_60 = arith.constant 0 : index
      %87 = vector.load %arg17[%c0_58, %c0_59, %c0_60] : memref<1x16x128xf32, #tpu.memory_space<vmem>>, vector<1x16x128xf32>
      %88 = vector.shape_cast %87 : vector<1x16x128xf32> to vector<16x128xf32>
      %89 = vector.shape_cast %86 : vector<16x128xf32> to vector<1x16x128xf32>
      tpu.vector_store %arg17[%c0_58, %c0_59, %c0_60], %89 {strides = array<i32>} : memref<1x16x128xf32, #tpu.memory_space<vmem>>, vector<1x16x128xf32>,
    } else {
    }
    return
  }
  func.func @transform_0(%arg0: i32, %arg1: i32, %arg2: i32) -> (i32, i32, i32) {
    %c0_i32 = arith.constant 0 : i32
    %c0_i32_0 = arith.constant 0 : i32
    return %arg0, %arg1, %c0_i32 : i32, i32, i32
  }
  func.func @transform_1(%arg0: i32, %arg1: i32, %arg2: i32) -> (i32, i32, i32) {
    %c0_i32 = arith.constant 0 : i32
    %c0_i32_0 = arith.constant 0 : i32
    return %arg0, %arg2, %c0_i32 : i32, i32, i32
  }
  func.func @transform_2(%arg0: i32, %arg1: i32, %arg2: i32) -> (i32, i32) {
    %c0_i32 = arith.constant 0 : i32
    %c0_i32_0 = arith.constant 0 : i32
    %c0_i32_1 = arith.constant 0 : i32
    return %c0_i32, %c0_i32_0 : i32, i32
  }
  func.func @transform_3(%arg0: i32, %arg1: i32, %arg2: i32) -> (i32, i32) {
    %c0_i32 = arith.constant 0 : i32
    %c0_i32_0 = arith.constant 0 : i32
    %c0_i32_1 = arith.constant 0 : i32
    return %c0_i32, %c0_i32_0 : i32, i32
  }
  func.func @transform_4(%arg0: i32, %arg1: i32, %arg2: i32) -> (i32, i32) {
    %c0_i32 = arith.constant 0 : i32
    %c0_i32_0 = arith.constant 0 : i32
    %c0_i32_1 = arith.constant 0 : i32
    return %c0_i32, %c0_i32_0 : i32, i32
  }
  func.func @transform_5(%arg0: i32, %arg1: i32, %arg2: i32) -> (i32, i32) {
    %c0_i32 = arith.constant 0 : i32
    %c0_i32_0 = arith.constant 0 : i32
    %c0_i32_1 = arith.constant 0 : i32
    return %c0_i32, %c0_i32_0 : i32, i32
  }
  func.func @transform_6(%arg0: i32, %arg1: i32, %arg2: i32) -> (i32, i32) {
    %c0_i32 = arith.constant 0 : i32
    %c0_i32_0 = arith.constant 0 : i32
    %c0_i32_1 = arith.constant 0 : i32
    return %c0_i32, %c0_i32_0 : i32, i32
  }
  func.func @transform_7(%arg0: i32, %arg1: i32, %arg2: i32) -> (i32, i32) {
    %c0_i32 = arith.constant 0 : i32
    %c0_i32_0 = arith.constant 0 : i32
    %c0_i32_1 = arith.constant 0 : i32
    return %c0_i32, %c0_i32_0 : i32, i32
  }
  func.func @transform_8(%arg0: i32, %arg1: i32, %arg2: i32) -> (i32, i32) {
    %c0_i32 = arith.constant 0 : i32
    %c0_i32_0 = arith.constant 0 : i32
    %c0_i32_1 = arith.constant 0 : i32
    return %c0_i32, %c0_i32_0 : i32, i32
  }
  func.func @transform_9(%arg0: i32, %arg1: i32, %arg2: i32) -> (i32, i32) {
    %c0_i32 = arith.constant 0 : i32
    %c0_i32_0 = arith.constant 0 : i32
    %c0_i32_1 = arith.constant 0 : i32
    return %c0_i32, %c0_i32_0 : i32, i32
  }
  func.func @transform_10(%arg0: i32, %arg1: i32, %arg2: i32) -> (i32, i32) {
    %c0_i32 = arith.constant 0 : i32
    %c0_i32_0 = arith.constant 0 : i32
    %c0_i32_1 = arith.constant 0 : i32
    return %c0_i32, %c0_i32_0 : i32, i32
  }
  func.func @transform_11(%arg0: i32, %arg1: i32, %arg2: i32) -> (i32, i32) {
    %c0_i32 = arith.constant 0 : i32
    %c0_i32_0 = arith.constant 0 : i32
    %c0_i32_1 = arith.constant 0 : i32
    return %c0_i32, %c0_i32_0 : i32, i32
  }
  func.func @transform_12(%arg0: i32, %arg1: i32, %arg2: i32) -> (i32, i32) {
    %c0_i32 = arith.constant 0 : i32
    %c0_i32_0 = arith.constant 0 : i32
    %c0_i32_1 = arith.constant 0 : i32
    return %c0_i32, %c0_i32_0 : i32, i32
  }
  func.func @transform_13(%arg0: i32, %arg1: i32, %arg2: i32) -> (i32, i32) {
    %c0_i32 = arith.constant 0 : i32
    %c0_i32_0 = arith.constant 0 : i32
    %c0_i32_1 = arith.constant 0 : i32
    return %c0_i32, %c0_i32_0 : i32, i32
  }
  func.func @transform_14(%arg0: i32, %arg1: i32, %arg2: i32) -> (i32, i32, i32) {
    %c0_i32 = arith.constant 0 : i32
    %c0_i32_0 = arith.constant 0 : i32
    return %arg0, %arg1, %c0_i32 : i32, i32, i32
  }
}

</mosaic_0001>

<llo_original>
// kernel: tpu_custom_call.1
$region0: #{tpu_custom_call.1}
  #allocation0 [shape = 'u32[]', space=smem, size = 0x4, offset = 0x4, fixed_abs, tag = 'smem constant byte address 0x4 - core index']
  #allocation1 [shape = 'u32[72,128]{1,0:T(1,128)}', space=vmem, size = 0x9000, scoped, tag = 'internal scratch']
  #allocation2 [shape = 'bf16[4,16,32]{2,1,0:T(8,128)(2,1)}', space=vmem, size = 0x4000, scoped, tag = 'scratch operand']
  #allocation3 [shape = 'f32[4,16,1]{2,1,0:T(8,128)}', space=vmem, size = 0x8000, scoped, tag = 'scratch operand']
  #allocation4 [shape = 'f32[4,16,1]{2,1,0:T(8,128)}', space=vmem, size = 0x8000, scoped, tag = 'scratch operand']
  #allocation5 [shape = 'f32[4,16,32]{2,1,0:T(8,128)}', space=vmem, size = 0x8000, scoped, tag = 'scratch operand']
  %s0 = inlined_call_operand.hbm [shape: f32[2,32,128], index: 0, kind: input, shape index: {}]
  %s1 = inlined_call_operand.hbm [shape: f32[2,64,128], index: 1, kind: input, shape index: {}]
  %s2 = inlined_call_operand.vmem [shape: f32[1,128], index: 2, kind: input, shape index: {}]
  %s3 = inlined_call_operand.vmem [shape: f32[1,128], index: 3, kind: input, shape index: {}]
  %s4 = inlined_call_operand.vmem [shape: f32[1,128], index: 4, kind: input, shape index: {}]
  %s5 = inlined_call_operand.vmem [shape: f32[1,128], index: 5, kind: input, shape index: {}]
  %s6 = inlined_call_operand.hbm [shape: bf16[128,128], index: 6, kind: input, shape index: {}]
  %s7 = inlined_call_operand.vmem [shape: f32[1,128], index: 7, kind: input, shape index: {}]
  %s8 = inlined_call_operand.hbm [shape: bf16[128,128], index: 8, kind: input, shape index: {}]
  %s9 = inlined_call_operand.vmem [shape: f32[1,128], index: 9, kind: input, shape index: {}]
  %s10 = inlined_call_operand.hbm [shape: bf16[128,128], index: 10, kind: input, shape index: {}]
  %s11 = inlined_call_operand.vmem [shape: f32[1,128], index: 11, kind: input, shape index: {}]
  %s12 = inlined_call_operand.hbm [shape: bf16[128,128], index: 12, kind: input, shape index: {}]
  %s13 = inlined_call_operand.vmem [shape: f32[1,128], index: 13, kind: input, shape index: {}]
  %s14 = inlined_call_operand.hbm [shape: f32[2,32,128], index: 14, kind: output, shape index: {}]
  %s15 = sld [smem:[#allocation0]]
  $region121: #{tpu_custom_call.1} parent=0
    _
  %s17 = ssub.s32 1, %s15
  %s18 = scalar_select 0, %s17, %s15
  $region1: #{tpu_custom_call.1} parent=0
    #allocation6 [shape = 'u8[16384]{0}', space=vmem, size = 0x4000, scoped, tag = 'input window, operand 0']
    #allocation7 [shape = 's32[2]{0}', space=sflag, size = 0x8, scoped, tag = 'scoped memory for tpu_custom_call.1']
    #allocation8 [shape = 's32[2]{0}', space=sflag, size = 0x8, scoped, tag = 'scoped memory for tpu_custom_call.1']
    #allocation9 [shape = 'u8[32768]{0}', space=vmem, size = 0x8000, scoped, tag = 'input window, operand 1']
    #allocation10 [shape = 's32[2]{0}', space=sflag, size = 0x8, scoped, tag = 'scoped memory for tpu_custom_call.1']
    #allocation11 [shape = 'u8[32768]{0}', space=vmem, size = 0x8000, scoped, tag = 'input window, operand 6, single buffered']
    #allocation12 [shape = 'u8[32768]{0}', space=vmem, size = 0x8000, scoped, tag = 'input window, operand 8, single buffered']
    #allocation13 [shape = 's32[1]{0}', space=sflag, size = 0x4, scoped, tag = 'scoped memory for tpu_custom_call.1']
    #allocation14 [shape = 'u8[32768]{0}', space=vmem, size = 0x8000, scoped, tag = 'input window, operand 10, single buffered']
    #allocation15 [shape = 'u8[32768]{0}', space=vmem, size = 0x8000, scoped, tag = 'input window, operand 12, single buffered']
    #allocation16 [shape = 's32[1]{0}', space=sflag, size = 0x4, scoped, tag = 'scoped memory for tpu_custom_call.1']
    #allocation17 [shape = 'u8[16384]{0}', space=vmem, size = 0x4000, scoped, tag = 'output window, operand 0']
    %19 = vsyncpa [#allocation7], 0
    %s20 = scalar_lea.sflag [#allocation7], 1
    %21 = vsyncpa %s20, 0
    %22 = vsyncpa [#allocation10], 0
    %s23 = scalar_lea.sflag [#allocation10], 1
    %24 = vsyncpa %s23, 0
    %25 = vsyncpa [#allocation13], 0
    %26 = vsyncpa [#allocation16], 0
    %27 = vsyncpa [#allocation8], 0
    %s28 = scalar_lea.sflag [#allocation8], 1
    %29 = vsyncpa %s28, 0
    loop: start=0, step=1, limit=10
    $region2: #{tpu_custom_call.1} parent=1 // loop_pre_header
      _
    $region3: #{tpu_custom_call.1} parent=1 // loop_header
      %s31 = sphi 0, %s35
      %p32 = scmp.ge.s32.totalorder %s31, 10
      %s38 = sphi 0, %s57
      %s39 = sphi 0, %s53
      %s40 = sphi 0, %s49
      %s41 = sphi 0, %s38
      %s42 = sphi 0, %s39
      %s43 = sphi 0, %s40
      %s44 = sphi 0, %s41
      %s45 = sphi 0, %s42
      %s46 = sphi 0, %s43
      %s62 = sphi 0, %s64
      %s65 = sphi 0, %s62
      %s66 = sphi 0, %s65
      %s82 = sphi 0, %s66
      %s90 = sphi 0, %s92
      %s93 = sphi 0, %s90
      %s94 = sphi 0, %s93
      %s110 = sphi 0, %s94
      %s114 = sphi 0, %s114
      %s116 = sphi 0, %s114
      %s117 = sphi 0, %s116
      %s131 = sphi 0, %s117
      %s135 = sphi 0, %s135
      %s137 = sphi 0, %s135
      %s138 = sphi 0, %s137
      %s152 = sphi 0, %s138
      %s156 = sphi 0, %s156
      %s158 = sphi 0, %s156
      %s159 = sphi 0, %s158
      %s173 = sphi 0, %s159
      %s177 = sphi 0, %s177
      %s179 = sphi 0, %s177
      %s180 = sphi 0, %s179
      %s194 = sphi 0, %s180
      %s198 = sphi 0, %s198
      %s200 = sphi 0, %s198
      %s201 = sphi 0, %s200
      %s215 = sphi 0, %s201
      %s219 = sphi 0, %s219
      %s221 = sphi 0, %s219
      %s222 = sphi 0, %s221
      %s236 = sphi 0, %s222
      %s240 = sphi 0, %s240
      %s242 = sphi 0, %s240
      %s243 = sphi 0, %s242
      %s257 = sphi 0, %s243
      %s261 = sphi 0, %s261
      %s263 = sphi 0, %s261
      %s264 = sphi 0, %s263
      %s278 = sphi 0, %s264
      %s282 = sphi 0, %s282
      %s284 = sphi 0, %s282
      %s285 = sphi 0, %s284
      %s299 = sphi 0, %s285
      %s303 = sphi 0, %s303
      %s305 = sphi 0, %s303
      %s306 = sphi 0, %s305
      %s320 = sphi 0, %s306
      %s324 = sphi 0, %s324
      %s326 = sphi 0, %s324
      %s327 = sphi 0, %s326
      %s341 = sphi 0, %s327
      %s345 = sphi 0, %s345
      %s347 = sphi 0, %s345
      %s348 = sphi 0, %s347
      %s362 = sphi 0, %s348
      %s370 = sphi 0, %s372
      %s373 = sphi 0, %s370
      %s374 = sphi 0, %s373
      %s390 = sphi 0, %s374
    $region4: #{tpu_custom_call.1} parent=1 // loop_header_branch
      %34 = sbr.rel (%p32) target = $region8
    $region5: #{tpu_custom_call.1} parent=1 // loop_body
      %s36 = ssub.s32 %s31, 1
      %s37 = ssub.s32 %s31, 2
      %s47 = sadd.s32 1, %s40
      %p48 = scmp.ge.s32.totalorder %s47, 2
      %s49 = scalar_select %p48, 0, %s47
      %s50 = sadd.s32 1, %s39
      %s51 = scalar_select %p48, %s50, %s39
      %p52 = scmp.ge.s32.totalorder %s51, 2
      %s53 = scalar_select %p52, 0, %s51
      %s54 = sadd.s32 1, %s38
      %s55 = scalar_select %p52, %s54, %s38
      %p56 = scmp.ge.s32.totalorder %s55, 2
      %s57 = scalar_select %p56, 0, %s55
      %s58 = ssub.s32 %s38, %s57
      %s59 = ssub.s32 %s39, %s53
      %s60 = sor.u32 %s58, %s59
      %p61 = scmp.eq.s32.totalorder %s60, 0
      %s63 = sadd.s32 %s62, 1
      %s64 = scalar_select %p61, %s62, %s63
      %p67 = pneg %p61
      %p68 = scmp.eq.s32.totalorder %s31, 7
      %p69 = por %p67, %p68
      %p70 = scmp.ne.s32.totalorder %s62, %s65
      %p71 = scmp.eq.s32.totalorder %s31, 0
      %p72 = por %p70, %p71
      %p73 = scmp.ne.s32.totalorder %s62, %s65
      %p74 = scmp.eq.s32.totalorder %s36, 7
      %p75 = por %p73, %p74
      %p76 = scmp.ne.s32.totalorder %s65, %s66
      %p77 = scmp.eq.s32.totalorder %s36, 0
      %p78 = por %p76, %p77
      %p79 = scmp.ne.s32.totalorder %s65, %s66
      %p80 = scmp.eq.s32.totalorder %s37, 7
      %p81 = por %p79, %p80
      %p83 = scmp.ne.s32.totalorder %s66, %s82
      %p84 = scmp.eq.s32.totalorder %s37, 0
      %p85 = por %p83, %p84
      %s86 = ssub.s32 %s38, %s57
      %s87 = ssub.s32 %s40, %s49
      %s88 = sor.u32 %s86, %s87
      %p89 = scmp.eq.s32.totalorder %s88, 0
      %s91 = sadd.s32 %s90, 1
      %s92 = scalar_select %p89, %s90, %s91
      %p95 = pneg %p89
      %p96 = scmp.eq.s32.totalorder %s31, 7
      %p97 = por %p95, %p96
      %p98 = scmp.ne.s32.totalorder %s90, %s93
      %p99 = scmp.eq.s32.totalorder %s31, 0
      %p100 = por %p98, %p99
      %p101 = scmp.ne.s32.totalorder %s90, %s93
      %p102 = scmp.eq.s32.totalorder %s36, 7
      %p103 = por %p101, %p102
      %p104 = scmp.ne.s32.totalorder %s93, %s94
      %p105 = scmp.eq.s32.totalorder %s36, 0
      %p106 = por %p104, %p105
      %p107 = scmp.ne.s32.totalorder %s93, %s94
      %p108 = scmp.eq.s32.totalorder %s37, 7
      %p109 = por %p107, %p108
      %p111 = scmp.ne.s32.totalorder %s94, %s110
      %p112 = scmp.eq.s32.totalorder %s37, 0
      %p113 = por %p111, %p112
      %s115 = sadd.s32 %s114, 1
      %p118 = scmp.eq.s32.totalorder %s31, 7
      %p119 = scmp.ne.s32.totalorder %s114, %s116
      %p120 = scmp.eq.s32.totalorder %s31, 0
      %p121 = por %p119, %p120
      %p122 = scmp.ne.s32.totalorder %s114, %s116
      %p123 = scmp.eq.s32.totalorder %s36, 7
      %p124 = por %p122, %p123
      %p125 = scmp.ne.s32.totalorder %s116, %s117
      %p126 = scmp.eq.s32.totalorder %s36, 0
      %p127 = por %p125, %p126
      %p128 = scmp.ne.s32.totalorder %s116, %s117
      %p129 = scmp.eq.s32.totalorder %s37, 7
      %p130 = por %p128, %p129
      %p132 = scmp.ne.s32.totalorder %s117, %s131
      %p133 = scmp.eq.s32.totalorder %s37, 0
      %p134 = por %p132, %p133
      %s136 = sadd.s32 %s135, 1
      %p139 = scmp.eq.s32.totalorder %s31, 7
      %p140 = scmp.ne.s32.totalorder %s135, %s137
      %p141 = scmp.eq.s32.totalorder %s31, 0
      %p142 = por %p140, %p141
      %p143 = scmp.ne.s32.totalorder %s135, %s137
      %p144 = scmp.eq.s32.totalorder %s36, 7
      %p145 = por %p143, %p144
      %p146 = scmp.ne.s32.totalorder %s137, %s138
      %p147 = scmp.eq.s32.totalorder %s36, 0
      %p148 = por %p146, %p147
      %p149 = scmp.ne.s32.totalorder %s137, %s138
      %p150 = scmp.eq.s32.totalorder %s37, 7
      %p151 = por %p149, %p150
      %p153 = scmp.ne.s32.totalorder %s138, %s152
      %p154 = scmp.eq.s32.totalorder %s37, 0
      %p155 = por %p153, %p154
      %s157 = sadd.s32 %s156, 1
      %p160 = scmp.eq.s32.totalorder %s31, 7
      %p161 = scmp.ne.s32.totalorder %s156, %s158
      %p162 = scmp.eq.s32.totalorder %s31, 0
      %p163 = por %p161, %p162
      %p164 = scmp.ne.s32.totalorder %s156, %s158
      %p165 = scmp.eq.s32.totalorder %s36, 7
      %p166 = por %p164, %p165
      %p167 = scmp.ne.s32.totalorder %s158, %s159
      %p168 = scmp.eq.s32.totalorder %s36, 0
      %p169 = por %p167, %p168
      %p170 = scmp.ne.s32.totalorder %s158, %s159
      %p171 = scmp.eq.s32.totalorder %s37, 7
      %p172 = por %p170, %p171
      %p174 = scmp.ne.s32.totalorder %s159, %s173
      %p175 = scmp.eq.s32.totalorder %s37, 0
      %p176 = por %p174, %p175
      %s178 = sadd.s32 %s177, 1
      %p181 = scmp.eq.s32.totalorder %s31, 7
      %p182 = scmp.ne.s32.totalorder %s177, %s179
      %p183 = scmp.eq.s32.totalorder %s31, 0
      %p184 = por %p182, %p183
      %p185 = scmp.ne.s32.totalorder %s177, %s179
      %p186 = scmp.eq.s32.totalorder %s36, 7
      %p187 = por %p185, %p186
      %p188 = scmp.ne.s32.totalorder %s179, %s180
      %p189 = scmp.eq.s32.totalorder %s36, 0
      %p190 = por %p188, %p189
      %p191 = scmp.ne.s32.totalorder %s179, %s180
      %p192 = scmp.eq.s32.totalorder %s37, 7
      %p193 = por %p191, %p192
      %p195 = scmp.ne.s32.totalorder %s180, %s194
      %p196 = scmp.eq.s32.totalorder %s37, 0
      %p197 = por %p195, %p196
      %s199 = sadd.s32 %s198, 1
      %p202 = scmp.eq.s32.totalorder %s31, 7
      %p203 = scmp.ne.s32.totalorder %s198, %s200
      %p204 = scmp.eq.s32.totalorder %s31, 0
      %p205 = por %p203, %p204
      %p206 = scmp.ne.s32.totalorder %s198, %s200
      %p207 = scmp.eq.s32.totalorder %s36, 7
      %p208 = por %p206, %p207
      %p209 = scmp.ne.s32.totalorder %s200, %s201
      %p210 = scmp.eq.s32.totalorder %s36, 0
      %p211 = por %p209, %p210
      %p212 = scmp.ne.s32.totalorder %s200, %s201
      %p213 = scmp.eq.s32.totalorder %s37, 7
      %p214 = por %p212, %p213
      %p216 = scmp.ne.s32.totalorder %s201, %s215
      %p217 = scmp.eq.s32.totalorder %s37, 0
      %p218 = por %p216, %p217
      %s220 = sadd.s32 %s219, 1
      %p223 = scmp.eq.s32.totalorder %s31, 7
      %p224 = scmp.ne.s32.totalorder %s219, %s221
      %p225 = scmp.eq.s32.totalorder %s31, 0
      %p226 = por %p224, %p225
      %p227 = scmp.ne.s32.totalorder %s219, %s221
      %p228 = scmp.eq.s32.totalorder %s36, 7
      %p229 = por %p227, %p228
      %p230 = scmp.ne.s32.totalorder %s221, %s222
      %p231 = scmp.eq.s32.totalorder %s36, 0
      %p232 = por %p230, %p231
      %p233 = scmp.ne.s32.totalorder %s221, %s222
      %p234 = scmp.eq.s32.totalorder %s37, 7
      %p235 = por %p233, %p234
      %p237 = scmp.ne.s32.totalorder %s222, %s236
      %p238 = scmp.eq.s32.totalorder %s37, 0
      %p239 = por %p237, %p238
      %s241 = sadd.s32 %s240, 1
      %p244 = scmp.eq.s32.totalorder %s31, 7
      %p245 = scmp.ne.s32.totalorder %s240, %s242
      %p246 = scmp.eq.s32.totalorder %s31, 0
      %p247 = por %p245, %p246
      %p248 = scmp.ne.s32.totalorder %s240, %s242
      %p249 = scmp.eq.s32.totalorder %s36, 7
      %p250 = por %p248, %p249
      %p251 = scmp.ne.s32.totalorder %s242, %s243
      %p252 = scmp.eq.s32.totalorder %s36, 0
      %p253 = por %p251, %p252
      %p254 = scmp.ne.s32.totalorder %s242, %s243
      %p255 = scmp.eq.s32.totalorder %s37, 7
      %p256 = por %p254, %p255
      %p258 = scmp.ne.s32.totalorder %s243, %s257
      %p259 = scmp.eq.s32.totalorder %s37, 0
      %p260 = por %p258, %p259
      %s262 = sadd.s32 %s261, 1
      %p265 = scmp.eq.s32.totalorder %s31, 7
      %p266 = scmp.ne.s32.totalorder %s261, %s263
      %p267 = scmp.eq.s32.totalorder %s31, 0
      %p268 = por %p266, %p267
      %p269 = scmp.ne.s32.totalorder %s261, %s263
      %p270 = scmp.eq.s32.totalorder %s36, 7
      %p271 = por %p269, %p270
      %p272 = scmp.ne.s32.totalorder %s263, %s264
      %p273 = scmp.eq.s32.totalorder %s36, 0
      %p274 = por %p272, %p273
      %p275 = scmp.ne.s32.totalorder %s263, %s264
      %p276 = scmp.eq.s32.totalorder %s37, 7
      %p277 = por %p275, %p276
      %p279 = scmp.ne.s32.totalorder %s264, %s278
      %p280 = scmp.eq.s32.totalorder %s37, 0
      %p281 = por %p279, %p280
      %s283 = sadd.s32 %s282, 1
      %p286 = scmp.eq.s32.totalorder %s31, 7
      %p287 = scmp.ne.s32.totalorder %s282, %s284
      %p288 = scmp.eq.s32.totalorder %s31, 0
      %p289 = por %p287, %p288
      %p290 = scmp.ne.s32.totalorder %s282, %s284
      %p291 = scmp.eq.s32.totalorder %s36, 7
      %p292 = por %p290, %p291
      %p293 = scmp.ne.s32.totalorder %s284, %s285
      %p294 = scmp.eq.s32.totalorder %s36, 0
      %p295 = por %p293, %p294
      %p296 = scmp.ne.s32.totalorder %s284, %s285
      %p297 = scmp.eq.s32.totalorder %s37, 7
      %p298 = por %p296, %p297
      %p300 = scmp.ne.s32.totalorder %s285, %s299
      %p301 = scmp.eq.s32.totalorder %s37, 0
      %p302 = por %p300, %p301
      %s304 = sadd.s32 %s303, 1
      %p307 = scmp.eq.s32.totalorder %s31, 7
      %p308 = scmp.ne.s32.totalorder %s303, %s305
      %p309 = scmp.eq.s32.totalorder %s31, 0
      %p310 = por %p308, %p309
      %p311 = scmp.ne.s32.totalorder %s303, %s305
      %p312 = scmp.eq.s32.totalorder %s36, 7
      %p313 = por %p311, %p312
      %p314 = scmp.ne.s32.totalorder %s305, %s306
      %p315 = scmp.eq.s32.totalorder %s36, 0
      %p316 = por %p314, %p315
      %p317 = scmp.ne.s32.totalorder %s305, %s306
      %p318 = scmp.eq.s32.totalorder %s37, 7
      %p319 = por %p317, %p318
      %p321 = scmp.ne.s32.totalorder %s306, %s320
      %p322 = scmp.eq.s32.totalorder %s37, 0
      %p323 = por %p321, %p322
      %s325 = sadd.s32 %s324, 1
      %p328 = scmp.eq.s32.totalorder %s31, 7
      %p329 = scmp.ne.s32.totalorder %s324, %s326
      %p330 = scmp.eq.s32.totalorder %s31, 0
      %p331 = por %p329, %p330
      %p332 = scmp.ne.s32.totalorder %s324, %s326
      %p333 = scmp.eq.s32.totalorder %s36, 7
      %p334 = por %p332, %p333
      %p335 = scmp.ne.s32.totalorder %s326, %s327
      %p336 = scmp.eq.s32.totalorder %s36, 0
      %p337 = por %p335, %p336
      %p338 = scmp.ne.s32.totalorder %s326, %s327
      %p339 = scmp.eq.s32.totalorder %s37, 7
      %p340 = por %p338, %p339
      %p342 = scmp.ne.s32.totalorder %s327, %s341
      %p343 = scmp.eq.s32.totalorder %s37, 0
      %p344 = por %p342, %p343
      %s346 = sadd.s32 %s345, 1
      %p349 = scmp.eq.s32.totalorder %s31, 7
      %p350 = scmp.ne.s32.totalorder %s345, %s347
      %p351 = scmp.eq.s32.totalorder %s31, 0
      %p352 = por %p350, %p351
      %p353 = scmp.ne.s32.totalorder %s345, %s347
      %p354 = scmp.eq.s32.totalorder %s36, 7
      %p355 = por %p353, %p354
      %p356 = scmp.ne.s32.totalorder %s347, %s348
      %p357 = scmp.eq.s32.totalorder %s36, 0
      %p358 = por %p356, %p357
      %p359 = scmp.ne.s32.totalorder %s347, %s348
      %p360 = scmp.eq.s32.totalorder %s37, 7
      %p361 = por %p359, %p360
      %p363 = scmp.ne.s32.totalorder %s348, %s362
      %p364 = scmp.eq.s32.totalorder %s37, 0
      %p365 = por %p363, %p364
      %s366 = ssub.s32 %s38, %s57
      %s367 = ssub.s32 %s39, %s53
      %s368 = sor.u32 %s366, %s367
      %p369 = scmp.eq.s32.totalorder %s368, 0
      %s371 = sadd.s32 %s370, 1
      %s372 = scalar_select %p369, %s370, %s371
      %p375 = pneg %p369
      %p376 = scmp.eq.s32.totalorder %s31, 7
      %p377 = por %p375, %p376
      %p378 = scmp.ne.s32.totalorder %s370, %s373
      %p379 = scmp.eq.s32.totalorder %s31, 0
      %p380 = por %p378, %p379
      %p381 = scmp.ne.s32.totalorder %s370, %s373
      %p382 = scmp.eq.s32.totalorder %s36, 7
      %p383 = por %p381, %p382
      %p384 = scmp.ne.s32.totalorder %s373, %s374
      %p385 = scmp.eq.s32.totalorder %s36, 0
      %p386 = por %p384, %p385
      %p387 = scmp.ne.s32.totalorder %s373, %s374
      %p388 = scmp.eq.s32.totalorder %s37, 7
      %p389 = por %p387, %p388
      %p391 = scmp.ne.s32.totalorder %s374, %s390
      %p392 = scmp.eq.s32.totalorder %s37, 0
      %p393 = por %p391, %p392
      %p394 = scmp.le.s32.totalorder 1, %s31
      %p395 = scmp.lt.s32.totalorder %s31, 9
      %p396 = pnand %p394, %p395
      %p397 = pneg %p396
      // Predicated region
      $region9: #{tpu_custom_call.1} parent=5 // pred_check
        _
      $region10: #{tpu_custom_call.1} parent=5 // pred_check_branch
        %399 = sbr.rel (%p396) target = $region12
      $region11: #{tpu_custom_call.1} parent=5 // pred_region
        %s400 = ssub.s32 %s31, 1
        // Predicated region
        $region13: #{tpu_custom_call.1} parent=11 // pred_check
          %p401 = pneg %p127
        $region14: #{tpu_custom_call.1} parent=11 // pred_check_branch
          %403 = sbr.rel (%p401) target = $region16
        $region15: #{tpu_custom_call.1} parent=11 // pred_region
          _
        $region16: #{tpu_custom_call.1} parent=11 // pred_fallthru
          _
        // Predicated region
        $region17: #{tpu_custom_call.1} parent=11 // pred_check
          %p404 = pneg %p148
        $region18: #{tpu_custom_call.1} parent=11 // pred_check_branch
          %406 = sbr.rel (%p404) target = $region20
        $region19: #{tpu_custom_call.1} parent=11 // pred_region
          _
        $region20: #{tpu_custom_call.1} parent=11 // pred_fallthru
          _
        // Predicated region
        $region21: #{tpu_custom_call.1} parent=11 // pred_check
          %p407 = pneg %p169
        $region22: #{tpu_custom_call.1} parent=11 // pred_check_branch
          %409 = sbr.rel (%p407) target = $region24
        $region23: #{tpu_custom_call.1} parent=11 // pred_region
          _
        $region24: #{tpu_custom_call.1} parent=11 // pred_fallthru
          _
        // Predicated region
        $region25: #{tpu_custom_call.1} parent=11 // pred_check
          %p410 = pneg %p190
        $region26: #{tpu_custom_call.1} parent=11 // pred_check_branch
          %412 = sbr.rel (%p410) target = $region28
        $region27: #{tpu_custom_call.1} parent=11 // pred_region
          _
        $region28: #{tpu_custom_call.1} parent=11 // pred_fallthru
          _
        // Predicated region
        $region29: #{tpu_custom_call.1} parent=11 // pred_check
          %p413 = pneg %p211
        $region30: #{tpu_custom_call.1} parent=11 // pred_check_branch
          %415 = sbr.rel (%p413) target = $region32
        $region31: #{tpu_custom_call.1} parent=11 // pred_region
          %417 = vsyncadd [#allocation10], 0
          %s418 = sshll.u32 %s6, 4
          %s419 = int_to_ptr.hbm [resolvable:$true] %s418
          %s420 = sshll.u32 [#allocation11], 4
          %s421 = int_to_ptr.vmem [resolvable:$true] %s420
          %426 = dma.hbm_to_vmem [thread:$0]  %s419, 1024, %s421, [#allocation10], 64, 64, 4
        $region32: #{tpu_custom_call.1} parent=11 // pred_fallthru
          _
        // Predicated region
        $region33: #{tpu_custom_call.1} parent=11 // pred_check
          %p427 = pneg %p232
        $region34: #{tpu_custom_call.1} parent=11 // pred_check_branch
          %429 = sbr.rel (%p427) target = $region36
        $region35: #{tpu_custom_call.1} parent=11 // pred_region
          _
        $region36: #{tpu_custom_call.1} parent=11 // pred_fallthru
          _
        // Predicated region
        $region37: #{tpu_custom_call.1} parent=11 // pred_check
          %p430 = pneg %p253
        $region38: #{tpu_custom_call.1} parent=11 // pred_check_branch
          %432 = sbr.rel (%p430) target = $region40
        $region39: #{tpu_custom_call.1} parent=11 // pred_region
          %434 = vsyncadd [#allocation13], 0
          %s435 = sshll.u32 %s8, 4
          %s436 = int_to_ptr.hbm [resolvable:$true] %s435
          %s437 = sshll.u32 [#allocation12], 4
          %s438 = int_to_ptr.vmem [resolvable:$true] %s437
          %443 = dma.hbm_to_vmem [thread:$0]  %s436, 1024, %s438, [#allocation13], 64, 64, 4
        $region40: #{tpu_custom_call.1} parent=11 // pred_fallthru
          _
        // Predicated region
        $region41: #{tpu_custom_call.1} parent=11 // pred_check
          %p444 = pneg %p274
        $region42: #{tpu_custom_call.1} parent=11 // pred_check_branch
          %446 = sbr.rel (%p444) target = $region44
        $region43: #{tpu_custom_call.1} parent=11 // pred_region
          _
        $region44: #{tpu_custom_call.1} parent=11 // pred_fallthru
          _
        // Predicated region
        $region45: #{tpu_custom_call.1} parent=11 // pred_check
          %p447 = pneg %p295
        $region46: #{tpu_custom_call.1} parent=11 // pred_check_branch
          %449 = sbr.rel (%p447) target = $region48
        $region47: #{tpu_custom_call.1} parent=11 // pred_region
          %451 = vsyncadd [#allocation13], 0
          %s452 = sshll.u32 %s10, 4
          %s453 = int_to_ptr.hbm [resolvable:$true] %s452
          %s454 = sshll.u32 [#allocation14], 4
          %s455 = int_to_ptr.vmem [resolvable:$true] %s454
          %460 = dma.hbm_to_vmem [thread:$0]  %s453, 1024, %s455, [#allocation13], 64, 64, 4
        $region48: #{tpu_custom_call.1} parent=11 // pred_fallthru
          _
        // Predicated region
        $region49: #{tpu_custom_call.1} parent=11 // pred_check
          %p461 = pneg %p316
        $region50: #{tpu_custom_call.1} parent=11 // pred_check_branch
          %463 = sbr.rel (%p461) target = $region52
        $region51: #{tpu_custom_call.1} parent=11 // pred_region
          _
        $region52: #{tpu_custom_call.1} parent=11 // pred_fallthru
          _
        // Predicated region
        $region53: #{tpu_custom_call.1} parent=11 // pred_check
          %p464 = pneg %p337
        $region54: #{tpu_custom_call.1} parent=11 // pred_check_branch
          %466 = sbr.rel (%p464) target = $region56
        $region55: #{tpu_custom_call.1} parent=11 // pred_region
          %468 = vsyncadd [#allocation16], 0
          %s469 = sshll.u32 %s12, 4
          %s470 = int_to_ptr.hbm [resolvable:$true] %s469
          %s471 = sshll.u32 [#allocation15], 4
          %s472 = int_to_ptr.vmem [resolvable:$true] %s471
          %477 = dma.hbm_to_vmem [thread:$0]  %s470, 1024, %s472, [#allocation16], 64, 64, 4
        $region56: #{tpu_custom_call.1} parent=11 // pred_fallthru
          _
        // Predicated region
        $region57: #{tpu_custom_call.1} parent=11 // pred_check
          %p478 = pneg %p358
        $region58: #{tpu_custom_call.1} parent=11 // pred_check_branch
          %480 = sbr.rel (%p478) target = $region60
        $region59: #{tpu_custom_call.1} parent=11 // pred_region
          _
        $region60: #{tpu_custom_call.1} parent=11 // pred_fallthru
          _
      $region12: #{tpu_custom_call.1} parent=5 // pred_fallthru
        _
      %p481 = scmp.lt.s32.totalorder %s31, 8
      // Predicated region
      $region61: #{tpu_custom_call.1} parent=5 // pred_check
        %p482 = pneg %p481
      $region62: #{tpu_custom_call.1} parent=5 // pred_check_branch
        %484 = sbr.rel (%p482) target = $region64
      $region63: #{tpu_custom_call.1} parent=5 // pred_region
        // Predicated region
        $region65: #{tpu_custom_call.1} parent=63 // pred_check
          %p485 = pneg %p72
        $region66: #{tpu_custom_call.1} parent=63 // pred_check_branch
          %487 = sbr.rel (%p485) target = $region68
        $region67: #{tpu_custom_call.1} parent=63 // pred_region
          %s488 = sand.u32 %s62, 1
          %s489 = scalar_lea.sflag [#allocation7], %s488
          %s490 = sand.u32 %s62, 1
          %s491 = smul.addr %s490, 16
          %s492 = scalar_lea.vmem [#allocation6], %s491
          %s493 = smul.u32 2, %s39
          %495 = vsyncadd %s489, 0
          %s496 = smul.addr %s38, 4
          %s497 = sadd.s32 %s493, %s496
          %s498 = smul.addr %s497, 8
          %s499 = scalar_lea.hbm %s0, %s498
          %s500 = sshll.u32 %s499, 4
          %s501 = int_to_ptr.hbm [resolvable:$true] %s500
          %s502 = sshll.u32 %s492, 4
          %s503 = int_to_ptr.vmem [resolvable:$true] %s502
          %508 = dma.hbm_to_vmem [thread:$0]  %s501, 256, %s503, %s489, 128, 128, 8
        $region68: #{tpu_custom_call.1} parent=63 // pred_fallthru
          _
        // Predicated region
        $region69: #{tpu_custom_call.1} parent=63 // pred_check
          %p509 = pneg %p100
        $region70: #{tpu_custom_call.1} parent=63 // pred_check_branch
          %511 = sbr.rel (%p509) target = $region72
        $region71: #{tpu_custom_call.1} parent=63 // pred_region
          %s512 = sand.u32 %s31, 1
          %s513 = scalar_lea.sflag [#allocation10], %s512
          %s514 = sand.u32 %s90, 1
          %s515 = smul.addr %s514, 32
          %s516 = scalar_lea.vmem [#allocation9], %s515
          %s517 = smul.u32 4, %s40
          %519 = vsyncadd %s513, 0
          %s520 = smul.addr %s38, 8
          %s521 = sadd.s32 %s517, %s520
          %s522 = smul.addr %s521, 8
          %s523 = scalar_lea.hbm %s1, %s522
          %s524 = sshll.u32 %s523, 4
          %s525 = int_to_ptr.hbm [resolvable:$true] %s524
          %s526 = sshll.u32 %s516, 4
          %s527 = int_to_ptr.vmem [resolvable:$true] %s526
          %532 = dma.hbm_to_vmem [thread:$0]  %s525, 512, %s527, %s513, 128, 128, 8
        $region72: #{tpu_custom_call.1} parent=63 // pred_fallthru
          _
      $region64: #{tpu_custom_call.1} parent=5 // pred_fallthru
        _
      %p533 = scmp.le.s32.totalorder 1, %s31
      %p534 = scmp.lt.s32.totalorder %s31, 9
      %p535 = pnand %p533, %p534
      %p536 = pneg %p535
      // Predicated region
      $region73: #{tpu_custom_call.1} parent=5 // pred_check
        _
      $region74: #{tpu_custom_call.1} parent=5 // pred_check_branch
        %538 = sbr.rel (%p535) target = $region76
      $region75: #{tpu_custom_call.1} parent=5 // pred_region
        %s539 = ssub.s32 %s31, 1
        %s540 = sand.u32 %s65, 1
        %s541 = scalar_lea.sflag [#allocation7], %s540
        %s542 = sand.u32 %s65, 1
        %s543 = smul.addr %s542, 16
        %s544 = scalar_lea.vmem [#allocation6], %s543
        // Predicated region
        $region77: #{tpu_custom_call.1} parent=75 // pred_check
          %p545 = pneg %p78
        $region78: #{tpu_custom_call.1} parent=75 // pred_check_branch
          %547 = sbr.rel (%p545) target = $region80
        $region79: #{tpu_custom_call.1} parent=75 // pred_region
          %549 = dma.done %s541, 256
        $region80: #{tpu_custom_call.1} parent=75 // pred_fallthru
          _
        %s550 = sand.u32 %s36, 1
        %s551 = scalar_lea.sflag [#allocation10], %s550
        %s552 = sand.u32 %s93, 1
        %s553 = smul.addr %s552, 32
        %s554 = scalar_lea.vmem [#allocation9], %s553
        // Predicated region
        $region81: #{tpu_custom_call.1} parent=75 // pred_check
          %p555 = pneg %p106
        $region82: #{tpu_custom_call.1} parent=75 // pred_check_branch
          %557 = sbr.rel (%p555) target = $region84
        $region83: #{tpu_custom_call.1} parent=75 // pred_region
          %559 = dma.done %s551, 512
        $region84: #{tpu_custom_call.1} parent=75 // pred_fallthru
          _
        // Predicated region
        $region85: #{tpu_custom_call.1} parent=75 // pred_check
          %p560 = pneg %p211
        $region86: #{tpu_custom_call.1} parent=75 // pred_check_branch
          %562 = sbr.rel (%p560) target = $region88
        $region87: #{tpu_custom_call.1} parent=75 // pred_region
          %564 = dma.done [#allocation10], 1024
        $region88: #{tpu_custom_call.1} parent=75 // pred_fallthru
          _
        // Predicated region
        $region89: #{tpu_custom_call.1} parent=75 // pred_check
          %p565 = pneg %p253
        $region90: #{tpu_custom_call.1} parent=75 // pred_check_branch
          %567 = sbr.rel (%p565) target = $region92
        $region91: #{tpu_custom_call.1} parent=75 // pred_region
          %569 = dma.done [#allocation13], 1024
        $region92: #{tpu_custom_call.1} parent=75 // pred_fallthru
          _
        // Predicated region
        $region93: #{tpu_custom_call.1} parent=75 // pred_check
          %p570 = pneg %p295
        $region94: #{tpu_custom_call.1} parent=75 // pred_check_branch
          %572 = sbr.rel (%p570) target = $region96
        $region95: #{tpu_custom_call.1} parent=75 // pred_region
          %574 = dma.done [#allocation13], 1024
        $region96: #{tpu_custom_call.1} parent=75 // pred_fallthru
          _
        // Predicated region
        $region97: #{tpu_custom_call.1} parent=75 // pred_check
          %p575 = pneg %p337
        $region98: #{tpu_custom_call.1} parent=75 // pred_check_branch
          %577 = sbr.rel (%p575) target = $region100
        $region99: #{tpu_custom_call.1} parent=75 // pred_region
          %579 = dma.done [#allocation16], 1024
        $region100: #{tpu_custom_call.1} parent=75 // pred_fallthru
          _
        %s580 = sand.u32 %s65, 1
        %s581 = scalar_lea.sflag [#allocation7], %s580
        %s582 = sand.u32 %s65, 1
        %s583 = smul.addr %s582, 16
        %s584 = scalar_lea.vmem [#allocation6], %s583
        %p585 = pneg %p78
        %p586 = pneg %p75
        %s587 = sand.u32 %s36, 1
        %s588 = scalar_lea.sflag [#allocation10], %s587
        %s589 = sand.u32 %s93, 1
        %s590 = smul.addr %s589, 32
        %s591 = scalar_lea.vmem [#allocation9], %s590
        %p592 = pneg %p106
        %p593 = pneg %p103
        %p594 = pneg %p127
        %p595 = pneg %p124
        %p596 = pneg %p148
        %p597 = pneg %p145
        %p598 = pneg %p169
        %p599 = pneg %p166
        %p600 = pneg %p190
        %p601 = pneg %p187
        %p602 = pneg %p211
        %p603 = pneg %p208
        %p604 = pneg %p232
        %p605 = pneg %p229
        %p606 = pneg %p253
        %p607 = pneg %p250
        %p608 = pneg %p274
        %p609 = pneg %p271
        %p610 = pneg %p295
        %p611 = pneg %p292
        %p612 = pneg %p316
        %p613 = pneg %p313
        %p614 = pneg %p337
        %p615 = pneg %p334
        %p616 = pneg %p358
        %p617 = pneg %p355
        %p618 = pneg %p386
        %p619 = pneg %p383
        %s620 = sand.u32 %s373, 1
        %s621 = scalar_lea.sflag [#allocation8], %s620
        %s622 = sand.u32 %s373, 1
        %s623 = smul.addr %s622, 16
        %s624 = scalar_lea.vmem [#allocation17], %s623
        %s625 = smul.u32 2, %s42
        %s626 = smul.u32 4, %s43
        %s627 = smul.u32 2, %s42
        %p629 = scmp.eq.s32.totalorder %s43, 0
        // Predicated region
        $region101: #{tpu_custom_call.1} parent=75 // pred_check
          %p630 = pneg %p629
        $region102: #{tpu_custom_call.1} parent=75 // pred_check_branch
          %632 = sbr.rel (%p630) target = $region104
        $region103: #{tpu_custom_call.1} parent=75 // pred_region
          %v633 = vld [vmem:[%s544] sm:$0xff]
          %v634 = vld [vmem:[%s544 + $0x8] sm:$0xff]
          %v635 = vld [vmem:[%s2] sm:$0x1]
          %v636 = vld [vmem:[%s3] sm:$0x1]
          %637 = vadd.xlane.f32.xlu0 %v633
          %v638 = vpop.xlane.xlu0 %637
          %639 = vadd.xlane.f32.xlu0 %v634
          %v640 = vpop.xlane.xlu0 %639
          %v641 = vrcp.pop 128.0
          %v642 = vmul.f32 128.0, %v641
          %v643 = vsub.f32 1.0, %v642
          %v644 = vmul.f32 %v641, %v643
          %v645 = vadd.f32 %v641, %v644
          %vm646 = vweird.f32 %v641
          %v647 = vsel %vm646, %v641, %v645
          %v648 = vmul.f32 %v638, %v647
          %v649 = vmul.f32 %v640, %v647
          %v650 = vsub.f32 %v633, %v648
          %v651 = vsub.f32 %v634, %v649
          %v652 = vmul.f32 %v650, %v650
          %v653 = vmul.f32 %v651, %v651
          %654 = vadd.xlane.f32.xlu0 %v652
          %v655 = vpop.xlane.xlu0 %654
          %656 = vadd.xlane.f32.xlu0 %v653
          %v657 = vpop.xlane.xlu0 %656
          %v658 = vmul.f32 %v655, %v647
          %v659 = vmul.f32 %v657, %v647
          %v660 = vadd.f32 %v658, 1e-05
          %v661 = vadd.f32 %v659, 1e-05
          %v662 = vrsqrt.pop %v660
          %v663 = vmul.f32 %v662, %v660
          %v664 = vmul.f32 %v663, %v662
          %v665 = vmul.f32 0.5, %v664
          %v666 = vsub.f32 1.5, %v665
          %v667 = vmul.f32 %v662, %v666
          %vm668 = vweird.f32 %v660
          %vm669 = vweird.f32 %v662
          %vm670 = vmor %vm668, %vm669
          %v671 = vsel %vm670, %v662, %v667
          %v672 = vrsqrt.pop %v661
          %v673 = vmul.f32 %v672, %v661
          %v674 = vmul.f32 %v673, %v672
          %v675 = vmul.f32 0.5, %v674
          %v676 = vsub.f32 1.5, %v675
          %v677 = vmul.f32 %v672, %v676
          %vm678 = vweird.f32 %v661
          %vm679 = vweird.f32 %v672
          %vm680 = vmor %vm678, %vm679
          %v681 = vsel %vm680, %v672, %v677
          %v682 = vmul.f32 %v650, %v671
          %v683 = vmul.f32 %v651, %v681
          %v685 = vperm.slane %v635, 0
          %v687 = vmul.f32 %v682, %v685
          %v688 = vmul.f32 %v683, %v685
          %v690 = vperm.slane %v636, 0
          %v692 = vadd.f32 %v687, %v690
          %v693 = vadd.f32 %v688, %v690
          %v694 = vpack.c.bf16 %v693, %v692
          %v695 = vld [vmem:[#allocation11] sm:$0xf]
          %v696 = vld [vmem:[#allocation11 + $0x4] sm:$0xf]
          %v697 = vld [vmem:[#allocation11 + $0x8] sm:$0xf]
          %v698 = vld [vmem:[#allocation11 + $0xc] sm:$0xf]
          %v699 = vld [vmem:[#allocation11 + $0x10] sm:$0xf]
          %v700 = vld [vmem:[#allocation11 + $0x14] sm:$0xf]
          %v701 = vld [vmem:[#allocation11 + $0x18] sm:$0xf]
          %v702 = vld [vmem:[#allocation11 + $0x1c] sm:$0xf]
          %v703 = vld [vmem:[#allocation11 + $0x20] sm:$0xf]
          %v704 = vld [vmem:[#allocation11 + $0x24] sm:$0xf]
          %v705 = vld [vmem:[#allocation11 + $0x28] sm:$0xf]
          %v706 = vld [vmem:[#allocation11 + $0x2c] sm:$0xf]
          %v707 = vld [vmem:[#allocation11 + $0x30] sm:$0xf]
          %v708 = vld [vmem:[#allocation11 + $0x34] sm:$0xf]
          %v709 = vld [vmem:[#allocation11 + $0x38] sm:$0xf]
          %v710 = vld [vmem:[#allocation11 + $0x3c] sm:$0xf]
          %v711 = vld [vmem:[%s7] sm:$0x1]
          %v713 = vperm.slane %v711, 0
          %v731 = vunpack.c.l.b16 %v695
          %v732 = vunpack.c.l.b16 %v696
          %v733 = vunpack.c.l.b16 %v697
          %v734 = vunpack.c.l.b16 %v698
          %v735 = vunpack.c.l.b16 %v699
          %v736 = vunpack.c.l.b16 %v700
          %v737 = vunpack.c.l.b16 %v701
          %v738 = vunpack.c.l.b16 %v702
          %v739 = vunpack.c.l.b16 %v703
          %v740 = vunpack.c.l.b16 %v704
          %v741 = vunpack.c.l.b16 %v705
          %v742 = vunpack.c.l.b16 %v706
          %v743 = vunpack.c.l.b16 %v707
          %v744 = vunpack.c.l.b16 %v708
          %v745 = vunpack.c.l.b16 %v709
          %v746 = vunpack.c.l.b16 %v710
          %v747 = vpack.c.b16 %v732, %v731
          %v748 = vpack.c.b16 %v734, %v733
          %v749 = vpack.c.b16 %v736, %v735
          %v750 = vpack.c.b16 %v738, %v737
          %v751 = vpack.c.b16 %v740, %v739
          %v752 = vpack.c.b16 %v742, %v741
          %v753 = vpack.c.b16 %v744, %v743
          %v754 = vpack.c.b16 %v746, %v745
          %763 = vmatpush.bf16.msra.mxu0 %v754
          %764 = vmatpush.bf16.msra.mxu0 %v753
          %765 = vmatpush.bf16.msra.mxu0 %v752
          %766 = vmatpush.bf16.msra.mxu0 %v751
          %767 = vmatpush.bf16.msra.mxu0 %v750
          %768 = vmatpush.bf16.msra.mxu0 %v749
          %769 = vmatpush.bf16.msra.mxu0 %v748
          %770 = vmatpush.bf16.msra.mxu0 %v747
          %771 = vmatmul.bf16.gmra.mxu0 %v694
          %v772 = vpop.f32.mrf.mxu0
          %v773 = vadd.f32 %v713, %v772
          %v774 = vpop.f32.mrf.mxu0
          %v775 = vadd.f32 %v713, %v774
          %776 = vdwg.mxu0
          %v777 = vmul.f32 %v773, 0.17677669
          %v778 = vmul.f32 %v775, 0.17677669
          %781 = vrot.lane.b32.xlu0 %v777, 96
          %v782 = vpop.permute.xlu0 %781
          %783 = vrot.lane.b32.xlu0 %v778, 96
          %v784 = vpop.permute.xlu0 %783
          %787 = vrot.lane.b32.xlu0 %v777, 64
          %v788 = vpop.permute.xlu0 %787
          %789 = vrot.lane.b32.xlu0 %v778, 64
          %v790 = vpop.permute.xlu0 %789
          %793 = vrot.lane.b32.xlu0 %v777, 32
          %v794 = vpop.permute.xlu0 %793
          %795 = vrot.lane.b32.xlu0 %v778, 32
          %v796 = vpop.permute.xlu0 %795
          %v799 = vrot.slane %v788, 4
          %vm800 = vcmask 1047556
          %v801 = vsel %vm800, %v799, %v777
          %v802 = vrot.slane %v777, 4
          %v803 = vsel %vm800, %v788, %v802
          %v805 = vunpack.c.l.s4 1983009808
          %v806 = vunpack.c.0.s8 %v805
          %v807 = vperm.slane %v801, %v806
          %v809 = vunpack.c.l.s4 1983009808
          %v810 = vunpack.c.0.s8 %v809
          %v811 = vperm.slane %v803, %v810
          %v812 = vrot.slane %v794, 4
          %v813 = vsel %vm800, %v812, %v782
          %v814 = vrot.slane %v782, 4
          %v815 = vsel %vm800, %v794, %v814
          %v817 = vunpack.c.l.s4 1983009808
          %v818 = vunpack.c.0.s8 %v817
          %v819 = vperm.slane %v813, %v818
          %v821 = vunpack.c.l.s4 1983009808
          %v822 = vunpack.c.0.s8 %v821
          %v823 = vperm.slane %v815, %v822
          %v824 = vrot.slane %v819, 4
          %v825 = vsel %vm800, %v824, %v807
          %v826 = vrot.slane %v807, 4
          %v827 = vsel %vm800, %v819, %v826
          %v829 = vunpack.c.l.s4 1934713408
          %v830 = vunpack.c.0.s8 %v829
          %v831 = vperm.slane %v825, %v830
          %v833 = vunpack.c.l.s4 1934713408
          %v834 = vunpack.c.0.s8 %v833
          %v835 = vperm.slane %v827, %v834
          %v836 = vrot.slane %v823, 4
          %v837 = vsel %vm800, %v836, %v811
          %v838 = vrot.slane %v811, 4
          %v839 = vsel %vm800, %v823, %v838
          %v841 = vunpack.c.l.s4 1934713408
          %v842 = vunpack.c.0.s8 %v841
          %v843 = vperm.slane %v837, %v842
          %v845 = vunpack.c.l.s4 1934713408
          %v846 = vunpack.c.0.s8 %v845
          %v847 = vperm.slane %v839, %v846
          %v848 = vrot.slane %v831, 4
          %v849 = vsel %vm800, 0.0, %v848
          %v850 = vrot.slane %v835, 4
          %v851 = vsel %vm800, 0.0, %v850
          %v852 = vrot.slane %v843, 4
          %v853 = vsel %vm800, 0.0, %v852
          %v854 = vrot.slane %v847, 4
          %v855 = vsel %vm800, 0.0, %v854
          %v856 = vrot.slane %v790, 4
          %v857 = vsel %vm800, %v856, %v778
          %v858 = vrot.slane %v778, 4
          %v859 = vsel %vm800, %v790, %v858
          %v861 = vunpack.c.l.s4 1983009808
          %v862 = vunpack.c.0.s8 %v861
          %v863 = vperm.slane %v857, %v862
          %v865 = vunpack.c.l.s4 1983009808
          %v866 = vunpack.c.0.s8 %v865
          %v867 = vperm.slane %v859, %v866
          %v868 = vrot.slane %v796, 4
          %v869 = vsel %vm800, %v868, %v784
          %v870 = vrot.slane %v784, 4
          %v871 = vsel %vm800, %v796, %v870
          %v873 = vunpack.c.l.s4 1983009808
          %v874 = vunpack.c.0.s8 %v873
          %v875 = vperm.slane %v869, %v874
          %v877 = vunpack.c.l.s4 1983009808
          %v878 = vunpack.c.0.s8 %v877
          %v879 = vperm.slane %v871, %v878
          %v880 = vrot.slane %v875, 4
          %v881 = vsel %vm800, %v880, %v863
          %v882 = vrot.slane %v863, 4
          %v883 = vsel %vm800, %v875, %v882
          %v885 = vunpack.c.l.s4 1934713408
          %v886 = vunpack.c.0.s8 %v885
          %v887 = vperm.slane %v881, %v886
          %v889 = vunpack.c.l.s4 1934713408
          %v890 = vunpack.c.0.s8 %v889
          %v891 = vperm.slane %v883, %v890
          %v892 = vrot.slane %v879, 4
          %v893 = vsel %vm800, %v892, %v867
          %v894 = vrot.slane %v867, 4
          %v895 = vsel %vm800, %v879, %v894
          %v897 = vunpack.c.l.s4 1934713408
          %v898 = vunpack.c.0.s8 %v897
          %v899 = vperm.slane %v893, %v898
          %v901 = vunpack.c.l.s4 1934713408
          %v902 = vunpack.c.0.s8 %v901
          %v903 = vperm.slane %v895, %v902
          %v904 = vrot.slane %v887, 4
          %v905 = vsel %vm800, 0.0, %v904
          %v906 = vrot.slane %v891, 4
          %v907 = vsel %vm800, 0.0, %v906
          %v908 = vrot.slane %v899, 4
          %v909 = vsel %vm800, 0.0, %v908
          %v910 = vrot.slane %v903, 4
          %v911 = vsel %vm800, 0.0, %v910
          %v912 = vsel %vm800, %v850, %v831
          %v914 = vunpack.c.l.s4 1983009808
          %v915 = vunpack.c.0.s8 %v914
          %v916 = vperm.slane %v912, %v915
          %v917 = vrot.slane %v851, 4
          %v918 = vsel %vm800, %v917, %v849
          %v920 = vunpack.c.l.s4 1983009808
          %v921 = vunpack.c.0.s8 %v920
          %v922 = vperm.slane %v918, %v921
          %v923 = vsel %vm800, %v854, %v843
          %v925 = vunpack.c.l.s4 1983009808
          %v926 = vunpack.c.0.s8 %v925
          %v927 = vperm.slane %v923, %v926
          %v928 = vrot.slane %v855, 4
          %v929 = vsel %vm800, %v928, %v853
          %v931 = vunpack.c.l.s4 1983009808
          %v932 = vunpack.c.0.s8 %v931
          %v933 = vperm.slane %v929, %v932
          %v934 = vrot.slane %v922, 4
          %v935 = vsel %vm800, %v934, %v916
          %v936 = vrot.slane %v916, 4
          %v937 = vsel %vm800, %v922, %v936
          %v939 = vunpack.c.l.s4 1934713408
          %v940 = vunpack.c.0.s8 %v939
          %v941 = vperm.slane %v935, %v940
          %v943 = vunpack.c.l.s4 1934713408
          %v944 = vunpack.c.0.s8 %v943
          %v945 = vperm.slane %v937, %v944
          %v946 = vrot.slane %v933, 4
          %v947 = vsel %vm800, %v946, %v927
          %v948 = vrot.slane %v927, 4
          %v949 = vsel %vm800, %v933, %v948
          %v951 = vunpack.c.l.s4 1934713408
          %v952 = vunpack.c.0.s8 %v951
          %v953 = vperm.slane %v947, %v952
          %v955 = vunpack.c.l.s4 1934713408
          %v956 = vunpack.c.0.s8 %v955
          %v957 = vperm.slane %v949, %v956
          %v958 = vrot.slane %v953, 4
          %v959 = vsel %vm800, %v958, %v941
          %v960 = vrot.slane %v941, 4
          %v961 = vsel %vm800, %v953, %v960
          %v962 = vrot.slane %v957, 4
          %v963 = vsel %vm800, %v962, %v945
          %v964 = vrot.slane %v945, 4
          %v965 = vsel %vm800, %v957, %v964
          %v966 = vsel %vm800, %v906, %v887
          %v968 = vunpack.c.l.s4 1983009808
          %v969 = vunpack.c.0.s8 %v968
          %v970 = vperm.slane %v966, %v969
          %v971 = vrot.slane %v907, 4
          %v972 = vsel %vm800, %v971, %v905
          %v974 = vunpack.c.l.s4 1983009808
          %v975 = vunpack.c.0.s8 %v974
          %v976 = vperm.slane %v972, %v975
          %v977 = vsel %vm800, %v910, %v899
          %v979 = vunpack.c.l.s4 1983009808
          %v980 = vunpack.c.0.s8 %v979
          %v981 = vperm.slane %v977, %v980
          %v982 = vrot.slane %v911, 4
          %v983 = vsel %vm800, %v982, %v909
          %v985 = vunpack.c.l.s4 1983009808
          %v986 = vunpack.c.0.s8 %v985
          %v987 = vperm.slane %v983, %v986
          %v988 = vrot.slane %v976, 4
          %v989 = vsel %vm800, %v988, %v970
          %v990 = vrot.slane %v970, 4
          %v991 = vsel %vm800, %v976, %v990
          %v993 = vunpack.c.l.s4 1934713408
          %v994 = vunpack.c.0.s8 %v993
          %v995 = vperm.slane %v989, %v994
          %v997 = vunpack.c.l.s4 1934713408
          %v998 = vunpack.c.0.s8 %v997
          %v999 = vperm.slane %v991, %v998
          %v1000 = vrot.slane %v987, 4
          %v1001 = vsel %vm800, %v1000, %v981
          %v1002 = vrot.slane %v981, 4
          %v1003 = vsel %vm800, %v987, %v1002
          %v1005 = vunpack.c.l.s4 1934713408
          %v1006 = vunpack.c.0.s8 %v1005
          %v1007 = vperm.slane %v1001, %v1006
          %v1009 = vunpack.c.l.s4 1934713408
          %v1010 = vunpack.c.0.s8 %v1009
          %v1011 = vperm.slane %v1003, %v1010
          %v1012 = vrot.slane %v1007, 4
          %v1013 = vsel %vm800, %v1012, %v995
          %v1014 = vrot.slane %v995, 4
          %v1015 = vsel %vm800, %v1007, %v1014
          %v1016 = vrot.slane %v1011, 4
          %v1017 = vsel %vm800, %v1016, %v999
          %v1018 = vrot.slane %v999, 4
          %v1019 = vsel %vm800, %v1011, %v1018
          %v1020 = vpack.c.bf16 %v959, %v959
          %v1021 = vpack.c.bf16 %v1013, %v1013
          %v1022 = vpack.c.bf16 %v961, %v961
          %v1023 = vpack.c.bf16 %v1015, %v1015
          %v1024 = vpack.c.bf16 %v963, %v963
          %v1025 = vpack.c.bf16 %v1017, %v1017
          %v1026 = vpack.c.bf16 %v965, %v965
          %v1027 = vpack.c.bf16 %v1019, %v1019
          %vm1028 = vcmask 257024
          %1029 = vst.msk [vmem:[#allocation2] sm:$0xf] %vm1028, %v1020
          %1030 = vst.msk [vmem:[#allocation2 + $0x4] sm:$0xf] %vm1028, %v1021
          %1031 = vst.msk [vmem:[#allocation2 + $0x8] sm:$0xf] %vm1028, %v1022
          %1032 = vst.msk [vmem:[#allocation2 + $0xc] sm:$0xf] %vm1028, %v1023
          %1033 = vst.msk [vmem:[#allocation2 + $0x10] sm:$0xf] %vm1028, %v1024
          %1034 = vst.msk [vmem:[#allocation2 + $0x14] sm:$0xf] %vm1028, %v1025
          %1035 = vst.msk [vmem:[#allocation2 + $0x18] sm:$0xf] %vm1028, %v1026
          %1036 = vst.msk [vmem:[#allocation2 + $0x1c] sm:$0xf] %vm1028, %v1027
          %vm1037 = vcmask 7168
          %1038 = vst.msk [vmem:[#allocation3] sm:$0xff] %vm1037, -inf
          %1039 = vst.msk [vmem:[#allocation3 + $0x8] sm:$0xff] %vm1037, -inf
          %1040 = vst.msk [vmem:[#allocation3 + $0x10] sm:$0xff] %vm1037, -inf
          %1041 = vst.msk [vmem:[#allocation3 + $0x18] sm:$0xff] %vm1037, -inf
          %1042 = vst.msk [vmem:[#allocation3 + $0x20] sm:$0xff] %vm1037, -inf
          %1043 = vst.msk [vmem:[#allocation3 + $0x28] sm:$0xff] %vm1037, -inf
          %1044 = vst.msk [vmem:[#allocation3 + $0x30] sm:$0xff] %vm1037, -inf
          %1045 = vst.msk [vmem:[#allocation3 + $0x38] sm:$0xff] %vm1037, -inf
          %1046 = vst.msk [vmem:[#allocation4] sm:$0xff] %vm1037, 0.0
          %1047 = vst.msk [vmem:[#allocation4 + $0x8] sm:$0xff] %vm1037, 0.0
          %1048 = vst.msk [vmem:[#allocation4 + $0x10] sm:$0xff] %vm1037, 0.0
          %1049 = vst.msk [vmem:[#allocation4 + $0x18] sm:$0xff] %vm1037, 0.0
          %1050 = vst.msk [vmem:[#allocation4 + $0x20] sm:$0xff] %vm1037, 0.0
          %1051 = vst.msk [vmem:[#allocation4 + $0x28] sm:$0xff] %vm1037, 0.0
          %1052 = vst.msk [vmem:[#allocation4 + $0x30] sm:$0xff] %vm1037, 0.0
          %1053 = vst.msk [vmem:[#allocation4 + $0x38] sm:$0xff] %vm1037, 0.0
          %vm1054 = vcmask 261120
          %1055 = vst.msk [vmem:[#allocation5] sm:$0xff] %vm1054, 0.0
          %1056 = vst.msk [vmem:[#allocation5 + $0x8] sm:$0xff] %vm1054, 0.0
          %1057 = vst.msk [vmem:[#allocation5 + $0x10] sm:$0xff] %vm1054, 0.0
          %1058 = vst.msk [vmem:[#allocation5 + $0x18] sm:$0xff] %vm1054, 0.0
          %1059 = vst.msk [vmem:[#allocation5 + $0x20] sm:$0xff] %vm1054, 0.0
          %1060 = vst.msk [vmem:[#allocation5 + $0x28] sm:$0xff] %vm1054, 0.0
          %1061 = vst.msk [vmem:[#allocation5 + $0x30] sm:$0xff] %vm1054, 0.0
          %1062 = vst.msk [vmem:[#allocation5 + $0x38] sm:$0xff] %vm1054, 0.0
        $region104: #{tpu_custom_call.1} parent=75 // pred_fallthru
          _
        %v1063 = vld [vmem:[%s554] sm:$0xff]
        %v1064 = vld [vmem:[%s554 + $0x8] sm:$0xff]
        %v1065 = vld [vmem:[%s554 + $0x10] sm:$0xff]
        %v1066 = vld [vmem:[%s554 + $0x18] sm:$0xff]
        %v1067 = vld [vmem:[%s4] sm:$0x1]
        %v1068 = vld [vmem:[%s5] sm:$0x1]
        %1069 = vadd.xlane.f32.xlu0 %v1063
        %v1070 = vpop.xlane.xlu0 %1069
        %1071 = vadd.xlane.f32.xlu0 %v1064
        %v1072 = vpop.xlane.xlu0 %1071
        %1073 = vadd.xlane.f32.xlu0 %v1065
        %v1074 = vpop.xlane.xlu0 %1073
        %1075 = vadd.xlane.f32.xlu0 %v1066
        %v1076 = vpop.xlane.xlu0 %1075
        %v1077 = vrcp.pop 128.0
        %v1078 = vmul.f32 128.0, %v1077
        %v1079 = vsub.f32 1.0, %v1078
        %v1080 = vmul.f32 %v1077, %v1079
        %v1081 = vadd.f32 %v1077, %v1080
        %vm1082 = vweird.f32 %v1077
        %v1083 = vsel %vm1082, %v1077, %v1081
        %v1084 = vmul.f32 %v1070, %v1083
        %v1085 = vmul.f32 %v1072, %v1083
        %v1086 = vmul.f32 %v1074, %v1083
        %v1087 = vmul.f32 %v1076, %v1083
        %v1088 = vsub.f32 %v1063, %v1084
        %v1089 = vsub.f32 %v1064, %v1085
        %v1090 = vsub.f32 %v1065, %v1086
        %v1091 = vsub.f32 %v1066, %v1087
        %v1092 = vmul.f32 %v1088, %v1088
        %v1093 = vmul.f32 %v1089, %v1089
        %v1094 = vmul.f32 %v1090, %v1090
        %v1095 = vmul.f32 %v1091, %v1091
        %1096 = vadd.xlane.f32.xlu0 %v1092
        %v1097 = vpop.xlane.xlu0 %1096
        %1098 = vadd.xlane.f32.xlu0 %v1093
        %v1099 = vpop.xlane.xlu0 %1098
        %1100 = vadd.xlane.f32.xlu0 %v1094
        %v1101 = vpop.xlane.xlu0 %1100
        %1102 = vadd.xlane.f32.xlu0 %v1095
        %v1103 = vpop.xlane.xlu0 %1102
        %v1104 = vmul.f32 %v1097, %v1083
        %v1105 = vmul.f32 %v1099, %v1083
        %v1106 = vmul.f32 %v1101, %v1083
        %v1107 = vmul.f32 %v1103, %v1083
        %v1108 = vadd.f32 %v1104, 1e-05
        %v1109 = vadd.f32 %v1105, 1e-05
        %v1110 = vadd.f32 %v1106, 1e-05
        %v1111 = vadd.f32 %v1107, 1e-05
        %v1112 = vrsqrt.pop %v1108
        %v1113 = vmul.f32 %v1112, %v1108
        %v1114 = vmul.f32 %v1113, %v1112
        %v1115 = vmul.f32 0.5, %v1114
        %v1116 = vsub.f32 1.5, %v1115
        %v1117 = vmul.f32 %v1112, %v1116
        %vm1118 = vweird.f32 %v1108
        %vm1119 = vweird.f32 %v1112
        %vm1120 = vmor %vm1118, %vm1119
        %v1121 = vsel %vm1120, %v1112, %v1117
        %v1122 = vrsqrt.pop %v1109
        %v1123 = vmul.f32 %v1122, %v1109
        %v1124 = vmul.f32 %v1123, %v1122
        %v1125 = vmul.f32 0.5, %v1124
        %v1126 = vsub.f32 1.5, %v1125
        %v1127 = vmul.f32 %v1122, %v1126
        %vm1128 = vweird.f32 %v1109
        %vm1129 = vweird.f32 %v1122
        %vm1130 = vmor %vm1128, %vm1129
        %v1131 = vsel %vm1130, %v1122, %v1127
        %v1132 = vrsqrt.pop %v1110
        %v1133 = vmul.f32 %v1132, %v1110
        %v1134 = vmul.f32 %v1133, %v1132
        %v1135 = vmul.f32 0.5, %v1134
        %v1136 = vsub.f32 1.5, %v1135
        %v1137 = vmul.f32 %v1132, %v1136
        %vm1138 = vweird.f32 %v1110
        %vm1139 = vweird.f32 %v1132
        %vm1140 = vmor %vm1138, %vm1139
        %v1141 = vsel %vm1140, %v1132, %v1137
        %v1142 = vrsqrt.pop %v1111
        %v1143 = vmul.f32 %v1142, %v1111
        %v1144 = vmul.f32 %v1143, %v1142
        %v1145 = vmul.f32 0.5, %v1144
        %v1146 = vsub.f32 1.5, %v1145
        %v1147 = vmul.f32 %v1142, %v1146
        %vm1148 = vweird.f32 %v1111
        %vm1149 = vweird.f32 %v1142
        %vm1150 = vmor %vm1148, %vm1149
        %v1151 = vsel %vm1150, %v1142, %v1147
        %v1152 = vmul.f32 %v1088, %v1121
        %v1153 = vmul.f32 %v1089, %v1131
        %v1154 = vmul.f32 %v1090, %v1141
        %v1155 = vmul.f32 %v1091, %v1151
        %v1157 = vperm.slane %v1067, 0
        %v1159 = vmul.f32 %v1152, %v1157
        %v1160 = vmul.f32 %v1153, %v1157
        %v1161 = vmul.f32 %v1154, %v1157
        %v1162 = vmul.f32 %v1155, %v1157
        %v1164 = vperm.slane %v1068, 0
        %v1166 = vadd.f32 %v1159, %v1164
        %v1167 = vadd.f32 %v1160, %v1164
        %v1168 = vadd.f32 %v1161, %v1164
        %v1169 = vadd.f32 %v1162, %v1164
        %v1170 = vpack.c.bf16 %v1167, %v1166
        %v1171 = vpack.c.bf16 %v1169, %v1168
        %v1172 = vld [vmem:[#allocation12] sm:$0xf]
        %v1173 = vld [vmem:[#allocation12 + $0x4] sm:$0xf]
        %v1174 = vld [vmem:[#allocation12 + $0x8] sm:$0xf]
        %v1175 = vld [vmem:[#allocation12 + $0xc] sm:$0xf]
        %v1176 = vld [vmem:[#allocation12 + $0x10] sm:$0xf]
        %v1177 = vld [vmem:[#allocation12 + $0x14] sm:$0xf]
        %v1178 = vld [vmem:[#allocation12 + $0x18] sm:$0xf]
        %v1179 = vld [vmem:[#allocation12 + $0x1c] sm:$0xf]
        %v1180 = vld [vmem:[#allocation12 + $0x20] sm:$0xf]
        %v1181 = vld [vmem:[#allocation12 + $0x24] sm:$0xf]
        %v1182 = vld [vmem:[#allocation12 + $0x28] sm:$0xf]
        %v1183 = vld [vmem:[#allocation12 + $0x2c] sm:$0xf]
        %v1184 = vld [vmem:[#allocation12 + $0x30] sm:$0xf]
        %v1185 = vld [vmem:[#allocation12 + $0x34] sm:$0xf]
        %v1186 = vld [vmem:[#allocation12 + $0x38] sm:$0xf]
        %v1187 = vld [vmem:[#allocation12 + $0x3c] sm:$0xf]
        %v1188 = vld [vmem:[%s9] sm:$0x1]
        %v1190 = vperm.slane %v1188, 0
        %v1208 = vunpack.c.l.b16 %v1172
        %v1209 = vunpack.c.l.b16 %v1173
        %v1210 = vunpack.c.l.b16 %v1174
        %v1211 = vunpack.c.l.b16 %v1175
        %v1212 = vunpack.c.l.b16 %v1176
        %v1213 = vunpack.c.l.b16 %v1177
        %v1214 = vunpack.c.l.b16 %v1178
        %v1215 = vunpack.c.l.b16 %v1179
        %v1216 = vunpack.c.l.b16 %v1180
        %v1217 = vunpack.c.l.b16 %v1181
        %v1218 = vunpack.c.l.b16 %v1182
        %v1219 = vunpack.c.l.b16 %v1183
        %v1220 = vunpack.c.l.b16 %v1184
        %v1221 = vunpack.c.l.b16 %v1185
        %v1222 = vunpack.c.l.b16 %v1186
        %v1223 = vunpack.c.l.b16 %v1187
        %v1224 = vpack.c.b16 %v1209, %v1208
        %v1225 = vpack.c.b16 %v1211, %v1210
        %v1226 = vpack.c.b16 %v1213, %v1212
        %v1227 = vpack.c.b16 %v1215, %v1214
        %v1228 = vpack.c.b16 %v1217, %v1216
        %v1229 = vpack.c.b16 %v1219, %v1218
        %v1230 = vpack.c.b16 %v1221, %v1220
        %v1231 = vpack.c.b16 %v1223, %v1222
        %1240 = vmatpush.bf16.msra.mxu0 %v1231
        %1241 = vmatpush.bf16.msra.mxu0 %v1230
        %1242 = vmatpush.bf16.msra.mxu0 %v1229
        %1243 = vmatpush.bf16.msra.mxu0 %v1228
        %1244 = vmatpush.bf16.msra.mxu0 %v1227
        %1245 = vmatpush.bf16.msra.mxu0 %v1226
        %1246 = vmatpush.bf16.msra.mxu0 %v1225
        %1247 = vmatpush.bf16.msra.mxu0 %v1224
        %1248 = vmatmul.bf16.gmra.mxu0 %v1170
        %v1249 = vpop.f32.mrf.mxu0
        %v1250 = vadd.f32 %v1190, %v1249
        %v1251 = vpop.f32.mrf.mxu0
        %v1252 = vadd.f32 %v1190, %v1251
        %1253 = vmatmul.bf16.gmra.mxu0 %v1171
        %v1254 = vpop.f32.mrf.mxu0
        %v1255 = vadd.f32 %v1190, %v1254
        %v1256 = vpop.f32.mrf.mxu0
        %v1257 = vadd.f32 %v1190, %v1256
        %1258 = vdwg.mxu0
        %v1259 = vld [vmem:[#allocation14] sm:$0xf]
        %v1260 = vld [vmem:[#allocation14 + $0x4] sm:$0xf]
        %v1261 = vld [vmem:[#allocation14 + $0x8] sm:$0xf]
        %v1262 = vld [vmem:[#allocation14 + $0xc] sm:$0xf]
        %v1263 = vld [vmem:[#allocation14 + $0x10] sm:$0xf]
        %v1264 = vld [vmem:[#allocation14 + $0x14] sm:$0xf]
        %v1265 = vld [vmem:[#allocation14 + $0x18] sm:$0xf]
        %v1266 = vld [vmem:[#allocation14 + $0x1c] sm:$0xf]
        %v1267 = vld [vmem:[#allocation14 + $0x20] sm:$0xf]
        %v1268 = vld [vmem:[#allocation14 + $0x24] sm:$0xf]
        %v1269 = vld [vmem:[#allocation14 + $0x28] sm:$0xf]
        %v1270 = vld [vmem:[#allocation14 + $0x2c] sm:$0xf]
        %v1271 = vld [vmem:[#allocation14 + $0x30] sm:$0xf]
        %v1272 = vld [vmem:[#allocation14 + $0x34] sm:$0xf]
        %v1273 = vld [vmem:[#allocation14 + $0x38] sm:$0xf]
        %v1274 = vld [vmem:[#allocation14 + $0x3c] sm:$0xf]
        %v1275 = vld [vmem:[%s11] sm:$0x1]
        %v1277 = vperm.slane %v1275, 0
        %v1295 = vunpack.c.l.b16 %v1259
        %v1296 = vunpack.c.l.b16 %v1260
        %v1297 = vunpack.c.l.b16 %v1261
        %v1298 = vunpack.c.l.b16 %v1262
        %v1299 = vunpack.c.l.b16 %v1263
        %v1300 = vunpack.c.l.b16 %v1264
        %v1301 = vunpack.c.l.b16 %v1265
        %v1302 = vunpack.c.l.b16 %v1266
        %v1303 = vunpack.c.l.b16 %v1267
        %v1304 = vunpack.c.l.b16 %v1268
        %v1305 = vunpack.c.l.b16 %v1269
        %v1306 = vunpack.c.l.b16 %v1270
        %v1307 = vunpack.c.l.b16 %v1271
        %v1308 = vunpack.c.l.b16 %v1272
        %v1309 = vunpack.c.l.b16 %v1273
        %v1310 = vunpack.c.l.b16 %v1274
        %v1311 = vpack.c.b16 %v1296, %v1295
        %v1312 = vpack.c.b16 %v1298, %v1297
        %v1313 = vpack.c.b16 %v1300, %v1299
        %v1314 = vpack.c.b16 %v1302, %v1301
        %v1315 = vpack.c.b16 %v1304, %v1303
        %v1316 = vpack.c.b16 %v1306, %v1305
        %v1317 = vpack.c.b16 %v1308, %v1307
        %v1318 = vpack.c.b16 %v1310, %v1309
        %1327 = vmatpush.bf16.msra.mxu0 %v1318
        %1328 = vmatpush.bf16.msra.mxu0 %v1317
        %1329 = vmatpush.bf16.msra.mxu0 %v1316
        %1330 = vmatpush.bf16.msra.mxu0 %v1315
        %1331 = vmatpush.bf16.msra.mxu0 %v1314
        %1332 = vmatpush.bf16.msra.mxu0 %v1313
        %1333 = vmatpush.bf16.msra.mxu0 %v1312
        %1334 = vmatpush.bf16.msra.mxu0 %v1311
        %1335 = vmatmul.bf16.gmra.mxu0 %v1170
        %v1336 = vpop.f32.mrf.mxu0
        %v1337 = vadd.f32 %v1277, %v1336
        %v1338 = vpop.f32.mrf.mxu0
        %v1339 = vadd.f32 %v1277, %v1338
        %1340 = vmatmul.bf16.gmra.mxu0 %v1171
        %v1341 = vpop.f32.mrf.mxu0
        %v1342 = vadd.f32 %v1277, %v1341
        %v1343 = vpop.f32.mrf.mxu0
        %v1344 = vadd.f32 %v1277, %v1343
        %1345 = vdwg.mxu0
        %1350 = vrot.lane.b32.xlu0 %v1250, 96
        %v1351 = vpop.permute.xlu0 %1350
        %1352 = vrot.lane.b32.xlu0 %v1252, 96
        %v1353 = vpop.permute.xlu0 %1352
        %1354 = vrot.lane.b32.xlu0 %v1255, 96
        %v1355 = vpop.permute.xlu0 %1354
        %1356 = vrot.lane.b32.xlu0 %v1257, 96
        %v1357 = vpop.permute.xlu0 %1356
        %1362 = vrot.lane.b32.xlu0 %v1250, 64
        %v1363 = vpop.permute.xlu0 %1362
        %1364 = vrot.lane.b32.xlu0 %v1252, 64
        %v1365 = vpop.permute.xlu0 %1364
        %1366 = vrot.lane.b32.xlu0 %v1255, 64
        %v1367 = vpop.permute.xlu0 %1366
        %1368 = vrot.lane.b32.xlu0 %v1257, 64
        %v1369 = vpop.permute.xlu0 %1368
        %1374 = vrot.lane.b32.xlu0 %v1250, 32
        %v1375 = vpop.permute.xlu0 %1374
        %1376 = vrot.lane.b32.xlu0 %v1252, 32
        %v1377 = vpop.permute.xlu0 %1376
        %1378 = vrot.lane.b32.xlu0 %v1255, 32
        %v1379 = vpop.permute.xlu0 %1378
        %1380 = vrot.lane.b32.xlu0 %v1257, 32
        %v1381 = vpop.permute.xlu0 %1380
        %v1386 = vrot.slane %v1363, 4
        %vm1387 = vcmask 1047556
        %v1388 = vsel %vm1387, %v1386, %v1250
        %v1389 = vrot.slane %v1250, 4
        %v1390 = vsel %vm1387, %v1363, %v1389
        %v1392 = vunpack.c.l.s4 1983009808
        %v1393 = vunpack.c.0.s8 %v1392
        %v1394 = vperm.slane %v1388, %v1393
        %v1396 = vunpack.c.l.s4 1983009808
        %v1397 = vunpack.c.0.s8 %v1396
        %v1398 = vperm.slane %v1390, %v1397
        %v1399 = vrot.slane %v1375, 4
        %v1400 = vsel %vm1387, %v1399, %v1351
        %v1401 = vrot.slane %v1351, 4
        %v1402 = vsel %vm1387, %v1375, %v1401
        %v1404 = vunpack.c.l.s4 1983009808
        %v1405 = vunpack.c.0.s8 %v1404
        %v1406 = vperm.slane %v1400, %v1405
        %v1408 = vunpack.c.l.s4 1983009808
        %v1409 = vunpack.c.0.s8 %v1408
        %v1410 = vperm.slane %v1402, %v1409
        %v1411 = vrot.slane %v1406, 4
        %v1412 = vsel %vm1387, %v1411, %v1394
        %v1413 = vrot.slane %v1394, 4
        %v1414 = vsel %vm1387, %v1406, %v1413
        %v1416 = vunpack.c.l.s4 1934713408
        %v1417 = vunpack.c.0.s8 %v1416
        %v1418 = vperm.slane %v1412, %v1417
        %v1420 = vunpack.c.l.s4 1934713408
        %v1421 = vunpack.c.0.s8 %v1420
        %v1422 = vperm.slane %v1414, %v1421
        %v1423 = vrot.slane %v1410, 4
        %v1424 = vsel %vm1387, %v1423, %v1398
        %v1425 = vrot.slane %v1398, 4
        %v1426 = vsel %vm1387, %v1410, %v1425
        %v1428 = vunpack.c.l.s4 1934713408
        %v1429 = vunpack.c.0.s8 %v1428
        %v1430 = vperm.slane %v1424, %v1429
        %v1432 = vunpack.c.l.s4 1934713408
        %v1433 = vunpack.c.0.s8 %v1432
        %v1434 = vperm.slane %v1426, %v1433
        %v1435 = vrot.slane %v1418, 4
        %v1436 = vsel %vm1387, 0.0, %v1435
        %v1437 = vrot.slane %v1422, 4
        %v1438 = vsel %vm1387, 0.0, %v1437
        %v1439 = vrot.slane %v1430, 4
        %v1440 = vsel %vm1387, 0.0, %v1439
        %v1441 = vrot.slane %v1434, 4
        %v1442 = vsel %vm1387, 0.0, %v1441
        %v1443 = vrot.slane %v1365, 4
        %v1444 = vsel %vm1387, %v1443, %v1252
        %v1445 = vrot.slane %v1252, 4
        %v1446 = vsel %vm1387, %v1365, %v1445
        %v1448 = vunpack.c.l.s4 1983009808
        %v1449 = vunpack.c.0.s8 %v1448
        %v1450 = vperm.slane %v1444, %v1449
        %v1452 = vunpack.c.l.s4 1983009808
        %v1453 = vunpack.c.0.s8 %v1452
        %v1454 = vperm.slane %v1446, %v1453
        %v1455 = vrot.slane %v1377, 4
        %v1456 = vsel %vm1387, %v1455, %v1353
        %v1457 = vrot.slane %v1353, 4
        %v1458 = vsel %vm1387, %v1377, %v1457
        %v1460 = vunpack.c.l.s4 1983009808
        %v1461 = vunpack.c.0.s8 %v1460
        %v1462 = vperm.slane %v1456, %v1461
        %v1464 = vunpack.c.l.s4 1983009808
        %v1465 = vunpack.c.0.s8 %v1464
        %v1466 = vperm.slane %v1458, %v1465
        %v1467 = vrot.slane %v1462, 4
        %v1468 = vsel %vm1387, %v1467, %v1450
        %v1469 = vrot.slane %v1450, 4
        %v1470 = vsel %vm1387, %v1462, %v1469
        %v1472 = vunpack.c.l.s4 1934713408
        %v1473 = vunpack.c.0.s8 %v1472
        %v1474 = vperm.slane %v1468, %v1473
        %v1476 = vunpack.c.l.s4 1934713408
        %v1477 = vunpack.c.0.s8 %v1476
        %v1478 = vperm.slane %v1470, %v1477
        %v1479 = vrot.slane %v1466, 4
        %v1480 = vsel %vm1387, %v1479, %v1454
        %v1481 = vrot.slane %v1454, 4
        %v1482 = vsel %vm1387, %v1466, %v1481
        %v1484 = vunpack.c.l.s4 1934713408
        %v1485 = vunpack.c.0.s8 %v1484
        %v1486 = vperm.slane %v1480, %v1485
        %v1488 = vunpack.c.l.s4 1934713408
        %v1489 = vunpack.c.0.s8 %v1488
        %v1490 = vperm.slane %v1482, %v1489
        %v1491 = vrot.slane %v1474, 4
        %v1492 = vsel %vm1387, 0.0, %v1491
        %v1493 = vrot.slane %v1478, 4
        %v1494 = vsel %vm1387, 0.0, %v1493
        %v1495 = vrot.slane %v1486, 4
        %v1496 = vsel %vm1387, 0.0, %v1495
        %v1497 = vrot.slane %v1490, 4
        %v1498 = vsel %vm1387, 0.0, %v1497
        %v1499 = vrot.slane %v1367, 4
        %v1500 = vsel %vm1387, %v1499, %v1255
        %v1501 = vrot.slane %v1255, 4
        %v1502 = vsel %vm1387, %v1367, %v1501
        %v1504 = vunpack.c.l.s4 1983009808
        %v1505 = vunpack.c.0.s8 %v1504
        %v1506 = vperm.slane %v1500, %v1505
        %v1508 = vunpack.c.l.s4 1983009808
        %v1509 = vunpack.c.0.s8 %v1508
        %v1510 = vperm.slane %v1502, %v1509
        %v1511 = vrot.slane %v1379, 4
        %v1512 = vsel %vm1387, %v1511, %v1355
        %v1513 = vrot.slane %v1355, 4
        %v1514 = vsel %vm1387, %v1379, %v1513
        %v1516 = vunpack.c.l.s4 1983009808
        %v1517 = vunpack.c.0.s8 %v1516
        %v1518 = vperm.slane %v1512, %v1517
        %v1520 = vunpack.c.l.s4 1983009808
        %v1521 = vunpack.c.0.s8 %v1520
        %v1522 = vperm.slane %v1514, %v1521
        %v1523 = vrot.slane %v1518, 4
        %v1524 = vsel %vm1387, %v1523, %v1506
        %v1525 = vrot.slane %v1506, 4
        %v1526 = vsel %vm1387, %v1518, %v1525
        %v1528 = vunpack.c.l.s4 1934713408
        %v1529 = vunpack.c.0.s8 %v1528
        %v1530 = vperm.slane %v1524, %v1529
        %v1532 = vunpack.c.l.s4 1934713408
        %v1533 = vunpack.c.0.s8 %v1532
        %v1534 = vperm.slane %v1526, %v1533
        %v1535 = vrot.slane %v1522, 4
        %v1536 = vsel %vm1387, %v1535, %v1510
        %v1537 = vrot.slane %v1510, 4
        %v1538 = vsel %vm1387, %v1522, %v1537
        %v1540 = vunpack.c.l.s4 1934713408
        %v1541 = vunpack.c.0.s8 %v1540
        %v1542 = vperm.slane %v1536, %v1541
        %v1544 = vunpack.c.l.s4 1934713408
        %v1545 = vunpack.c.0.s8 %v1544
        %v1546 = vperm.slane %v1538, %v1545
        %v1547 = vrot.slane %v1530, 4
        %v1548 = vsel %vm1387, 0.0, %v1547
        %v1549 = vrot.slane %v1534, 4
        %v1550 = vsel %vm1387, 0.0, %v1549
        %v1551 = vrot.slane %v1542, 4
        %v1552 = vsel %vm1387, 0.0, %v1551
        %v1553 = vrot.slane %v1546, 4
        %v1554 = vsel %vm1387, 0.0, %v1553
        %v1555 = vrot.slane %v1369, 4
        %v1556 = vsel %vm1387, %v1555, %v1257
        %v1557 = vrot.slane %v1257, 4
        %v1558 = vsel %vm1387, %v1369, %v1557
        %v1560 = vunpack.c.l.s4 1983009808
        %v1561 = vunpack.c.0.s8 %v1560
        %v1562 = vperm.slane %v1556, %v1561
        %v1564 = vunpack.c.l.s4 1983009808
        %v1565 = vunpack.c.0.s8 %v1564
        %v1566 = vperm.slane %v1558, %v1565
        %v1567 = vrot.slane %v1381, 4
        %v1568 = vsel %vm1387, %v1567, %v1357
        %v1569 = vrot.slane %v1357, 4
        %v1570 = vsel %vm1387, %v1381, %v1569
        %v1572 = vunpack.c.l.s4 1983009808
        %v1573 = vunpack.c.0.s8 %v1572
        %v1574 = vperm.slane %v1568, %v1573
        %v1576 = vunpack.c.l.s4 1983009808
        %v1577 = vunpack.c.0.s8 %v1576
        %v1578 = vperm.slane %v1570, %v1577
        %v1579 = vrot.slane %v1574, 4
        %v1580 = vsel %vm1387, %v1579, %v1562
        %v1581 = vrot.slane %v1562, 4
        %v1582 = vsel %vm1387, %v1574, %v1581
        %v1584 = vunpack.c.l.s4 1934713408
        %v1585 = vunpack.c.0.s8 %v1584
        %v1586 = vperm.slane %v1580, %v1585
        %v1588 = vunpack.c.l.s4 1934713408
        %v1589 = vunpack.c.0.s8 %v1588
        %v1590 = vperm.slane %v1582, %v1589
        %v1591 = vrot.slane %v1578, 4
        %v1592 = vsel %vm1387, %v1591, %v1566
        %v1593 = vrot.slane %v1566, 4
        %v1594 = vsel %vm1387, %v1578, %v1593
        %v1596 = vunpack.c.l.s4 1934713408
        %v1597 = vunpack.c.0.s8 %v1596
        %v1598 = vperm.slane %v1592, %v1597
        %v1600 = vunpack.c.l.s4 1934713408
        %v1601 = vunpack.c.0.s8 %v1600
        %v1602 = vperm.slane %v1594, %v1601
        %v1603 = vrot.slane %v1586, 4
        %v1604 = vsel %vm1387, 0.0, %v1603
        %v1605 = vrot.slane %v1590, 4
        %v1606 = vsel %vm1387, 0.0, %v1605
        %v1607 = vrot.slane %v1598, 4
        %v1608 = vsel %vm1387, 0.0, %v1607
        %v1609 = vrot.slane %v1602, 4
        %v1610 = vsel %vm1387, 0.0, %v1609
        %v1611 = vsel %vm1387, %v1437, %v1418
        %v1613 = vunpack.c.l.s4 1983009808
        %v1614 = vunpack.c.0.s8 %v1613
        %v1615 = vperm.slane %v1611, %v1614
        %v1616 = vrot.slane %v1438, 4
        %v1617 = vsel %vm1387, %v1616, %v1436
        %v1619 = vunpack.c.l.s4 1983009808
        %v1620 = vunpack.c.0.s8 %v1619
        %v1621 = vperm.slane %v1617, %v1620
        %v1622 = vsel %vm1387, %v1441, %v1430
        %v1624 = vunpack.c.l.s4 1983009808
        %v1625 = vunpack.c.0.s8 %v1624
        %v1626 = vperm.slane %v1622, %v1625
        %v1627 = vrot.slane %v1442, 4
        %v1628 = vsel %vm1387, %v1627, %v1440
        %v1630 = vunpack.c.l.s4 1983009808
        %v1631 = vunpack.c.0.s8 %v1630
        %v1632 = vperm.slane %v1628, %v1631
        %v1633 = vrot.slane %v1621, 4
        %v1634 = vsel %vm1387, %v1633, %v1615
        %v1635 = vrot.slane %v1615, 4
        %v1636 = vsel %vm1387, %v1621, %v1635
        %v1638 = vunpack.c.l.s4 1934713408
        %v1639 = vunpack.c.0.s8 %v1638
        %v1640 = vperm.slane %v1634, %v1639
        %v1642 = vunpack.c.l.s4 1934713408
        %v1643 = vunpack.c.0.s8 %v1642
        %v1644 = vperm.slane %v1636, %v1643
        %v1645 = vrot.slane %v1632, 4
        %v1646 = vsel %vm1387, %v1645, %v1626
        %v1647 = vrot.slane %v1626, 4
        %v1648 = vsel %vm1387, %v1632, %v1647
        %v1650 = vunpack.c.l.s4 1934713408
        %v1651 = vunpack.c.0.s8 %v1650
        %v1652 = vperm.slane %v1646, %v1651
        %v1654 = vunpack.c.l.s4 1934713408
        %v1655 = vunpack.c.0.s8 %v1654
        %v1656 = vperm.slane %v1648, %v1655
        %v1657 = vrot.slane %v1652, 4
        %v1658 = vsel %vm1387, %v1657, %v1640
        %v1659 = vrot.slane %v1640, 4
        %v1660 = vsel %vm1387, %v1652, %v1659
        %v1661 = vrot.slane %v1656, 4
        %v1662 = vsel %vm1387, %v1661, %v1644
        %v1663 = vrot.slane %v1644, 4
        %v1664 = vsel %vm1387, %v1656, %v1663
        %v1665 = vsel %vm1387, %v1493, %v1474
        %v1667 = vunpack.c.l.s4 1983009808
        %v1668 = vunpack.c.0.s8 %v1667
        %v1669 = vperm.slane %v1665, %v1668
        %v1670 = vrot.slane %v1494, 4
        %v1671 = vsel %vm1387, %v1670, %v1492
        %v1673 = vunpack.c.l.s4 1983009808
        %v1674 = vunpack.c.0.s8 %v1673
        %v1675 = vperm.slane %v1671, %v1674
        %v1676 = vsel %vm1387, %v1497, %v1486
        %v1678 = vunpack.c.l.s4 1983009808
        %v1679 = vunpack.c.0.s8 %v1678
        %v1680 = vperm.slane %v1676, %v1679
        %v1681 = vrot.slane %v1498, 4
        %v1682 = vsel %vm1387, %v1681, %v1496
        %v1684 = vunpack.c.l.s4 1983009808
        %v1685 = vunpack.c.0.s8 %v1684
        %v1686 = vperm.slane %v1682, %v1685
        %v1687 = vrot.slane %v1675, 4
        %v1688 = vsel %vm1387, %v1687, %v1669
        %v1689 = vrot.slane %v1669, 4
        %v1690 = vsel %vm1387, %v1675, %v1689
        %v1692 = vunpack.c.l.s4 1934713408
        %v1693 = vunpack.c.0.s8 %v1692
        %v1694 = vperm.slane %v1688, %v1693
        %v1696 = vunpack.c.l.s4 1934713408
        %v1697 = vunpack.c.0.s8 %v1696
        %v1698 = vperm.slane %v1690, %v1697
        %v1699 = vrot.slane %v1686, 4
        %v1700 = vsel %vm1387, %v1699, %v1680
        %v1701 = vrot.slane %v1680, 4
        %v1702 = vsel %vm1387, %v1686, %v1701
        %v1704 = vunpack.c.l.s4 1934713408
        %v1705 = vunpack.c.0.s8 %v1704
        %v1706 = vperm.slane %v1700, %v1705
        %v1708 = vunpack.c.l.s4 1934713408
        %v1709 = vunpack.c.0.s8 %v1708
        %v1710 = vperm.slane %v1702, %v1709
        %v1711 = vrot.slane %v1706, 4
        %v1712 = vsel %vm1387, %v1711, %v1694
        %v1713 = vrot.slane %v1694, 4
        %v1714 = vsel %vm1387, %v1706, %v1713
        %v1715 = vrot.slane %v1710, 4
        %v1716 = vsel %vm1387, %v1715, %v1698
        %v1717 = vrot.slane %v1698, 4
        %v1718 = vsel %vm1387, %v1710, %v1717
        %v1719 = vsel %vm1387, %v1549, %v1530
        %v1721 = vunpack.c.l.s4 1983009808
        %v1722 = vunpack.c.0.s8 %v1721
        %v1723 = vperm.slane %v1719, %v1722
        %v1724 = vrot.slane %v1550, 4
        %v1725 = vsel %vm1387, %v1724, %v1548
        %v1727 = vunpack.c.l.s4 1983009808
        %v1728 = vunpack.c.0.s8 %v1727
        %v1729 = vperm.slane %v1725, %v1728
        %v1730 = vsel %vm1387, %v1553, %v1542
        %v1732 = vunpack.c.l.s4 1983009808
        %v1733 = vunpack.c.0.s8 %v1732
        %v1734 = vperm.slane %v1730, %v1733
        %v1735 = vrot.slane %v1554, 4
        %v1736 = vsel %vm1387, %v1735, %v1552
        %v1738 = vunpack.c.l.s4 1983009808
        %v1739 = vunpack.c.0.s8 %v1738
        %v1740 = vperm.slane %v1736, %v1739
        %v1741 = vrot.slane %v1729, 4
        %v1742 = vsel %vm1387, %v1741, %v1723
        %v1743 = vrot.slane %v1723, 4
        %v1744 = vsel %vm1387, %v1729, %v1743
        %v1746 = vunpack.c.l.s4 1934713408
        %v1747 = vunpack.c.0.s8 %v1746
        %v1748 = vperm.slane %v1742, %v1747
        %v1750 = vunpack.c.l.s4 1934713408
        %v1751 = vunpack.c.0.s8 %v1750
        %v1752 = vperm.slane %v1744, %v1751
        %v1753 = vrot.slane %v1740, 4
        %v1754 = vsel %vm1387, %v1753, %v1734
        %v1755 = vrot.slane %v1734, 4
        %v1756 = vsel %vm1387, %v1740, %v1755
        %v1758 = vunpack.c.l.s4 1934713408
        %v1759 = vunpack.c.0.s8 %v1758
        %v1760 = vperm.slane %v1754, %v1759
        %v1762 = vunpack.c.l.s4 1934713408
        %v1763 = vunpack.c.0.s8 %v1762
        %v1764 = vperm.slane %v1756, %v1763
        %v1765 = vrot.slane %v1760, 4
        %v1766 = vsel %vm1387, %v1765, %v1748
        %v1767 = vrot.slane %v1748, 4
        %v1768 = vsel %vm1387, %v1760, %v1767
        %v1769 = vrot.slane %v1764, 4
        %v1770 = vsel %vm1387, %v1769, %v1752
        %v1771 = vrot.slane %v1752, 4
        %v1772 = vsel %vm1387, %v1764, %v1771
        %v1773 = vsel %vm1387, %v1605, %v1586
        %v1775 = vunpack.c.l.s4 1983009808
        %v1776 = vunpack.c.0.s8 %v1775
        %v1777 = vperm.slane %v1773, %v1776
        %v1778 = vrot.slane %v1606, 4
        %v1779 = vsel %vm1387, %v1778, %v1604
        %v1781 = vunpack.c.l.s4 1983009808
        %v1782 = vunpack.c.0.s8 %v1781
        %v1783 = vperm.slane %v1779, %v1782
        %v1784 = vsel %vm1387, %v1609, %v1598
        %v1786 = vunpack.c.l.s4 1983009808
        %v1787 = vunpack.c.0.s8 %v1786
        %v1788 = vperm.slane %v1784, %v1787
        %v1789 = vrot.slane %v1610, 4
        %v1790 = vsel %vm1387, %v1789, %v1608
        %v1792 = vunpack.c.l.s4 1983009808
        %v1793 = vunpack.c.0.s8 %v1792
        %v1794 = vperm.slane %v1790, %v1793
        %v1795 = vrot.slane %v1783, 4
        %v1796 = vsel %vm1387, %v1795, %v1777
        %v1797 = vrot.slane %v1777, 4
        %v1798 = vsel %vm1387, %v1783, %v1797
        %v1800 = vunpack.c.l.s4 1934713408
        %v1801 = vunpack.c.0.s8 %v1800
        %v1802 = vperm.slane %v1796, %v1801
        %v1804 = vunpack.c.l.s4 1934713408
        %v1805 = vunpack.c.0.s8 %v1804
        %v1806 = vperm.slane %v1798, %v1805
        %v1807 = vrot.slane %v1794, 4
        %v1808 = vsel %vm1387, %v1807, %v1788
        %v1809 = vrot.slane %v1788, 4
        %v1810 = vsel %vm1387, %v1794, %v1809
        %v1812 = vunpack.c.l.s4 1934713408
        %v1813 = vunpack.c.0.s8 %v1812
        %v1814 = vperm.slane %v1808, %v1813
        %v1816 = vunpack.c.l.s4 1934713408
        %v1817 = vunpack.c.0.s8 %v1816
        %v1818 = vperm.slane %v1810, %v1817
        %v1819 = vrot.slane %v1814, 4
        %v1820 = vsel %vm1387, %v1819, %v1802
        %v1821 = vrot.slane %v1802, 4
        %v1822 = vsel %vm1387, %v1814, %v1821
        %v1823 = vrot.slane %v1818, 4
        %v1824 = vsel %vm1387, %v1823, %v1806
        %v1825 = vrot.slane %v1806, 4
        %v1826 = vsel %vm1387, %v1818, %v1825
        %v1827 = vpack.c.bf16 %v1658, %v1658
        %v1828 = vpack.c.bf16 %v1712, %v1712
        %v1829 = vpack.c.bf16 %v1766, %v1766
        %v1830 = vpack.c.bf16 %v1820, %v1820
        %v1831 = vpack.c.bf16 %v1660, %v1660
        %v1832 = vpack.c.bf16 %v1714, %v1714
        %v1833 = vpack.c.bf16 %v1768, %v1768
        %v1834 = vpack.c.bf16 %v1822, %v1822
        %v1835 = vpack.c.bf16 %v1662, %v1662
        %v1836 = vpack.c.bf16 %v1716, %v1716
        %v1837 = vpack.c.bf16 %v1770, %v1770
        %v1838 = vpack.c.bf16 %v1824, %v1824
        %v1839 = vpack.c.bf16 %v1664, %v1664
        %v1840 = vpack.c.bf16 %v1718, %v1718
        %v1841 = vpack.c.bf16 %v1772, %v1772
        %v1842 = vpack.c.bf16 %v1826, %v1826
        %1847 = vrot.lane.b32.xlu0 %v1337, 96
        %v1848 = vpop.permute.xlu0 %1847
        %1849 = vrot.lane.b32.xlu0 %v1339, 96
        %v1850 = vpop.permute.xlu0 %1849
        %1851 = vrot.lane.b32.xlu0 %v1342, 96
        %v1852 = vpop.permute.xlu0 %1851
        %1853 = vrot.lane.b32.xlu0 %v1344, 96
        %v1854 = vpop.permute.xlu0 %1853
        %1859 = vrot.lane.b32.xlu0 %v1337, 64
        %v1860 = vpop.permute.xlu0 %1859
        %1861 = vrot.lane.b32.xlu0 %v1339, 64
        %v1862 = vpop.permute.xlu0 %1861
        %1863 = vrot.lane.b32.xlu0 %v1342, 64
        %v1864 = vpop.permute.xlu0 %1863
        %1865 = vrot.lane.b32.xlu0 %v1344, 64
        %v1866 = vpop.permute.xlu0 %1865
        %1871 = vrot.lane.b32.xlu0 %v1337, 32
        %v1872 = vpop.permute.xlu0 %1871
        %1873 = vrot.lane.b32.xlu0 %v1339, 32
        %v1874 = vpop.permute.xlu0 %1873
        %1875 = vrot.lane.b32.xlu0 %v1342, 32
        %v1876 = vpop.permute.xlu0 %1875
        %1877 = vrot.lane.b32.xlu0 %v1344, 32
        %v1878 = vpop.permute.xlu0 %1877
        %v1883 = vrot.slane %v1860, 4
        %v1884 = vsel %vm1387, %v1883, %v1337
        %v1885 = vrot.slane %v1337, 4
        %v1886 = vsel %vm1387, %v1860, %v1885
        %v1888 = vunpack.c.l.s4 1983009808
        %v1889 = vunpack.c.0.s8 %v1888
        %v1890 = vperm.slane %v1884, %v1889
        %v1892 = vunpack.c.l.s4 1983009808
        %v1893 = vunpack.c.0.s8 %v1892
        %v1894 = vperm.slane %v1886, %v1893
        %v1895 = vrot.slane %v1872, 4
        %v1896 = vsel %vm1387, %v1895, %v1848
        %v1897 = vrot.slane %v1848, 4
        %v1898 = vsel %vm1387, %v1872, %v1897
        %v1900 = vunpack.c.l.s4 1983009808
        %v1901 = vunpack.c.0.s8 %v1900
        %v1902 = vperm.slane %v1896, %v1901
        %v1904 = vunpack.c.l.s4 1983009808
        %v1905 = vunpack.c.0.s8 %v1904
        %v1906 = vperm.slane %v1898, %v1905
        %v1907 = vrot.slane %v1902, 4
        %v1908 = vsel %vm1387, %v1907, %v1890
        %v1909 = vrot.slane %v1890, 4
        %v1910 = vsel %vm1387, %v1902, %v1909
        %v1912 = vunpack.c.l.s4 1934713408
        %v1913 = vunpack.c.0.s8 %v1912
        %v1914 = vperm.slane %v1908, %v1913
        %v1916 = vunpack.c.l.s4 1934713408
        %v1917 = vunpack.c.0.s8 %v1916
        %v1918 = vperm.slane %v1910, %v1917
        %v1919 = vrot.slane %v1906, 4
        %v1920 = vsel %vm1387, %v1919, %v1894
        %v1921 = vrot.slane %v1894, 4
        %v1922 = vsel %vm1387, %v1906, %v1921
        %v1924 = vunpack.c.l.s4 1934713408
        %v1925 = vunpack.c.0.s8 %v1924
        %v1926 = vperm.slane %v1920, %v1925
        %v1928 = vunpack.c.l.s4 1934713408
        %v1929 = vunpack.c.0.s8 %v1928
        %v1930 = vperm.slane %v1922, %v1929
        %v1931 = vrot.slane %v1914, 4
        %v1932 = vsel %vm1387, 0.0, %v1931
        %v1933 = vrot.slane %v1918, 4
        %v1934 = vsel %vm1387, 0.0, %v1933
        %v1935 = vrot.slane %v1926, 4
        %v1936 = vsel %vm1387, 0.0, %v1935
        %v1937 = vrot.slane %v1930, 4
        %v1938 = vsel %vm1387, 0.0, %v1937
        %v1939 = vrot.slane %v1862, 4
        %v1940 = vsel %vm1387, %v1939, %v1339
        %v1941 = vrot.slane %v1339, 4
        %v1942 = vsel %vm1387, %v1862, %v1941
        %v1944 = vunpack.c.l.s4 1983009808
        %v1945 = vunpack.c.0.s8 %v1944
        %v1946 = vperm.slane %v1940, %v1945
        %v1948 = vunpack.c.l.s4 1983009808
        %v1949 = vunpack.c.0.s8 %v1948
        %v1950 = vperm.slane %v1942, %v1949
        %v1951 = vrot.slane %v1874, 4
        %v1952 = vsel %vm1387, %v1951, %v1850
        %v1953 = vrot.slane %v1850, 4
        %v1954 = vsel %vm1387, %v1874, %v1953
        %v1956 = vunpack.c.l.s4 1983009808
        %v1957 = vunpack.c.0.s8 %v1956
        %v1958 = vperm.slane %v1952, %v1957
        %v1960 = vunpack.c.l.s4 1983009808
        %v1961 = vunpack.c.0.s8 %v1960
        %v1962 = vperm.slane %v1954, %v1961
        %v1963 = vrot.slane %v1958, 4
        %v1964 = vsel %vm1387, %v1963, %v1946
        %v1965 = vrot.slane %v1946, 4
        %v1966 = vsel %vm1387, %v1958, %v1965
        %v1968 = vunpack.c.l.s4 1934713408
        %v1969 = vunpack.c.0.s8 %v1968
        %v1970 = vperm.slane %v1964, %v1969
        %v1972 = vunpack.c.l.s4 1934713408
        %v1973 = vunpack.c.0.s8 %v1972
        %v1974 = vperm.slane %v1966, %v1973
        %v1975 = vrot.slane %v1962, 4
        %v1976 = vsel %vm1387, %v1975, %v1950
        %v1977 = vrot.slane %v1950, 4
        %v1978 = vsel %vm1387, %v1962, %v1977
        %v1980 = vunpack.c.l.s4 1934713408
        %v1981 = vunpack.c.0.s8 %v1980
        %v1982 = vperm.slane %v1976, %v1981
        %v1984 = vunpack.c.l.s4 1934713408
        %v1985 = vunpack.c.0.s8 %v1984
        %v1986 = vperm.slane %v1978, %v1985
        %v1987 = vrot.slane %v1970, 4
        %v1988 = vsel %vm1387, 0.0, %v1987
        %v1989 = vrot.slane %v1974, 4
        %v1990 = vsel %vm1387, 0.0, %v1989
        %v1991 = vrot.slane %v1982, 4
        %v1992 = vsel %vm1387, 0.0, %v1991
        %v1993 = vrot.slane %v1986, 4
        %v1994 = vsel %vm1387, 0.0, %v1993
        %v1995 = vrot.slane %v1864, 4
        %v1996 = vsel %vm1387, %v1995, %v1342
        %v1997 = vrot.slane %v1342, 4
        %v1998 = vsel %vm1387, %v1864, %v1997
        %v2000 = vunpack.c.l.s4 1983009808
        %v2001 = vunpack.c.0.s8 %v2000
        %v2002 = vperm.slane %v1996, %v2001
        %v2004 = vunpack.c.l.s4 1983009808
        %v2005 = vunpack.c.0.s8 %v2004
        %v2006 = vperm.slane %v1998, %v2005
        %v2007 = vrot.slane %v1876, 4
        %v2008 = vsel %vm1387, %v2007, %v1852
        %v2009 = vrot.slane %v1852, 4
        %v2010 = vsel %vm1387, %v1876, %v2009
        %v2012 = vunpack.c.l.s4 1983009808
        %v2013 = vunpack.c.0.s8 %v2012
        %v2014 = vperm.slane %v2008, %v2013
        %v2016 = vunpack.c.l.s4 1983009808
        %v2017 = vunpack.c.0.s8 %v2016
        %v2018 = vperm.slane %v2010, %v2017
        %v2019 = vrot.slane %v2014, 4
        %v2020 = vsel %vm1387, %v2019, %v2002
        %v2021 = vrot.slane %v2002, 4
        %v2022 = vsel %vm1387, %v2014, %v2021
        %v2024 = vunpack.c.l.s4 1934713408
        %v2025 = vunpack.c.0.s8 %v2024
        %v2026 = vperm.slane %v2020, %v2025
        %v2028 = vunpack.c.l.s4 1934713408
        %v2029 = vunpack.c.0.s8 %v2028
        %v2030 = vperm.slane %v2022, %v2029
        %v2031 = vrot.slane %v2018, 4
        %v2032 = vsel %vm1387, %v2031, %v2006
        %v2033 = vrot.slane %v2006, 4
        %v2034 = vsel %vm1387, %v2018, %v2033
        %v2036 = vunpack.c.l.s4 1934713408
        %v2037 = vunpack.c.0.s8 %v2036
        %v2038 = vperm.slane %v2032, %v2037
        %v2040 = vunpack.c.l.s4 1934713408
        %v2041 = vunpack.c.0.s8 %v2040
        %v2042 = vperm.slane %v2034, %v2041
        %v2043 = vrot.slane %v2026, 4
        %v2044 = vsel %vm1387, 0.0, %v2043
        %v2045 = vrot.slane %v2030, 4
        %v2046 = vsel %vm1387, 0.0, %v2045
        %v2047 = vrot.slane %v2038, 4
        %v2048 = vsel %vm1387, 0.0, %v2047
        %v2049 = vrot.slane %v2042, 4
        %v2050 = vsel %vm1387, 0.0, %v2049
        %v2051 = vrot.slane %v1866, 4
        %v2052 = vsel %vm1387, %v2051, %v1344
        %v2053 = vrot.slane %v1344, 4
        %v2054 = vsel %vm1387, %v1866, %v2053
        %v2056 = vunpack.c.l.s4 1983009808
        %v2057 = vunpack.c.0.s8 %v2056
        %v2058 = vperm.slane %v2052, %v2057
        %v2060 = vunpack.c.l.s4 1983009808
        %v2061 = vunpack.c.0.s8 %v2060
        %v2062 = vperm.slane %v2054, %v2061
        %v2063 = vrot.slane %v1878, 4
        %v2064 = vsel %vm1387, %v2063, %v1854
        %v2065 = vrot.slane %v1854, 4
        %v2066 = vsel %vm1387, %v1878, %v2065
        %v2068 = vunpack.c.l.s4 1983009808
        %v2069 = vunpack.c.0.s8 %v2068
        %v2070 = vperm.slane %v2064, %v2069
        %v2072 = vunpack.c.l.s4 1983009808
        %v2073 = vunpack.c.0.s8 %v2072
        %v2074 = vperm.slane %v2066, %v2073
        %v2075 = vrot.slane %v2070, 4
        %v2076 = vsel %vm1387, %v2075, %v2058
        %v2077 = vrot.slane %v2058, 4
        %v2078 = vsel %vm1387, %v2070, %v2077
        %v2080 = vunpack.c.l.s4 1934713408
        %v2081 = vunpack.c.0.s8 %v2080
        %v2082 = vperm.slane %v2076, %v2081
        %v2084 = vunpack.c.l.s4 1934713408
        %v2085 = vunpack.c.0.s8 %v2084
        %v2086 = vperm.slane %v2078, %v2085
        %v2087 = vrot.slane %v2074, 4
        %v2088 = vsel %vm1387, %v2087, %v2062
        %v2089 = vrot.slane %v2062, 4
        %v2090 = vsel %vm1387, %v2074, %v2089
        %v2092 = vunpack.c.l.s4 1934713408
        %v2093 = vunpack.c.0.s8 %v2092
        %v2094 = vperm.slane %v2088, %v2093
        %v2096 = vunpack.c.l.s4 1934713408
        %v2097 = vunpack.c.0.s8 %v2096
        %v2098 = vperm.slane %v2090, %v2097
        %v2099 = vrot.slane %v2082, 4
        %v2100 = vsel %vm1387, 0.0, %v2099
        %v2101 = vrot.slane %v2086, 4
        %v2102 = vsel %vm1387, 0.0, %v2101
        %v2103 = vrot.slane %v2094, 4
        %v2104 = vsel %vm1387, 0.0, %v2103
        %v2105 = vrot.slane %v2098, 4
        %v2106 = vsel %vm1387, 0.0, %v2105
        %v2107 = vsel %vm1387, %v1933, %v1914
        %v2109 = vunpack.c.l.s4 1983009808
        %v2110 = vunpack.c.0.s8 %v2109
        %v2111 = vperm.slane %v2107, %v2110
        %v2112 = vrot.slane %v1934, 4
        %v2113 = vsel %vm1387, %v2112, %v1932
        %v2115 = vunpack.c.l.s4 1983009808
        %v2116 = vunpack.c.0.s8 %v2115
        %v2117 = vperm.slane %v2113, %v2116
        %v2118 = vsel %vm1387, %v1937, %v1926
        %v2120 = vunpack.c.l.s4 1983009808
        %v2121 = vunpack.c.0.s8 %v2120
        %v2122 = vperm.slane %v2118, %v2121
        %v2123 = vrot.slane %v1938, 4
        %v2124 = vsel %vm1387, %v2123, %v1936
        %v2126 = vunpack.c.l.s4 1983009808
        %v2127 = vunpack.c.0.s8 %v2126
        %v2128 = vperm.slane %v2124, %v2127
        %v2129 = vrot.slane %v2117, 4
        %v2130 = vsel %vm1387, %v2129, %v2111
        %v2131 = vrot.slane %v2111, 4
        %v2132 = vsel %vm1387, %v2117, %v2131
        %v2134 = vunpack.c.l.s4 1934713408
        %v2135 = vunpack.c.0.s8 %v2134
        %v2136 = vperm.slane %v2130, %v2135
        %v2138 = vunpack.c.l.s4 1934713408
        %v2139 = vunpack.c.0.s8 %v2138
        %v2140 = vperm.slane %v2132, %v2139
        %v2141 = vrot.slane %v2128, 4
        %v2142 = vsel %vm1387, %v2141, %v2122
        %v2143 = vrot.slane %v2122, 4
        %v2144 = vsel %vm1387, %v2128, %v2143
        %v2146 = vunpack.c.l.s4 1934713408
        %v2147 = vunpack.c.0.s8 %v2146
        %v2148 = vperm.slane %v2142, %v2147
        %v2150 = vunpack.c.l.s4 1934713408
        %v2151 = vunpack.c.0.s8 %v2150
        %v2152 = vperm.slane %v2144, %v2151
        %v2153 = vrot.slane %v2148, 4
        %v2154 = vsel %vm1387, %v2153, %v2136
        %v2155 = vrot.slane %v2136, 4
        %v2156 = vsel %vm1387, %v2148, %v2155
        %v2157 = vrot.slane %v2152, 4
        %v2158 = vsel %vm1387, %v2157, %v2140
        %v2159 = vrot.slane %v2140, 4
        %v2160 = vsel %vm1387, %v2152, %v2159
        %v2161 = vsel %vm1387, %v1989, %v1970
        %v2163 = vunpack.c.l.s4 1983009808
        %v2164 = vunpack.c.0.s8 %v2163
        %v2165 = vperm.slane %v2161, %v2164
        %v2166 = vrot.slane %v1990, 4
        %v2167 = vsel %vm1387, %v2166, %v1988
        %v2169 = vunpack.c.l.s4 1983009808
        %v2170 = vunpack.c.0.s8 %v2169
        %v2171 = vperm.slane %v2167, %v2170
        %v2172 = vsel %vm1387, %v1993, %v1982
        %v2174 = vunpack.c.l.s4 1983009808
        %v2175 = vunpack.c.0.s8 %v2174
        %v2176 = vperm.slane %v2172, %v2175
        %v2177 = vrot.slane %v1994, 4
        %v2178 = vsel %vm1387, %v2177, %v1992
        %v2180 = vunpack.c.l.s4 1983009808
        %v2181 = vunpack.c.0.s8 %v2180
        %v2182 = vperm.slane %v2178, %v2181
        %v2183 = vrot.slane %v2171, 4
        %v2184 = vsel %vm1387, %v2183, %v2165
        %v2185 = vrot.slane %v2165, 4
        %v2186 = vsel %vm1387, %v2171, %v2185
        %v2188 = vunpack.c.l.s4 1934713408
        %v2189 = vunpack.c.0.s8 %v2188
        %v2190 = vperm.slane %v2184, %v2189
        %v2192 = vunpack.c.l.s4 1934713408
        %v2193 = vunpack.c.0.s8 %v2192
        %v2194 = vperm.slane %v2186, %v2193
        %v2195 = vrot.slane %v2182, 4
        %v2196 = vsel %vm1387, %v2195, %v2176
        %v2197 = vrot.slane %v2176, 4
        %v2198 = vsel %vm1387, %v2182, %v2197
        %v2200 = vunpack.c.l.s4 1934713408
        %v2201 = vunpack.c.0.s8 %v2200
        %v2202 = vperm.slane %v2196, %v2201
        %v2204 = vunpack.c.l.s4 1934713408
        %v2205 = vunpack.c.0.s8 %v2204
        %v2206 = vperm.slane %v2198, %v2205
        %v2207 = vrot.slane %v2202, 4
        %v2208 = vsel %vm1387, %v2207, %v2190
        %v2209 = vrot.slane %v2190, 4
        %v2210 = vsel %vm1387, %v2202, %v2209
        %v2211 = vrot.slane %v2206, 4
        %v2212 = vsel %vm1387, %v2211, %v2194
        %v2213 = vrot.slane %v2194, 4
        %v2214 = vsel %vm1387, %v2206, %v2213
        %v2215 = vsel %vm1387, %v2045, %v2026
        %v2217 = vunpack.c.l.s4 1983009808
        %v2218 = vunpack.c.0.s8 %v2217
        %v2219 = vperm.slane %v2215, %v2218
        %v2220 = vrot.slane %v2046, 4
        %v2221 = vsel %vm1387, %v2220, %v2044
        %v2223 = vunpack.c.l.s4 1983009808
        %v2224 = vunpack.c.0.s8 %v2223
        %v2225 = vperm.slane %v2221, %v2224
        %v2226 = vsel %vm1387, %v2049, %v2038
        %v2228 = vunpack.c.l.s4 1983009808
        %v2229 = vunpack.c.0.s8 %v2228
        %v2230 = vperm.slane %v2226, %v2229
        %v2231 = vrot.slane %v2050, 4
        %v2232 = vsel %vm1387, %v2231, %v2048
        %v2234 = vunpack.c.l.s4 1983009808
        %v2235 = vunpack.c.0.s8 %v2234
        %v2236 = vperm.slane %v2232, %v2235
        %v2237 = vrot.slane %v2225, 4
        %v2238 = vsel %vm1387, %v2237, %v2219
        %v2239 = vrot.slane %v2219, 4
        %v2240 = vsel %vm1387, %v2225, %v2239
        %v2242 = vunpack.c.l.s4 1934713408
        %v2243 = vunpack.c.0.s8 %v2242
        %v2244 = vperm.slane %v2238, %v2243
        %v2246 = vunpack.c.l.s4 1934713408
        %v2247 = vunpack.c.0.s8 %v2246
        %v2248 = vperm.slane %v2240, %v2247
        %v2249 = vrot.slane %v2236, 4
        %v2250 = vsel %vm1387, %v2249, %v2230
        %v2251 = vrot.slane %v2230, 4
        %v2252 = vsel %vm1387, %v2236, %v2251
        %v2254 = vunpack.c.l.s4 1934713408
        %v2255 = vunpack.c.0.s8 %v2254
        %v2256 = vperm.slane %v2250, %v2255
        %v2258 = vunpack.c.l.s4 1934713408
        %v2259 = vunpack.c.0.s8 %v2258
        %v2260 = vperm.slane %v2252, %v2259
        %v2261 = vrot.slane %v2256, 4
        %v2262 = vsel %vm1387, %v2261, %v2244
        %v2263 = vrot.slane %v2244, 4
        %v2264 = vsel %vm1387, %v2256, %v2263
        %v2265 = vrot.slane %v2260, 4
        %v2266 = vsel %vm1387, %v2265, %v2248
        %v2267 = vrot.slane %v2248, 4
        %v2268 = vsel %vm1387, %v2260, %v2267
        %v2269 = vsel %vm1387, %v2101, %v2082
        %v2271 = vunpack.c.l.s4 1983009808
        %v2272 = vunpack.c.0.s8 %v2271
        %v2273 = vperm.slane %v2269, %v2272
        %v2274 = vrot.slane %v2102, 4
        %v2275 = vsel %vm1387, %v2274, %v2100
        %v2277 = vunpack.c.l.s4 1983009808
        %v2278 = vunpack.c.0.s8 %v2277
        %v2279 = vperm.slane %v2275, %v2278
        %v2280 = vsel %vm1387, %v2105, %v2094
        %v2282 = vunpack.c.l.s4 1983009808
        %v2283 = vunpack.c.0.s8 %v2282
        %v2284 = vperm.slane %v2280, %v2283
        %v2285 = vrot.slane %v2106, 4
        %v2286 = vsel %vm1387, %v2285, %v2104
        %v2288 = vunpack.c.l.s4 1983009808
        %v2289 = vunpack.c.0.s8 %v2288
        %v2290 = vperm.slane %v2286, %v2289
        %v2291 = vrot.slane %v2279, 4
        %v2292 = vsel %vm1387, %v2291, %v2273
        %v2293 = vrot.slane %v2273, 4
        %v2294 = vsel %vm1387, %v2279, %v2293
        %v2296 = vunpack.c.l.s4 1934713408
        %v2297 = vunpack.c.0.s8 %v2296
        %v2298 = vperm.slane %v2292, %v2297
        %v2300 = vunpack.c.l.s4 1934713408
        %v2301 = vunpack.c.0.s8 %v2300
        %v2302 = vperm.slane %v2294, %v2301
        %v2303 = vrot.slane %v2290, 4
        %v2304 = vsel %vm1387, %v2303, %v2284
        %v2305 = vrot.slane %v2284, 4
        %v2306 = vsel %vm1387, %v2290, %v2305
        %v2308 = vunpack.c.l.s4 1934713408
        %v2309 = vunpack.c.0.s8 %v2308
        %v2310 = vperm.slane %v2304, %v2309
        %v2312 = vunpack.c.l.s4 1934713408
        %v2313 = vunpack.c.0.s8 %v2312
        %v2314 = vperm.slane %v2306, %v2313
        %v2315 = vrot.slane %v2310, 4
        %v2316 = vsel %vm1387, %v2315, %v2298
        %v2317 = vrot.slane %v2298, 4
        %v2318 = vsel %vm1387, %v2310, %v2317
        %v2319 = vrot.slane %v2314, 4
        %v2320 = vsel %vm1387, %v2319, %v2302
        %v2321 = vrot.slane %v2302, 4
        %v2322 = vsel %vm1387, %v2314, %v2321
        %v2323 = vpack.c.bf16 %v2154, %v2154
        %v2324 = vpack.c.bf16 %v2208, %v2208
        %v2325 = vpack.c.bf16 %v2262, %v2262
        %v2326 = vpack.c.bf16 %v2316, %v2316
        %v2327 = vpack.c.bf16 %v2156, %v2156
        %v2328 = vpack.c.bf16 %v2210, %v2210
        %v2329 = vpack.c.bf16 %v2264, %v2264
        %v2330 = vpack.c.bf16 %v2318, %v2318
        %v2331 = vpack.c.bf16 %v2158, %v2158
        %v2332 = vpack.c.bf16 %v2212, %v2212
        %v2333 = vpack.c.bf16 %v2266, %v2266
        %v2334 = vpack.c.bf16 %v2320, %v2320
        %v2335 = vpack.c.bf16 %v2160, %v2160
        %v2336 = vpack.c.bf16 %v2214, %v2214
        %v2337 = vpack.c.bf16 %v2268, %v2268
        %v2338 = vpack.c.bf16 %v2322, %v2322
        %v2339 = vld [vmem:[#allocation2] sm:$0xf]
        %v2340 = vld [vmem:[#allocation2 + $0x4] sm:$0xf]
        %v2341 = vld [vmem:[#allocation2 + $0x8] sm:$0xf]
        %v2342 = vld [vmem:[#allocation2 + $0xc] sm:$0xf]
        %v2343 = vld [vmem:[#allocation2 + $0x10] sm:$0xf]
        %v2344 = vld [vmem:[#allocation2 + $0x14] sm:$0xf]
        %v2345 = vld [vmem:[#allocation2 + $0x18] sm:$0xf]
        %v2346 = vld [vmem:[#allocation2 + $0x1c] sm:$0xf]
        %v2349 = vunpack.c.l.b16 %v2339
        %v2350 = vunpack.c.l.b16 %v2340
        %v2351 = vpack.c.b16 %v2350, %v2349
        %v2356 = vunpack.c.l.b16 %v1827
        %v2357 = vunpack.c.l.b16 %v1828
        %v2358 = vunpack.c.l.b16 %v1829
        %v2359 = vunpack.c.l.b16 %v1830
        %v2360 = vpack.c.b16 %v2357, %v2356
        %v2361 = vpack.c.b16 %v2359, %v2358
        %vm2362 = vcmask 261120
        %v2364 = vsel %vm2362, %v2351, 0
        %v2367 = vsel %vm2362, %v2360, 0
        %v2370 = vsel %vm2362, %v2361, 0
        %2372 = vmatpush.bf16.xpose.msra.mxu0 0
        %2373 = vmatpush.bf16.xpose.msra.mxu0 0
        %2374 = vmatpush.bf16.xpose.msra.mxu0 0
        %2375 = vmatpush.bf16.xpose.msra.mxu0 0
        %2376 = vmatpush.bf16.xpose.msra.mxu0 0
        %2377 = vmatpush.bf16.xpose.msra.mxu0 0
        %2378 = vmatpush.bf16.xpose.msra.mxu0 %v2370
        %2379 = vmatpush.bf16.xpose.msra.mxu0 %v2367
        %2380 = vmatmul.bf16.gmra.mxu0 %v2364
        %v2381 = vpop.f32.mrf.mxu0
        %v2382 = vadd.f32 0.0, %v2381
        %v2383 = vpop.f32.mrf.mxu0
        %v2384 = vadd.f32 0.0, %v2383
        %2385 = vdwg.mxu0
        %v2388 = vunpack.c.l.b16 %v2341
        %v2389 = vunpack.c.l.b16 %v2342
        %v2390 = vpack.c.b16 %v2389, %v2388
        %v2395 = vunpack.c.l.b16 %v1831
        %v2396 = vunpack.c.l.b16 %v1832
        %v2397 = vunpack.c.l.b16 %v1833
        %v2398 = vunpack.c.l.b16 %v1834
        %v2399 = vpack.c.b16 %v2396, %v2395
        %v2400 = vpack.c.b16 %v2398, %v2397
        %v2402 = vsel %vm2362, %v2390, 0
        %v2405 = vsel %vm2362, %v2399, 0
        %v2408 = vsel %vm2362, %v2400, 0
        %2410 = vmatpush.bf16.xpose.msra.mxu0 0
        %2411 = vmatpush.bf16.xpose.msra.mxu0 0
        %2412 = vmatpush.bf16.xpose.msra.mxu0 0
        %2413 = vmatpush.bf16.xpose.msra.mxu0 0
        %2414 = vmatpush.bf16.xpose.msra.mxu0 0
        %2415 = vmatpush.bf16.xpose.msra.mxu0 0
        %2416 = vmatpush.bf16.xpose.msra.mxu0 %v2408
        %2417 = vmatpush.bf16.xpose.msra.mxu0 %v2405
        %2418 = vmatmul.bf16.gmra.mxu0 %v2402
        %v2419 = vpop.f32.mrf.mxu0
        %v2420 = vadd.f32 0.0, %v2419
        %v2421 = vpop.f32.mrf.mxu0
        %v2422 = vadd.f32 0.0, %v2421
        %2423 = vdwg.mxu0
        %v2426 = vunpack.c.l.b16 %v2343
        %v2427 = vunpack.c.l.b16 %v2344
        %v2428 = vpack.c.b16 %v2427, %v2426
        %v2433 = vunpack.c.l.b16 %v1835
        %v2434 = vunpack.c.l.b16 %v1836
        %v2435 = vunpack.c.l.b16 %v1837
        %v2436 = vunpack.c.l.b16 %v1838
        %v2437 = vpack.c.b16 %v2434, %v2433
        %v2438 = vpack.c.b16 %v2436, %v2435
        %v2440 = vsel %vm2362, %v2428, 0
        %v2443 = vsel %vm2362, %v2437, 0
        %v2446 = vsel %vm2362, %v2438, 0
        %2448 = vmatpush.bf16.xpose.msra.mxu0 0
        %2449 = vmatpush.bf16.xpose.msra.mxu0 0
        %2450 = vmatpush.bf16.xpose.msra.mxu0 0
        %2451 = vmatpush.bf16.xpose.msra.mxu0 0
        %2452 = vmatpush.bf16.xpose.msra.mxu0 0
        %2453 = vmatpush.bf16.xpose.msra.mxu0 0
        %2454 = vmatpush.bf16.xpose.msra.mxu0 %v2446
        %2455 = vmatpush.bf16.xpose.msra.mxu0 %v2443
        %2456 = vmatmul.bf16.gmra.mxu0 %v2440
        %v2457 = vpop.f32.mrf.mxu0
        %v2458 = vadd.f32 0.0, %v2457
        %v2459 = vpop.f32.mrf.mxu0
        %v2460 = vadd.f32 0.0, %v2459
        %2461 = vdwg.mxu0
        %v2464 = vunpack.c.l.b16 %v2345
        %v2465 = vunpack.c.l.b16 %v2346
        %v2466 = vpack.c.b16 %v2465, %v2464
        %v2471 = vunpack.c.l.b16 %v1839
        %v2472 = vunpack.c.l.b16 %v1840
        %v2473 = vunpack.c.l.b16 %v1841
        %v2474 = vunpack.c.l.b16 %v1842
        %v2475 = vpack.c.b16 %v2472, %v2471
        %v2476 = vpack.c.b16 %v2474, %v2473
        %v2478 = vsel %vm2362, %v2466, 0
        %v2481 = vsel %vm2362, %v2475, 0
        %v2484 = vsel %vm2362, %v2476, 0
        %2486 = vmatpush.bf16.xpose.msra.mxu0 0
        %2487 = vmatpush.bf16.xpose.msra.mxu0 0
        %2488 = vmatpush.bf16.xpose.msra.mxu0 0
        %2489 = vmatpush.bf16.xpose.msra.mxu0 0
        %2490 = vmatpush.bf16.xpose.msra.mxu0 0
        %2491 = vmatpush.bf16.xpose.msra.mxu0 0
        %2492 = vmatpush.bf16.xpose.msra.mxu0 %v2484
        %2493 = vmatpush.bf16.xpose.msra.mxu0 %v2481
        %2494 = vmatmul.bf16.gmra.mxu0 %v2478
        %v2495 = vpop.f32.mrf.mxu0
        %v2496 = vadd.f32 0.0, %v2495
        %v2497 = vpop.f32.mrf.mxu0
        %v2498 = vadd.f32 0.0, %v2497
        %2499 = vdwg.mxu0
        %v2500 = vld [vmem:[#allocation3] sm:$0xff]
        %v2501 = vld [vmem:[#allocation3 + $0x8] sm:$0xff]
        %v2502 = vld [vmem:[#allocation3 + $0x10] sm:$0xff]
        %v2503 = vld [vmem:[#allocation3 + $0x18] sm:$0xff]
        %v2504 = vld [vmem:[#allocation3 + $0x20] sm:$0xff]
        %v2505 = vld [vmem:[#allocation3 + $0x28] sm:$0xff]
        %v2506 = vld [vmem:[#allocation3 + $0x30] sm:$0xff]
        %v2507 = vld [vmem:[#allocation3 + $0x38] sm:$0xff]
        %v2508 = vsel %vm2362, %v2382, -inf
        %2509 = vmax.xlane.f32.xlu0 %v2508
        %v2510 = vpop.xlane.xlu0 %2509
        %v2511 = vsel %vm2362, %v2384, -inf
        %2512 = vmax.xlane.f32.xlu0 %v2511
        %v2513 = vpop.xlane.xlu0 %2512
        %v2514 = vsel %vm2362, %v2420, -inf
        %2515 = vmax.xlane.f32.xlu0 %v2514
        %v2516 = vpop.xlane.xlu0 %2515
        %v2517 = vsel %vm2362, %v2422, -inf
        %2518 = vmax.xlane.f32.xlu0 %v2517
        %v2519 = vpop.xlane.xlu0 %2518
        %v2520 = vsel %vm2362, %v2458, -inf
        %2521 = vmax.xlane.f32.xlu0 %v2520
        %v2522 = vpop.xlane.xlu0 %2521
        %v2523 = vsel %vm2362, %v2460, -inf
        %2524 = vmax.xlane.f32.xlu0 %v2523
        %v2525 = vpop.xlane.xlu0 %2524
        %v2526 = vsel %vm2362, %v2496, -inf
        %2527 = vmax.xlane.f32.xlu0 %v2526
        %v2528 = vpop.xlane.xlu0 %2527
        %v2529 = vsel %vm2362, %v2498, -inf
        %2530 = vmax.xlane.f32.xlu0 %v2529
        %v2531 = vpop.xlane.xlu0 %2530
        %v2532 = vmax.f32 %v2500, %v2510
        %v2533 = vmax.f32 %v2501, %v2513
        %v2534 = vmax.f32 %v2502, %v2516
        %v2535 = vmax.f32 %v2503, %v2519
        %v2536 = vmax.f32 %v2504, %v2522
        %v2537 = vmax.f32 %v2505, %v2525
        %v2538 = vmax.f32 %v2506, %v2528
        %v2539 = vmax.f32 %v2507, %v2531
        %v2540 = vsub.f32 %v2500, %v2532
        %v2541 = vsub.f32 %v2501, %v2533
        %v2542 = vsub.f32 %v2502, %v2534
        %v2543 = vsub.f32 %v2503, %v2535
        %v2544 = vsub.f32 %v2504, %v2536
        %v2545 = vsub.f32 %v2505, %v2537
        %v2546 = vsub.f32 %v2506, %v2538
        %v2547 = vsub.f32 %v2507, %v2539
        %v2548 = vmul.f32 %v2540, 1.442695
        %v2549 = vpow.pop %v2548
        %v2550 = vmul.f32 %v2541, 1.442695
        %v2551 = vpow.pop %v2550
        %v2552 = vmul.f32 %v2542, 1.442695
        %v2553 = vpow.pop %v2552
        %v2554 = vmul.f32 %v2543, 1.442695
        %v2555 = vpow.pop %v2554
        %v2556 = vmul.f32 %v2544, 1.442695
        %v2557 = vpow.pop %v2556
        %v2558 = vmul.f32 %v2545, 1.442695
        %v2559 = vpow.pop %v2558
        %v2560 = vmul.f32 %v2546, 1.442695
        %v2561 = vpow.pop %v2560
        %v2562 = vmul.f32 %v2547, 1.442695
        %v2563 = vpow.pop %v2562
        %2565 = vset.pattern.permute.xlu0 0
        %2566 = vperm.xlu0 %2565, %v2532
        %v2567 = vpop.permute.xlu0 %2566
        %2570 = vset.pattern.permute.xlu0 0
        %2571 = vperm.xlu0 %2570, %v2533
        %v2572 = vpop.permute.xlu0 %2571
        %2575 = vset.pattern.permute.xlu0 0
        %2576 = vperm.xlu0 %2575, %v2534
        %v2577 = vpop.permute.xlu0 %2576
        %2580 = vset.pattern.permute.xlu0 0
        %2581 = vperm.xlu0 %2580, %v2535
        %v2582 = vpop.permute.xlu0 %2581
        %2585 = vset.pattern.permute.xlu0 0
        %2586 = vperm.xlu0 %2585, %v2536
        %v2587 = vpop.permute.xlu0 %2586
        %2590 = vset.pattern.permute.xlu0 0
        %2591 = vperm.xlu0 %2590, %v2537
        %v2592 = vpop.permute.xlu0 %2591
        %2595 = vset.pattern.permute.xlu0 0
        %2596 = vperm.xlu0 %2595, %v2538
        %v2597 = vpop.permute.xlu0 %2596
        %2600 = vset.pattern.permute.xlu0 0
        %2601 = vperm.xlu0 %2600, %v2539
        %v2602 = vpop.permute.xlu0 %2601
        %v2604 = vsub.f32 %v2382, %v2567
        %v2605 = vsub.f32 %v2384, %v2572
        %v2606 = vsub.f32 %v2420, %v2577
        %v2607 = vsub.f32 %v2422, %v2582
        %v2608 = vsub.f32 %v2458, %v2587
        %v2609 = vsub.f32 %v2460, %v2592
        %v2610 = vsub.f32 %v2496, %v2597
        %v2611 = vsub.f32 %v2498, %v2602
        %v2612 = vmul.f32 %v2604, 1.442695
        %v2613 = vpow.pop %v2612
        %v2614 = vmul.f32 %v2605, 1.442695
        %v2615 = vpow.pop %v2614
        %v2616 = vmul.f32 %v2606, 1.442695
        %v2617 = vpow.pop %v2616
        %v2618 = vmul.f32 %v2607, 1.442695
        %v2619 = vpow.pop %v2618
        %v2620 = vmul.f32 %v2608, 1.442695
        %v2621 = vpow.pop %v2620
        %v2622 = vmul.f32 %v2609, 1.442695
        %v2623 = vpow.pop %v2622
        %v2624 = vmul.f32 %v2610, 1.442695
        %v2625 = vpow.pop %v2624
        %v2626 = vmul.f32 %v2611, 1.442695
        %v2627 = vpow.pop %v2626
        %v2628 = vld [vmem:[#allocation4] sm:$0xff]
        %v2629 = vld [vmem:[#allocation4 + $0x8] sm:$0xff]
        %v2630 = vld [vmem:[#allocation4 + $0x10] sm:$0xff]
        %v2631 = vld [vmem:[#allocation4 + $0x18] sm:$0xff]
        %v2632 = vld [vmem:[#allocation4 + $0x20] sm:$0xff]
        %v2633 = vld [vmem:[#allocation4 + $0x28] sm:$0xff]
        %v2634 = vld [vmem:[#allocation4 + $0x30] sm:$0xff]
        %v2635 = vld [vmem:[#allocation4 + $0x38] sm:$0xff]
        %v2636 = vmul.f32 %v2549, %v2628
        %v2637 = vmul.f32 %v2551, %v2629
        %v2638 = vmul.f32 %v2553, %v2630
        %v2639 = vmul.f32 %v2555, %v2631
        %v2640 = vmul.f32 %v2557, %v2632
        %v2641 = vmul.f32 %v2559, %v2633
        %v2642 = vmul.f32 %v2561, %v2634
        %v2643 = vmul.f32 %v2563, %v2635
        %v2644 = vsel %vm2362, %v2613, 0.0
        %2645 = vadd.xlane.f32.xlu0 %v2644
        %v2646 = vpop.xlane.xlu0 %2645
        %v2647 = vsel %vm2362, %v2615, 0.0
        %2648 = vadd.xlane.f32.xlu0 %v2647
        %v2649 = vpop.xlane.xlu0 %2648
        %v2650 = vsel %vm2362, %v2617, 0.0
        %2651 = vadd.xlane.f32.xlu0 %v2650
        %v2652 = vpop.xlane.xlu0 %2651
        %v2653 = vsel %vm2362, %v2619, 0.0
        %2654 = vadd.xlane.f32.xlu0 %v2653
        %v2655 = vpop.xlane.xlu0 %2654
        %v2656 = vsel %vm2362, %v2621, 0.0
        %2657 = vadd.xlane.f32.xlu0 %v2656
        %v2658 = vpop.xlane.xlu0 %2657
        %v2659 = vsel %vm2362, %v2623, 0.0
        %2660 = vadd.xlane.f32.xlu0 %v2659
        %v2661 = vpop.xlane.xlu0 %2660
        %v2662 = vsel %vm2362, %v2625, 0.0
        %2663 = vadd.xlane.f32.xlu0 %v2662
        %v2664 = vpop.xlane.xlu0 %2663
        %v2665 = vsel %vm2362, %v2627, 0.0
        %2666 = vadd.xlane.f32.xlu0 %v2665
        %v2667 = vpop.xlane.xlu0 %2666
        %v2668 = vadd.f32 %v2636, %v2646
        %v2669 = vadd.f32 %v2637, %v2649
        %v2670 = vadd.f32 %v2638, %v2652
        %v2671 = vadd.f32 %v2639, %v2655
        %v2672 = vadd.f32 %v2640, %v2658
        %v2673 = vadd.f32 %v2641, %v2661
        %v2674 = vadd.f32 %v2642, %v2664
        %v2675 = vadd.f32 %v2643, %v2667
        %vm2676 = vcmask 7168
        %2677 = vst.msk [vmem:[#allocation4] sm:$0xff] %vm2676, %v2668
        %2678 = vst.msk [vmem:[#allocation4 + $0x8] sm:$0xff] %vm2676, %v2669
        %2679 = vst.msk [vmem:[#allocation4 + $0x10] sm:$0xff] %vm2676, %v2670
        %2680 = vst.msk [vmem:[#allocation4 + $0x18] sm:$0xff] %vm2676, %v2671
        %2681 = vst.msk [vmem:[#allocation4 + $0x20] sm:$0xff] %vm2676, %v2672
        %2682 = vst.msk [vmem:[#allocation4 + $0x28] sm:$0xff] %vm2676, %v2673
        %2683 = vst.msk [vmem:[#allocation4 + $0x30] sm:$0xff] %vm2676, %v2674
        %2684 = vst.msk [vmem:[#allocation4 + $0x38] sm:$0xff] %vm2676, %v2675
        %v2685 = vld [vmem:[#allocation5] sm:$0xff]
        %v2686 = vld [vmem:[#allocation5 + $0x8] sm:$0xff]
        %v2687 = vld [vmem:[#allocation5 + $0x10] sm:$0xff]
        %v2688 = vld [vmem:[#allocation5 + $0x18] sm:$0xff]
        %v2689 = vld [vmem:[#allocation5 + $0x20] sm:$0xff]
        %v2690 = vld [vmem:[#allocation5 + $0x28] sm:$0xff]
        %v2691 = vld [vmem:[#allocation5 + $0x30] sm:$0xff]
        %v2692 = vld [vmem:[#allocation5 + $0x38] sm:$0xff]
        %2694 = vset.pattern.permute.xlu0 0
        %2695 = vperm.xlu0 %2694, %v2549
        %v2696 = vpop.permute.xlu0 %2695
        %2699 = vset.pattern.permute.xlu0 0
        %2700 = vperm.xlu0 %2699, %v2551
        %v2701 = vpop.permute.xlu0 %2700
        %2704 = vset.pattern.permute.xlu0 0
        %2705 = vperm.xlu0 %2704, %v2553
        %v2706 = vpop.permute.xlu0 %2705
        %2709 = vset.pattern.permute.xlu0 0
        %2710 = vperm.xlu0 %2709, %v2555
        %v2711 = vpop.permute.xlu0 %2710
        %2714 = vset.pattern.permute.xlu0 0
        %2715 = vperm.xlu0 %2714, %v2557
        %v2716 = vpop.permute.xlu0 %2715
        %2719 = vset.pattern.permute.xlu0 0
        %2720 = vperm.xlu0 %2719, %v2559
        %v2721 = vpop.permute.xlu0 %2720
        %2724 = vset.pattern.permute.xlu0 0
        %2725 = vperm.xlu0 %2724, %v2561
        %v2726 = vpop.permute.xlu0 %2725
        %2729 = vset.pattern.permute.xlu0 0
        %2730 = vperm.xlu0 %2729, %v2563
        %v2731 = vpop.permute.xlu0 %2730
        %v2733 = vmul.f32 %v2696, %v2685
        %v2734 = vmul.f32 %v2701, %v2686
        %v2735 = vmul.f32 %v2706, %v2687
        %v2736 = vmul.f32 %v2711, %v2688
        %v2737 = vmul.f32 %v2716, %v2689
        %v2738 = vmul.f32 %v2721, %v2690
        %v2739 = vmul.f32 %v2726, %v2691
        %v2740 = vmul.f32 %v2731, %v2692
        %v2741 = vpack.c.bf16 %v2613, %v2613
        %v2742 = vpack.c.bf16 %v2615, %v2615
        %v2743 = vpack.c.bf16 %v2617, %v2617
        %v2744 = vpack.c.bf16 %v2619, %v2619
        %v2745 = vpack.c.bf16 %v2621, %v2621
        %v2746 = vpack.c.bf16 %v2623, %v2623
        %v2747 = vpack.c.bf16 %v2625, %v2625
        %v2748 = vpack.c.bf16 %v2627, %v2627
        %v2751 = vunpack.c.l.b16 %v2741
        %v2752 = vunpack.c.l.b16 %v2742
        %v2753 = vpack.c.b16 %v2752, %v2751
        %v2758 = vunpack.c.l.b16 %v2323
        %v2759 = vunpack.c.l.b16 %v2324
        %v2760 = vunpack.c.l.b16 %v2325
        %v2761 = vunpack.c.l.b16 %v2326
        %v2762 = vpack.c.b16 %v2759, %v2758
        %v2763 = vpack.c.b16 %v2761, %v2760
        %v2767 = vsel %vm2362, %v2753, 0
        %2769 = vmatpush.bf16.msra.mxu0 0
        %2770 = vmatpush.bf16.msra.mxu0 0
        %2771 = vmatpush.bf16.msra.mxu0 0
        %2772 = vmatpush.bf16.msra.mxu0 0
        %2773 = vmatpush.bf16.msra.mxu0 0
        %2774 = vmatpush.bf16.msra.mxu0 0
        %2775 = vmatpush.bf16.msra.mxu0 %v2763
        %2776 = vmatpush.bf16.msra.mxu0 %v2762
        %2777 = vmatmul.bf16.gmra.mxu0 %v2767
        %v2778 = vpop.f32.mrf.mxu0
        %v2779 = vadd.f32 0.0, %v2778
        %v2780 = vpop.f32.mrf.mxu0
        %v2781 = vadd.f32 0.0, %v2780
        %2782 = vdwg.mxu0
        %v2785 = vunpack.c.l.b16 %v2743
        %v2786 = vunpack.c.l.b16 %v2744
        %v2787 = vpack.c.b16 %v2786, %v2785
        %v2792 = vunpack.c.l.b16 %v2327
        %v2793 = vunpack.c.l.b16 %v2328
        %v2794 = vunpack.c.l.b16 %v2329
        %v2795 = vunpack.c.l.b16 %v2330
        %v2796 = vpack.c.b16 %v2793, %v2792
        %v2797 = vpack.c.b16 %v2795, %v2794
        %v2801 = vsel %vm2362, %v2787, 0
        %2803 = vmatpush.bf16.msra.mxu0 0
        %2804 = vmatpush.bf16.msra.mxu0 0
        %2805 = vmatpush.bf16.msra.mxu0 0
        %2806 = vmatpush.bf16.msra.mxu0 0
        %2807 = vmatpush.bf16.msra.mxu0 0
        %2808 = vmatpush.bf16.msra.mxu0 0
        %2809 = vmatpush.bf16.msra.mxu0 %v2797
        %2810 = vmatpush.bf16.msra.mxu0 %v2796
        %2811 = vmatmul.bf16.gmra.mxu0 %v2801
        %v2812 = vpop.f32.mrf.mxu0
        %v2813 = vadd.f32 0.0, %v2812
        %v2814 = vpop.f32.mrf.mxu0
        %v2815 = vadd.f32 0.0, %v2814
        %2816 = vdwg.mxu0
        %v2819 = vunpack.c.l.b16 %v2745
        %v2820 = vunpack.c.l.b16 %v2746
        %v2821 = vpack.c.b16 %v2820, %v2819
        %v2826 = vunpack.c.l.b16 %v2331
        %v2827 = vunpack.c.l.b16 %v2332
        %v2828 = vunpack.c.l.b16 %v2333
        %v2829 = vunpack.c.l.b16 %v2334
        %v2830 = vpack.c.b16 %v2827, %v2826
        %v2831 = vpack.c.b16 %v2829, %v2828
        %v2835 = vsel %vm2362, %v2821, 0
        %2837 = vmatpush.bf16.msra.mxu0 0
        %2838 = vmatpush.bf16.msra.mxu0 0
        %2839 = vmatpush.bf16.msra.mxu0 0
        %2840 = vmatpush.bf16.msra.mxu0 0
        %2841 = vmatpush.bf16.msra.mxu0 0
        %2842 = vmatpush.bf16.msra.mxu0 0
        %2843 = vmatpush.bf16.msra.mxu0 %v2831
        %2844 = vmatpush.bf16.msra.mxu0 %v2830
        %2845 = vmatmul.bf16.gmra.mxu0 %v2835
        %v2846 = vpop.f32.mrf.mxu0
        %v2847 = vadd.f32 0.0, %v2846
        %v2848 = vpop.f32.mrf.mxu0
        %v2849 = vadd.f32 0.0, %v2848
        %2850 = vdwg.mxu0
        %v2853 = vunpack.c.l.b16 %v2747
        %v2854 = vunpack.c.l.b16 %v2748
        %v2855 = vpack.c.b16 %v2854, %v2853
        %v2860 = vunpack.c.l.b16 %v2335
        %v2861 = vunpack.c.l.b16 %v2336
        %v2862 = vunpack.c.l.b16 %v2337
        %v2863 = vunpack.c.l.b16 %v2338
        %v2864 = vpack.c.b16 %v2861, %v2860
        %v2865 = vpack.c.b16 %v2863, %v2862
        %v2869 = vsel %vm2362, %v2855, 0
        %2871 = vmatpush.bf16.msra.mxu0 0
        %2872 = vmatpush.bf16.msra.mxu0 0
        %2873 = vmatpush.bf16.msra.mxu0 0
        %2874 = vmatpush.bf16.msra.mxu0 0
        %2875 = vmatpush.bf16.msra.mxu0 0
        %2876 = vmatpush.bf16.msra.mxu0 0
        %2877 = vmatpush.bf16.msra.mxu0 %v2865
        %2878 = vmatpush.bf16.msra.mxu0 %v2864
        %2879 = vmatmul.bf16.gmra.mxu0 %v2869
        %v2880 = vpop.f32.mrf.mxu0
        %v2881 = vadd.f32 0.0, %v2880
        %v2882 = vpop.f32.mrf.mxu0
        %v2883 = vadd.f32 0.0, %v2882
        %2884 = vdwg.mxu0
        %v2885 = vadd.f32 %v2733, %v2779
        %v2886 = vadd.f32 %v2734, %v2781
        %v2887 = vadd.f32 %v2735, %v2813
        %v2888 = vadd.f32 %v2736, %v2815
        %v2889 = vadd.f32 %v2737, %v2847
        %v2890 = vadd.f32 %v2738, %v2849
        %v2891 = vadd.f32 %v2739, %v2881
        %v2892 = vadd.f32 %v2740, %v2883
        %2893 = vst.msk [vmem:[#allocation5] sm:$0xff] %vm2362, %v2885
        %2894 = vst.msk [vmem:[#allocation5 + $0x8] sm:$0xff] %vm2362, %v2886
        %2895 = vst.msk [vmem:[#allocation5 + $0x10] sm:$0xff] %vm2362, %v2887
        %2896 = vst.msk [vmem:[#allocation5 + $0x18] sm:$0xff] %vm2362, %v2888
        %2897 = vst.msk [vmem:[#allocation5 + $0x20] sm:$0xff] %vm2362, %v2889
        %2898 = vst.msk [vmem:[#allocation5 + $0x28] sm:$0xff] %vm2362, %v2890
        %2899 = vst.msk [vmem:[#allocation5 + $0x30] sm:$0xff] %vm2362, %v2891
        %2900 = vst.msk [vmem:[#allocation5 + $0x38] sm:$0xff] %vm2362, %v2892
        %2901 = vst.msk [vmem:[#allocation3] sm:$0xff] %vm2676, %v2532
        %2902 = vst.msk [vmem:[#allocation3 + $0x8] sm:$0xff] %vm2676, %v2533
        %2903 = vst.msk [vmem:[#allocation3 + $0x10] sm:$0xff] %vm2676, %v2534
        %2904 = vst.msk [vmem:[#allocation3 + $0x18] sm:$0xff] %vm2676, %v2535
        %2905 = vst.msk [vmem:[#allocation3 + $0x20] sm:$0xff] %vm2676, %v2536
        %2906 = vst.msk [vmem:[#allocation3 + $0x28] sm:$0xff] %vm2676, %v2537
        %2907 = vst.msk [vmem:[#allocation3 + $0x30] sm:$0xff] %vm2676, %v2538
        %2908 = vst.msk [vmem:[#allocation3 + $0x38] sm:$0xff] %vm2676, %v2539
        %p2909 = scmp.eq.s32.totalorder %s43, 1
        // Predicated region
        $region105: #{tpu_custom_call.1} parent=75 // pred_check
          %p2910 = pneg %p2909
        $region106: #{tpu_custom_call.1} parent=75 // pred_check_branch
          %2912 = sbr.rel (%p2910) target = $region108
        $region107: #{tpu_custom_call.1} parent=75 // pred_region
          %v2913 = vld [vmem:[#allocation4] sm:$0xff]
          %v2914 = vld [vmem:[#allocation4 + $0x8] sm:$0xff]
          %v2915 = vld [vmem:[#allocation4 + $0x10] sm:$0xff]
          %v2916 = vld [vmem:[#allocation4 + $0x18] sm:$0xff]
          %v2917 = vld [vmem:[#allocation4 + $0x20] sm:$0xff]
          %v2918 = vld [vmem:[#allocation4 + $0x28] sm:$0xff]
          %v2919 = vld [vmem:[#allocation4 + $0x30] sm:$0xff]
          %v2920 = vld [vmem:[#allocation4 + $0x38] sm:$0xff]
          %v2921 = vrcp.pop %v2913
          %v2922 = vrcp.pop %v2914
          %v2923 = vrcp.pop %v2915
          %v2924 = vrcp.pop %v2916
          %v2925 = vrcp.pop %v2917
          %v2926 = vrcp.pop %v2918
          %v2927 = vrcp.pop %v2919
          %v2928 = vrcp.pop %v2920
          %v2929 = vld [vmem:[#allocation5] sm:$0xff]
          %v2930 = vld [vmem:[#allocation5 + $0x8] sm:$0xff]
          %v2931 = vld [vmem:[#allocation5 + $0x10] sm:$0xff]
          %v2932 = vld [vmem:[#allocation5 + $0x18] sm:$0xff]
          %v2933 = vld [vmem:[#allocation5 + $0x20] sm:$0xff]
          %v2934 = vld [vmem:[#allocation5 + $0x28] sm:$0xff]
          %v2935 = vld [vmem:[#allocation5 + $0x30] sm:$0xff]
          %v2936 = vld [vmem:[#allocation5 + $0x38] sm:$0xff]
          %2938 = vset.pattern.permute.xlu0 0
          %2939 = vperm.xlu0 %2938, %v2921
          %v2940 = vpop.permute.xlu0 %2939
          %2943 = vset.pattern.permute.xlu0 0
          %2944 = vperm.xlu0 %2943, %v2922
          %v2945 = vpop.permute.xlu0 %2944
          %2948 = vset.pattern.permute.xlu0 0
          %2949 = vperm.xlu0 %2948, %v2923
          %v2950 = vpop.permute.xlu0 %2949
          %2953 = vset.pattern.permute.xlu0 0
          %2954 = vperm.xlu0 %2953, %v2924
          %v2955 = vpop.permute.xlu0 %2954
          %2958 = vset.pattern.permute.xlu0 0
          %2959 = vperm.xlu0 %2958, %v2925
          %v2960 = vpop.permute.xlu0 %2959
          %2963 = vset.pattern.permute.xlu0 0
          %2964 = vperm.xlu0 %2963, %v2926
          %v2965 = vpop.permute.xlu0 %2964
          %2968 = vset.pattern.permute.xlu0 0
          %2969 = vperm.xlu0 %2968, %v2927
          %v2970 = vpop.permute.xlu0 %2969
          %2973 = vset.pattern.permute.xlu0 0
          %2974 = vperm.xlu0 %2973, %v2928
          %v2975 = vpop.permute.xlu0 %2974
          %v2977 = vmul.f32 %v2929, %v2940
          %v2978 = vmul.f32 %v2930, %v2945
          %v2979 = vmul.f32 %v2931, %v2950
          %v2980 = vmul.f32 %v2932, %v2955
          %v2981 = vmul.f32 %v2933, %v2960
          %v2982 = vmul.f32 %v2934, %v2965
          %v2983 = vmul.f32 %v2935, %v2970
          %v2984 = vmul.f32 %v2936, %v2975
          %v2985 = vrot.slane %v2981, 4
          %v2986 = vsel %vm1387, %v2985, %v2977
          %v2987 = vrot.slane %v2977, 4
          %v2988 = vsel %vm1387, %v2981, %v2987
          %v2990 = vunpack.c.l.s4 1983009808
          %v2991 = vunpack.c.0.s8 %v2990
          %v2992 = vperm.slane %v2986, %v2991
          %v2994 = vunpack.c.l.s4 1983009808
          %v2995 = vunpack.c.0.s8 %v2994
          %v2996 = vperm.slane %v2988, %v2995
          %v2997 = vrot.slane %v2983, 4
          %v2998 = vsel %vm1387, %v2997, %v2979
          %v2999 = vrot.slane %v2979, 4
          %v3000 = vsel %vm1387, %v2983, %v2999
          %v3002 = vunpack.c.l.s4 1983009808
          %v3003 = vunpack.c.0.s8 %v3002
          %v3004 = vperm.slane %v2998, %v3003
          %v3006 = vunpack.c.l.s4 1983009808
          %v3007 = vunpack.c.0.s8 %v3006
          %v3008 = vperm.slane %v3000, %v3007
          %v3009 = vrot.slane %v3004, 4
          %v3010 = vsel %vm1387, %v3009, %v2992
          %v3011 = vrot.slane %v2992, 4
          %v3012 = vsel %vm1387, %v3004, %v3011
          %v3014 = vunpack.c.l.s4 1934713408
          %v3015 = vunpack.c.0.s8 %v3014
          %v3016 = vperm.slane %v3010, %v3015
          %v3018 = vunpack.c.l.s4 1934713408
          %v3019 = vunpack.c.0.s8 %v3018
          %v3020 = vperm.slane %v3012, %v3019
          %v3021 = vrot.slane %v3008, 4
          %v3022 = vsel %vm1387, %v3021, %v2996
          %v3023 = vrot.slane %v2996, 4
          %v3024 = vsel %vm1387, %v3008, %v3023
          %v3026 = vunpack.c.l.s4 1934713408
          %v3027 = vunpack.c.0.s8 %v3026
          %v3028 = vperm.slane %v3022, %v3027
          %v3030 = vunpack.c.l.s4 1934713408
          %v3031 = vunpack.c.0.s8 %v3030
          %v3032 = vperm.slane %v3024, %v3031
          %v3033 = vrot.slane %v3016, 4
          %v3034 = vsel %vm1387, 0.0, %v3033
          %v3035 = vrot.slane %v3020, 4
          %v3036 = vsel %vm1387, 0.0, %v3035
          %v3037 = vrot.slane %v3028, 4
          %v3038 = vsel %vm1387, 0.0, %v3037
          %v3039 = vrot.slane %v3032, 4
          %v3040 = vsel %vm1387, 0.0, %v3039
          %v3041 = vrot.slane %v2982, 4
          %v3042 = vsel %vm1387, %v3041, %v2978
          %v3043 = vrot.slane %v2978, 4
          %v3044 = vsel %vm1387, %v2982, %v3043
          %v3046 = vunpack.c.l.s4 1983009808
          %v3047 = vunpack.c.0.s8 %v3046
          %v3048 = vperm.slane %v3042, %v3047
          %v3050 = vunpack.c.l.s4 1983009808
          %v3051 = vunpack.c.0.s8 %v3050
          %v3052 = vperm.slane %v3044, %v3051
          %v3053 = vrot.slane %v2984, 4
          %v3054 = vsel %vm1387, %v3053, %v2980
          %v3055 = vrot.slane %v2980, 4
          %v3056 = vsel %vm1387, %v2984, %v3055
          %v3058 = vunpack.c.l.s4 1983009808
          %v3059 = vunpack.c.0.s8 %v3058
          %v3060 = vperm.slane %v3054, %v3059
          %v3062 = vunpack.c.l.s4 1983009808
          %v3063 = vunpack.c.0.s8 %v3062
          %v3064 = vperm.slane %v3056, %v3063
          %v3065 = vrot.slane %v3060, 4
          %v3066 = vsel %vm1387, %v3065, %v3048
          %v3067 = vrot.slane %v3048, 4
          %v3068 = vsel %vm1387, %v3060, %v3067
          %v3070 = vunpack.c.l.s4 1934713408
          %v3071 = vunpack.c.0.s8 %v3070
          %v3072 = vperm.slane %v3066, %v3071
          %v3074 = vunpack.c.l.s4 1934713408
          %v3075 = vunpack.c.0.s8 %v3074
          %v3076 = vperm.slane %v3068, %v3075
          %v3077 = vrot.slane %v3064, 4
          %v3078 = vsel %vm1387, %v3077, %v3052
          %v3079 = vrot.slane %v3052, 4
          %v3080 = vsel %vm1387, %v3064, %v3079
          %v3082 = vunpack.c.l.s4 1934713408
          %v3083 = vunpack.c.0.s8 %v3082
          %v3084 = vperm.slane %v3078, %v3083
          %v3086 = vunpack.c.l.s4 1934713408
          %v3087 = vunpack.c.0.s8 %v3086
          %v3088 = vperm.slane %v3080, %v3087
          %v3089 = vrot.slane %v3072, 4
          %v3090 = vsel %vm1387, 0.0, %v3089
          %v3091 = vrot.slane %v3076, 4
          %v3092 = vsel %vm1387, 0.0, %v3091
          %v3093 = vrot.slane %v3084, 4
          %v3094 = vsel %vm1387, 0.0, %v3093
          %v3095 = vrot.slane %v3088, 4
          %v3096 = vsel %vm1387, 0.0, %v3095
          %v3097 = vsel %vm1387, %v3035, %v3016
          %v3099 = vunpack.c.l.s4 1983009808
          %v3100 = vunpack.c.0.s8 %v3099
          %v3101 = vperm.slane %v3097, %v3100
          %v3102 = vrot.slane %v3036, 4
          %v3103 = vsel %vm1387, %v3102, %v3034
          %v3105 = vunpack.c.l.s4 1983009808
          %v3106 = vunpack.c.0.s8 %v3105
          %v3107 = vperm.slane %v3103, %v3106
          %v3108 = vsel %vm1387, %v3039, %v3028
          %v3110 = vunpack.c.l.s4 1983009808
          %v3111 = vunpack.c.0.s8 %v3110
          %v3112 = vperm.slane %v3108, %v3111
          %v3113 = vrot.slane %v3040, 4
          %v3114 = vsel %vm1387, %v3113, %v3038
          %v3116 = vunpack.c.l.s4 1983009808
          %v3117 = vunpack.c.0.s8 %v3116
          %v3118 = vperm.slane %v3114, %v3117
          %v3119 = vrot.slane %v3107, 4
          %v3120 = vsel %vm1387, %v3119, %v3101
          %v3121 = vrot.slane %v3101, 4
          %v3122 = vsel %vm1387, %v3107, %v3121
          %v3124 = vunpack.c.l.s4 1934713408
          %v3125 = vunpack.c.0.s8 %v3124
          %v3126 = vperm.slane %v3120, %v3125
          %v3128 = vunpack.c.l.s4 1934713408
          %v3129 = vunpack.c.0.s8 %v3128
          %v3130 = vperm.slane %v3122, %v3129
          %v3131 = vrot.slane %v3118, 4
          %v3132 = vsel %vm1387, %v3131, %v3112
          %v3133 = vrot.slane %v3112, 4
          %v3134 = vsel %vm1387, %v3118, %v3133
          %v3136 = vunpack.c.l.s4 1934713408
          %v3137 = vunpack.c.0.s8 %v3136
          %v3138 = vperm.slane %v3132, %v3137
          %v3140 = vunpack.c.l.s4 1934713408
          %v3141 = vunpack.c.0.s8 %v3140
          %v3142 = vperm.slane %v3134, %v3141
          %v3143 = vrot.slane %v3138, 4
          %v3144 = vsel %vm1387, %v3143, %v3126
          %v3145 = vrot.slane %v3126, 4
          %v3146 = vsel %vm1387, %v3138, %v3145
          %v3147 = vrot.slane %v3142, 4
          %v3148 = vsel %vm1387, %v3147, %v3130
          %v3149 = vrot.slane %v3130, 4
          %v3150 = vsel %vm1387, %v3142, %v3149
          %v3151 = vsel %vm1387, %v3091, %v3072
          %v3153 = vunpack.c.l.s4 1983009808
          %v3154 = vunpack.c.0.s8 %v3153
          %v3155 = vperm.slane %v3151, %v3154
          %v3156 = vrot.slane %v3092, 4
          %v3157 = vsel %vm1387, %v3156, %v3090
          %v3159 = vunpack.c.l.s4 1983009808
          %v3160 = vunpack.c.0.s8 %v3159
          %v3161 = vperm.slane %v3157, %v3160
          %v3162 = vsel %vm1387, %v3095, %v3084
          %v3164 = vunpack.c.l.s4 1983009808
          %v3165 = vunpack.c.0.s8 %v3164
          %v3166 = vperm.slane %v3162, %v3165
          %v3167 = vrot.slane %v3096, 4
          %v3168 = vsel %vm1387, %v3167, %v3094
          %v3170 = vunpack.c.l.s4 1983009808
          %v3171 = vunpack.c.0.s8 %v3170
          %v3172 = vperm.slane %v3168, %v3171
          %v3173 = vrot.slane %v3161, 4
          %v3174 = vsel %vm1387, %v3173, %v3155
          %v3175 = vrot.slane %v3155, 4
          %v3176 = vsel %vm1387, %v3161, %v3175
          %v3178 = vunpack.c.l.s4 1934713408
          %v3179 = vunpack.c.0.s8 %v3178
          %v3180 = vperm.slane %v3174, %v3179
          %v3182 = vunpack.c.l.s4 1934713408
          %v3183 = vunpack.c.0.s8 %v3182
          %v3184 = vperm.slane %v3176, %v3183
          %v3185 = vrot.slane %v3172, 4
          %v3186 = vsel %vm1387, %v3185, %v3166
          %v3187 = vrot.slane %v3166, 4
          %v3188 = vsel %vm1387, %v3172, %v3187
          %v3190 = vunpack.c.l.s4 1934713408
          %v3191 = vunpack.c.0.s8 %v3190
          %v3192 = vperm.slane %v3186, %v3191
          %v3194 = vunpack.c.l.s4 1934713408
          %v3195 = vunpack.c.0.s8 %v3194
          %v3196 = vperm.slane %v3188, %v3195
          %v3197 = vrot.slane %v3192, 4
          %v3198 = vsel %vm1387, %v3197, %v3180
          %v3199 = vrot.slane %v3180, 4
          %v3200 = vsel %vm1387, %v3192, %v3199
          %v3201 = vrot.slane %v3196, 4
          %v3202 = vsel %vm1387, %v3201, %v3184
          %v3203 = vrot.slane %v3184, 4
          %v3204 = vsel %vm1387, %v3196, %v3203
          %3207 = vrot.lane.b32.xlu0 %v3146, 32
          %v3208 = vpop.permute.xlu0 %3207
          %3209 = vrot.lane.b32.xlu0 %v3200, 32
          %v3210 = vpop.permute.xlu0 %3209
          %3215 = vrot.lane.b32.xlu0 %v3148, 64
          %v3216 = vpop.permute.xlu0 %3215
          %3217 = vrot.lane.b32.xlu0 %v3202, 64
          %v3218 = vpop.permute.xlu0 %3217
          %3223 = vrot.lane.b32.xlu0 %v3150, 96
          %v3224 = vpop.permute.xlu0 %3223
          %3225 = vrot.lane.b32.xlu0 %v3204, 96
          %v3226 = vpop.permute.xlu0 %3225
          %v3229 = vsel %vm2362, %v3144, %v3208
          %v3230 = vsel %vm2362, %v3198, %v3210
          %vm3231 = vcmask 523264
          %v3232 = vsel %vm3231, %v3229, %v3216
          %v3233 = vsel %vm3231, %v3230, %v3218
          %vm3234 = vcmask 785408
          %v3235 = vsel %vm3234, %v3232, %v3224
          %v3236 = vsel %vm3234, %v3233, %v3226
          %v3237 = vpack.c.bf16 %v3236, %v3235
          %v3238 = vld [vmem:[#allocation15] sm:$0xf]
          %v3239 = vld [vmem:[#allocation15 + $0x4] sm:$0xf]
          %v3240 = vld [vmem:[#allocation15 + $0x8] sm:$0xf]
          %v3241 = vld [vmem:[#allocation15 + $0xc] sm:$0xf]
          %v3242 = vld [vmem:[#allocation15 + $0x10] sm:$0xf]
          %v3243 = vld [vmem:[#allocation15 + $0x14] sm:$0xf]
          %v3244 = vld [vmem:[#allocation15 + $0x18] sm:$0xf]
          %v3245 = vld [vmem:[#allocation15 + $0x1c] sm:$0xf]
          %v3246 = vld [vmem:[#allocation15 + $0x20] sm:$0xf]
          %v3247 = vld [vmem:[#allocation15 + $0x24] sm:$0xf]
          %v3248 = vld [vmem:[#allocation15 + $0x28] sm:$0xf]
          %v3249 = vld [vmem:[#allocation15 + $0x2c] sm:$0xf]
          %v3250 = vld [vmem:[#allocation15 + $0x30] sm:$0xf]
          %v3251 = vld [vmem:[#allocation15 + $0x34] sm:$0xf]
          %v3252 = vld [vmem:[#allocation15 + $0x38] sm:$0xf]
          %v3253 = vld [vmem:[#allocation15 + $0x3c] sm:$0xf]
          %v3254 = vld [vmem:[%s13] sm:$0x1]
          %v3256 = vperm.slane %v3254, 0
          %v3274 = vunpack.c.l.b16 %v3238
          %v3275 = vunpack.c.l.b16 %v3239
          %v3276 = vunpack.c.l.b16 %v3240
          %v3277 = vunpack.c.l.b16 %v3241
          %v3278 = vunpack.c.l.b16 %v3242
          %v3279 = vunpack.c.l.b16 %v3243
          %v3280 = vunpack.c.l.b16 %v3244
          %v3281 = vunpack.c.l.b16 %v3245
          %v3282 = vunpack.c.l.b16 %v3246
          %v3283 = vunpack.c.l.b16 %v3247
          %v3284 = vunpack.c.l.b16 %v3248
          %v3285 = vunpack.c.l.b16 %v3249
          %v3286 = vunpack.c.l.b16 %v3250
          %v3287 = vunpack.c.l.b16 %v3251
          %v3288 = vunpack.c.l.b16 %v3252
          %v3289 = vunpack.c.l.b16 %v3253
          %v3290 = vpack.c.b16 %v3275, %v3274
          %v3291 = vpack.c.b16 %v3277, %v3276
          %v3292 = vpack.c.b16 %v3279, %v3278
          %v3293 = vpack.c.b16 %v3281, %v3280
          %v3294 = vpack.c.b16 %v3283, %v3282
          %v3295 = vpack.c.b16 %v3285, %v3284
          %v3296 = vpack.c.b16 %v3287, %v3286
          %v3297 = vpack.c.b16 %v3289, %v3288
          %3306 = vmatpush.bf16.msra.mxu0 %v3297
          %3307 = vmatpush.bf16.msra.mxu0 %v3296
          %3308 = vmatpush.bf16.msra.mxu0 %v3295
          %3309 = vmatpush.bf16.msra.mxu0 %v3294
          %3310 = vmatpush.bf16.msra.mxu0 %v3293
          %3311 = vmatpush.bf16.msra.mxu0 %v3292
          %3312 = vmatpush.bf16.msra.mxu0 %v3291
          %3313 = vmatpush.bf16.msra.mxu0 %v3290
          %3314 = vmatmul.bf16.gmra.mxu0 %v3237
          %v3315 = vpop.f32.mrf.mxu0
          %v3316 = vadd.f32 %v3256, %v3315
          %v3317 = vpop.f32.mrf.mxu0
          %v3318 = vadd.f32 %v3256, %v3317
          %3319 = vdwg.mxu0
          %3320 = vst [vmem:[%s624] sm:$0xff] %v3316
          %3321 = vst [vmem:[%s624 + $0x8] sm:$0xff] %v3318
        $region108: #{tpu_custom_call.1} parent=75 // pred_fallthru
          _
        %s3322 = sand.u32 %s373, 1
        %s3323 = scalar_lea.sflag [#allocation8], %s3322
        %s3324 = sand.u32 %s373, 1
        %s3325 = smul.addr %s3324, 16
        %s3326 = scalar_lea.vmem [#allocation17], %s3325
        // Predicated region
        $region109: #{tpu_custom_call.1} parent=75 // pred_check
          %p3327 = pneg %p383
        $region110: #{tpu_custom_call.1} parent=75 // pred_check_branch
          %3329 = sbr.rel (%p3327) target = $region112
        $region111: #{tpu_custom_call.1} parent=75 // pred_region
          %s3330 = smul.u32 2, %s42
          %3332 = vsyncadd %s3323, 0
          %s3333 = smul.addr %s41, 4
          %s3334 = sadd.s32 %s3330, %s3333
          %s3335 = smul.addr %s3334, 8
          %s3336 = scalar_lea.hbm %s14, %s3335
          %s3337 = sshll.u32 %s3326, 4
          %s3338 = int_to_ptr.vmem [resolvable:$true] %s3337
          %s3339 = sshll.u32 %s3336, 4
          %s3340 = int_to_ptr.hbm [resolvable:$true] %s3339
          %3345 = dma.vmem_to_hbm [thread:$0]  %s3338, 256, %s3340, %s3323, 128, 128, 8
        $region112: #{tpu_custom_call.1} parent=75 // pred_fallthru
          _
      $region76: #{tpu_custom_call.1} parent=5 // pred_fallthru
        _
      %p3346 = scmp.le.s32.totalorder 2, %s31
      // Predicated region
      $region113: #{tpu_custom_call.1} parent=5 // pred_check
        %p3347 = pneg %p3346
      $region114: #{tpu_custom_call.1} parent=5 // pred_check_branch
        %3349 = sbr.rel (%p3347) target = $region116
      $region115: #{tpu_custom_call.1} parent=5 // pred_region
        %s3350 = ssub.s32 %s31, 2
        // Predicated region
        $region117: #{tpu_custom_call.1} parent=115 // pred_check
          %p3351 = pneg %p389
        $region118: #{tpu_custom_call.1} parent=115 // pred_check_branch
          %3353 = sbr.rel (%p3351) target = $region120
        $region119: #{tpu_custom_call.1} parent=115 // pred_region
          %s3354 = sand.u32 %s374, 1
          %s3355 = scalar_lea.sflag [#allocation8], %s3354
          %s3356 = sand.u32 %s374, 1
          %s3357 = smul.addr %s3356, 16
          %s3358 = scalar_lea.vmem [#allocation17], %s3357
          %3360 = dma.done %s3355, 256
        $region120: #{tpu_custom_call.1} parent=115 // pred_fallthru
          _
      $region116: #{tpu_custom_call.1} parent=5 // pred_fallthru
        _
    $region6: #{tpu_custom_call.1} parent=1 // loop_footer
      %s35 = sadd.s32 1, %s31
    $region7: #{tpu_custom_call.1} parent=1 // loop_footer_branch
      %30 = sbr.rel target = $region3
    $region8: #{tpu_custom_call.1} parent=1 // loop_exit
      _
    %3361 = vsyncpa [#allocation7], 1
    %s3362 = scalar_lea.sflag [#allocation7], 1
    %3363 = vsyncpa %s3362, 1
    %3364 = vsyncpa [#allocation10], 1
    %s3365 = scalar_lea.sflag [#allocation10], 1
    %3366 = vsyncpa %s3365, 1
    %3367 = vsyncpa [#allocation13], 1
    %3368 = vsyncpa [#allocation16], 1
    %3369 = vsyncpa [#allocation8], 1
    %s3370 = scalar_lea.sflag [#allocation8], 1
    %3371 = vsyncpa %s3370, 1

</llo_original>
